<compile_context>
chip_gen: v7x
topology: tpu7x:2x2x1
jax: 0.10.0
libtpu: 0.0.40
codegen_flags: <defaults>
</compile_context>

<pallas_src>
import functools

import jax
import jax.numpy as jnp
from jax.experimental import pallas as pl
from jax.experimental.pallas import tpu as pltpu

C_IN = 1024   # Conv1d(1024, 512, k=1)
C_MID = 512
LEAK = 0.01   # nn.LeakyReLU() default negative_slope


def mem_trans_kernel(x_ref, w1_ref, b1_ref, w2_ref, o_ref, *, precision):
    # x_ref:  (C_IN, TL)    input channel-major slab for this (batch, L-tile)
    # w1_ref: (C_MID, C_IN) first-layer weight (PyTorch (out, in) layout)
    # b1_ref: (C_MID, 1)    first-layer bias (broadcast over the L tile)
    # w2_ref: (nef, C_MID)  second-layer weight (no bias)
    # o_ref:  (nef, TL)
    x = x_ref[...].astype(w1_ref.dtype)          # in-kernel cast (no HBM round trip)
    h = jnp.dot(w1_ref[...], x,
                preferred_element_type=jnp.float32, precision=precision)
    h = h + b1_ref[...]                          # bias + LeakyReLU in f32 (VPU)
    h = jnp.maximum(h, LEAK * h)
    y = jnp.dot(w2_ref[...], h.astype(w2_ref.dtype),
                preferred_element_type=jnp.float32, precision=precision)
    o_ref[...] = y.astype(o_ref.dtype)


@functools.partial(jax.jit, static_argnames=("tile_l", "use_bf16_matmul"))
def mem_trans_forward(memory, w1, b1, w2, *, tile_l=1024, use_bf16_matmul=True):
    """memory: (B, 1024, L) NCL, same layout as the PyTorch module.

    w1: (512, 1024)  (= memory_emb_1.weight squeezed)
    b1: (512,)
    w2: (nef, 512)   (= memory_emb_2.weight squeezed, no bias)
    Returns (B, nef, L) in memory.dtype.

    use_bf16_matmul=True (default) feeds the MXU with bf16 operands
    (f32 accumulation; bias + LeakyReLU in f32).  use_bf16_matmul=False keeps
    f32 operands with Precision.HIGHEST to match f32 Conv1d numerics.
    """
    B, c_in, L = memory.shape
    assert c_in == C_IN
    nef, c_mid = w2.shape
    assert c_mid == C_MID
    out_dtype = memory.dtype

    if use_bf16_matmul:
        # Tiny one-time casts; the big activation cast happens inside the kernel.
        w1c = w1.astype(jnp.bfloat16)
        w2c = w2.astype(jnp.bfloat16)
        precision = None
    else:
        w1c = w1.astype(jnp.float32)
        w2c = w2.astype(jnp.float32)
        precision = jax.lax.Precision.HIGHEST

    # L tiling: no padding / slicing — ragged last block is masked by the
    # pipeline.  Garbage columns never contaminate valid columns because the
    # contraction is over channels.
    tl = L if L <= tile_l else tile_l
    n_l = pl.cdiv(L, tl)
    # v7x megacore: avoid a degenerate 1-point grid when B == 1.
    if B * n_l < 2 and L >= 256:
        tl = ((L + 1) // 2 + 127) // 128 * 128   # multiple of 128, < L
        n_l = pl.cdiv(L, tl)

    b1_2d = b1.reshape(C_MID, 1).astype(jnp.float32)

    x_itemsize = jnp.dtype(memory.dtype).itemsize
    w_itemsize = jnp.dtype(w1c.dtype).itemsize
    o_itemsize = jnp.dtype(out_dtype).itemsize

    flops = 2 * B * L * (C_IN * C_MID + C_MID * nef)
    bytes_accessed = (B * C_IN * L * x_itemsize                      # input
                      + (C_MID * C_IN + nef * C_MID) * w_itemsize    # weights
                      + C_MID * 4                                    # bias
                      + B * nef * L * o_itemsize)                    # output

    # Explicit VMEM budget: double-buffered X / weights / output + the f32
    # intermediate h and its bf16 copy, with headroom.  Clamp to 64 MiB so the
    # same setting is valid on v7x (64 MiB physical VMEM) and v5e/v6e.
    vmem_needed = (2 * C_IN * tl * x_itemsize
                   + 2 * C_MID * C_IN * w_itemsize
                   + 2 * nef * C_MID * w_itemsize
                   + 2 * C_MID * 4
                   + 2 * nef * tl * o_itemsize
                   + C_MID * tl * 4
                   + C_MID * tl * w_itemsize)
    vmem_limit = int(min(max(int(vmem_needed * 1.5), 32 * 1024 * 1024),
                         64 * 1024 * 1024))

    kernel = functools.partial(mem_trans_kernel, precision=precision)

    out = pl.pallas_call(
        kernel,
        out_shape=jax.ShapeDtypeStruct((B, nef, L), out_dtype),
        grid_spec=pltpu.PrefetchScalarGridSpec(
            num_scalar_prefetch=0,
            grid=(B, n_l),
            in_specs=[
                # batch dim squeezed; kernel sees (C_IN, tl)
                pl.BlockSpec((None, C_IN, tl), lambda b, l: (b, 0, l)),
                pl.BlockSpec((C_MID, C_IN), lambda b, l: (0, 0)),
                pl.BlockSpec((C_MID, 1), lambda b, l: (0, 0)),
                pl.BlockSpec((nef, C_MID), lambda b, l: (0, 0)),
            ],
            out_specs=pl.BlockSpec((None, nef, tl), lambda b, l: (b, 0, l)),
        ),
        compiler_params=pltpu.CompilerParams(
            dimension_semantics=("parallel", "parallel"),
            vmem_limit_bytes=vmem_limit),
        cost_estimate=pl.CostEstimate(
            flops=flops, transcendentals=0, bytes_accessed=bytes_accessed),
    )(memory, w1c, b1_2d, w2c)

    return out


if __name__ == "__main__":
    key = jax.random.PRNGKey(0)
    k_x, k_w1, k_b1, k_w2 = jax.random.split(key, 4)

    B, L, nef = 2, 16, 32
    initrange = 0.1

    # Deterministic in-script params, PyTorch Conv1d (out, in) layout:
    #   memory_emb_1.weight: (512, 1024, 1) -> (512, 1024), bias (512,)
    #   memory_emb_2.weight: (nef, 512, 1)  -> (nef, 512), no bias
    w1 = jax.random.uniform(k_w1, (C_MID, C_IN), jnp.float32,
                            minval=-initrange, maxval=initrange)
    b1 = jax.random.uniform(k_b1, (C_MID,), jnp.float32,
                            minval=-0.03, maxval=0.03)
    w2 = jax.random.uniform(k_w2, (nef, C_MID), jnp.float32,
                            minval=-initrange, maxval=initrange)

    memory = jax.random.normal(k_x, (B, C_IN, L), jnp.float32)

    # Plain-JAX f32 reference of the same forward pass.
    h_ref = jnp.einsum("oc,bcl->bol", w1, memory) + b1[None, :, None]
    h_ref = jnp.where(h_ref > 0, h_ref, LEAK * h_ref)
    out_ref = jnp.einsum("od,bdl->bol", w2, h_ref)

    # Default (bf16 MXU feeds, f32 accumulation) path — loose tolerance.
    out_bf16 = jax.block_until_ready(mem_trans_forward(memory, w1, b1, w2))
    assert out_bf16.shape == (B, nef, L)
    assert jnp.allclose(out_bf16, out_ref, atol=1e-1, rtol=5e-2)

    # Full-f32 path (Precision.HIGHEST) — tight tolerance.
    out_f32 = jax.block_until_ready(
        mem_trans_forward(memory, w1, b1, w2, use_bf16_matmul=False))
    assert out_f32.shape == (B, nef, L)
    assert jnp.allclose(out_f32, out_ref, atol=1e-4, rtol=1e-4)

    print("KERNEL_OK")
</pallas_src>

<mosaic_0001>
module attributes {stable_mosaic.version = 11 : i64} {
  func.func @mem_trans_kernel(%arg0: i32, %arg1: i32, %arg2: memref<1x1024x16xf32, #tpu.memory_space<vmem>>, %arg3: memref<512x1024xbf16, #tpu.memory_space<vmem>>, %arg4: memref<512x1xf32, #tpu.memory_space<vmem>>, %arg5: memref<32x512xbf16, #tpu.memory_space<vmem>>, %arg6: memref<1x32x16xf32, #tpu.memory_space<vmem>>) attributes {dimension_semantics = [#tpu.dimension_semantics<parallel>, #tpu.dimension_semantics<parallel>], iteration_bounds = array<i64: 2, 1>, scalar_prefetch = 0 : i64, scratch_operands = 0 : i64, tpu.core_type = #tpu.core_type<tc>, window_params = [{transform_indices = @transform_0, window_bounds = array<i64: 1, 1024, 16>}, {pipeline_mode = #tpu.pipeline_mode<synchronous>, transform_indices = @transform_1, window_bounds = array<i64: 512, 1024>}, {pipeline_mode = #tpu.pipeline_mode<synchronous>, transform_indices = @transform_2, window_bounds = array<i64: 512, 1>}, {pipeline_mode = #tpu.pipeline_mode<synchronous>, transform_indices = @transform_3, window_bounds = array<i64: 32, 512>}, {transform_indices = @transform_4, window_bounds = array<i64: 1, 32, 16>}]} {
    %c0 = arith.constant 0 : index
    %c0_0 = arith.constant 0 : index
    %c0_1 = arith.constant 0 : index
    %0 = vector.load %arg2[%c0, %c0_0, %c0_1] : memref<1x1024x16xf32, #tpu.memory_space<vmem>>, vector<1x1024x16xf32>
    %1 = vector.shape_cast %0 : vector<1x1024x16xf32> to vector<1024x16xf32>
    %2 = arith.truncf %1 : vector<1024x16xf32> to vector<1024x16xbf16>
    %c0_2 = arith.constant 0 : index
    %c0_3 = arith.constant 0 : index
    %3 = vector.load %arg3[%c0_2, %c0_3] : memref<512x1024xbf16, #tpu.memory_space<vmem>>, vector<512x1024xbf16>
    %cst = arith.constant dense<0.000000e+00> : vector<512x16xf32>
    %4 = tpu.matmul %3, %2, %cst {dimension_numbers = #tpu.dot_dimension_numbers<[1], [0], [0], [1], [0, 0, 1, 1], [], []>} : vector<512x1024xbf16>, vector<1024x16xbf16>, vector<512x16xf32> -> vector<512x16xf32>
    %c0_4 = arith.constant 0 : index
    %c0_5 = arith.constant 0 : index
    %5 = vector.load %arg4[%c0_4, %c0_5] : memref<512x1xf32, #tpu.memory_space<vmem>>, vector<512x1xf32>
    %6 = vector.broadcast %5 : vector<512x1xf32> to vector<512x16xf32>
    %7 = arith.addf %4, %6 : vector<512x16xf32>
    %cst_6 = arith.constant 0.00999999977 : f32
    %8 = vector.broadcast %cst_6 : f32 to vector<512x16xf32>
    %9 = arith.mulf %8, %7 : vector<512x16xf32>
    %10 = arith.maximumf %7, %9 : vector<512x16xf32>
    %c0_7 = arith.constant 0 : index
    %c0_8 = arith.constant 0 : index
    %11 = vector.load %arg5[%c0_7, %c0_8] : memref<32x512xbf16, #tpu.memory_space<vmem>>, vector<32x512xbf16>
    %12 = arith.truncf %10 : vector<512x16xf32> to vector<512x16xbf16>
    %cst_9 = arith.constant dense<0.000000e+00> : vector<32x16xf32>
    %13 = tpu.matmul %11, %12, %cst_9 {dimension_numbers = #tpu.dot_dimension_numbers<[1], [0], [0], [1], [0, 0, 1, 1], [], []>} : vector<32x512xbf16>, vector<512x16xbf16>, vector<32x16xf32> -> vector<32x16xf32>
    %c0_10 = arith.constant 0 : index
    %c0_11 = arith.constant 0 : index
    %c0_12 = arith.constant 0 : index
    %14 = vector.load %arg6[%c0_10, %c0_11, %c0_12] : memref<1x32x16xf32, #tpu.memory_space<vmem>>, vector<1x32x16xf32>
    %15 = vector.shape_cast %14 : vector<1x32x16xf32> to vector<32x16xf32>
    %16 = vector.shape_cast %13 : vector<32x16xf32> to vector<1x32x16xf32>
    tpu.vector_store %arg6[%c0_10, %c0_11, %c0_12], %16 {strides = array<i32>} : memref<1x32x16xf32, #tpu.memory_space<vmem>>, vector<1x32x16xf32>,
    return
  }
  func.func @transform_0(%arg0: i32, %arg1: i32) -> (i32, i32, i32) {
    %c0_i32 = arith.constant 0 : i32
    %c0_i32_0 = arith.constant 0 : i32
    return %arg0, %c0_i32, %arg1 : i32, i32, i32
  }
  func.func @transform_1(%arg0: i32, %arg1: i32) -> (i32, i32) {
    %c0_i32 = arith.constant 0 : i32
    %c0_i32_0 = arith.constant 0 : i32
    %c0_i32_1 = arith.constant 0 : i32
    return %c0_i32, %c0_i32_0 : i32, i32
  }
  func.func @transform_2(%arg0: i32, %arg1: i32) -> (i32, i32) {
    %c0_i32 = arith.constant 0 : i32
    %c0_i32_0 = arith.constant 0 : i32
    %c0_i32_1 = arith.constant 0 : i32
    return %c0_i32, %c0_i32_0 : i32, i32
  }
  func.func @transform_3(%arg0: i32, %arg1: i32) -> (i32, i32) {
    %c0_i32 = arith.constant 0 : i32
    %c0_i32_0 = arith.constant 0 : i32
    %c0_i32_1 = arith.constant 0 : i32
    return %c0_i32, %c0_i32_0 : i32, i32
  }
  func.func @transform_4(%arg0: i32, %arg1: i32) -> (i32, i32, i32) {
    %c0_i32 = arith.constant 0 : i32
    %c0_i32_0 = arith.constant 0 : i32
    return %arg0, %c0_i32, %arg1 : i32, i32, i32
  }
}

</mosaic_0001>

<llo_original>
// kernel: mem_trans_forward.1
$region0: #{mem_trans_forward.1}
  #allocation0 [shape = 'u32[]', space=smem, size = 0x4, offset = 0x4, fixed_abs, tag = 'smem constant byte address 0x4 - core index']
  #allocation1 [shape = 'u32[144,128]{1,0:T(1,128)}', space=vmem, size = 0x12000, scoped, tag = 'internal scratch']
  %s0 = inlined_call_operand.vmem [shape: f32[2,1024,16], index: 0, kind: input, shape index: {}]
  %s1 = inlined_call_operand.vmem [shape: bf16[512,1024], index: 1, kind: input, shape index: {}]
  %s2 = inlined_call_operand.vmem [shape: f32[512,1], index: 2, kind: input, shape index: {}]
  %s3 = inlined_call_operand.vmem [shape: bf16[32,512], index: 3, kind: input, shape index: {}]
  %s4 = inlined_call_operand.vmem [shape: f32[2,32,16], index: 4, kind: output, shape index: {}]
  %s5 = sld [smem:[#allocation0]]
  $region49: #{mem_trans_forward.1} parent=0
    _
  %s7 = ssub.s32 1, %s5
  %s8 = scalar_select 0, %s7, %s5
  loop: start=0, step=1, limit=4
  $region2: #{mem_trans_forward.1} parent=0 // loop_pre_header
    _
  $region3: #{mem_trans_forward.1} parent=0 // loop_header
    %s10 = sphi 0, %s14
    %p11 = scmp.ge.s32.totalorder %s10, 4
    %s17 = sphi 0, %s29
    %s18 = sphi 0, %s25
    %s19 = sphi 0, %s17
    %s20 = sphi 0, %s18
    %s21 = sphi 0, %s19
    %s22 = sphi 0, %s20
    %s34 = sphi 0, %s36
    %s37 = sphi 0, %s34
    %s38 = sphi 0, %s37
    %s54 = sphi 0, %s38
    %s58 = sphi 0, %s58
    %s60 = sphi 0, %s58
    %s61 = sphi 0, %s60
    %s75 = sphi 0, %s61
    %s79 = sphi 0, %s79
    %s81 = sphi 0, %s79
    %s82 = sphi 0, %s81
    %s96 = sphi 0, %s82
    %s100 = sphi 0, %s100
    %s102 = sphi 0, %s100
    %s103 = sphi 0, %s102
    %s117 = sphi 0, %s103
    %s125 = sphi 0, %s127
    %s128 = sphi 0, %s125
    %s129 = sphi 0, %s128
    %s145 = sphi 0, %s129
  $region4: #{mem_trans_forward.1} parent=0 // loop_header_branch
    %13 = sbr.rel (%p11) target = $region8
  $region5: #{mem_trans_forward.1} parent=0 // loop_body
    %s15 = ssub.s32 %s10, 1
    %s16 = ssub.s32 %s10, 2
    %s23 = sadd.s32 1, %s18
    %p24 = scmp.ge.s32.totalorder %s23, 1
    %s25 = scalar_select %p24, 0, %s23
    %s26 = sadd.s32 1, %s17
    %s27 = scalar_select %p24, %s26, %s17
    %p28 = scmp.ge.s32.totalorder %s27, 2
    %s29 = scalar_select %p28, 0, %s27
    %s30 = ssub.s32 %s17, %s29
    %s31 = ssub.s32 %s18, %s25
    %s32 = sor.u32 %s30, %s31
    %p33 = scmp.eq.s32.totalorder %s32, 0
    %s35 = sadd.s32 %s34, 1
    %s36 = scalar_select %p33, %s34, %s35
    %p39 = pneg %p33
    %p40 = scmp.eq.s32.totalorder %s10, 1
    %p41 = por %p39, %p40
    %p42 = scmp.ne.s32.totalorder %s34, %s37
    %p43 = scmp.eq.s32.totalorder %s10, 0
    %p44 = por %p42, %p43
    %p45 = scmp.ne.s32.totalorder %s34, %s37
    %p46 = scmp.eq.s32.totalorder %s15, 1
    %p47 = por %p45, %p46
    %p48 = scmp.ne.s32.totalorder %s37, %s38
    %p49 = scmp.eq.s32.totalorder %s15, 0
    %p50 = por %p48, %p49
    %p51 = scmp.ne.s32.totalorder %s37, %s38
    %p52 = scmp.eq.s32.totalorder %s16, 1
    %p53 = por %p51, %p52
    %p55 = scmp.ne.s32.totalorder %s38, %s54
    %p56 = scmp.eq.s32.totalorder %s16, 0
    %p57 = por %p55, %p56
    %s59 = sadd.s32 %s58, 1
    %p62 = scmp.eq.s32.totalorder %s10, 1
    %p63 = scmp.ne.s32.totalorder %s58, %s60
    %p64 = scmp.eq.s32.totalorder %s10, 0
    %p65 = por %p63, %p64
    %p66 = scmp.ne.s32.totalorder %s58, %s60
    %p67 = scmp.eq.s32.totalorder %s15, 1
    %p68 = por %p66, %p67
    %p69 = scmp.ne.s32.totalorder %s60, %s61
    %p70 = scmp.eq.s32.totalorder %s15, 0
    %p71 = por %p69, %p70
    %p72 = scmp.ne.s32.totalorder %s60, %s61
    %p73 = scmp.eq.s32.totalorder %s16, 1
    %p74 = por %p72, %p73
    %p76 = scmp.ne.s32.totalorder %s61, %s75
    %p77 = scmp.eq.s32.totalorder %s16, 0
    %p78 = por %p76, %p77
    %s80 = sadd.s32 %s79, 1
    %p83 = scmp.eq.s32.totalorder %s10, 1
    %p84 = scmp.ne.s32.totalorder %s79, %s81
    %p85 = scmp.eq.s32.totalorder %s10, 0
    %p86 = por %p84, %p85
    %p87 = scmp.ne.s32.totalorder %s79, %s81
    %p88 = scmp.eq.s32.totalorder %s15, 1
    %p89 = por %p87, %p88
    %p90 = scmp.ne.s32.totalorder %s81, %s82
    %p91 = scmp.eq.s32.totalorder %s15, 0
    %p92 = por %p90, %p91
    %p93 = scmp.ne.s32.totalorder %s81, %s82
    %p94 = scmp.eq.s32.totalorder %s16, 1
    %p95 = por %p93, %p94
    %p97 = scmp.ne.s32.totalorder %s82, %s96
    %p98 = scmp.eq.s32.totalorder %s16, 0
    %p99 = por %p97, %p98
    %s101 = sadd.s32 %s100, 1
    %p104 = scmp.eq.s32.totalorder %s10, 1
    %p105 = scmp.ne.s32.totalorder %s100, %s102
    %p106 = scmp.eq.s32.totalorder %s10, 0
    %p107 = por %p105, %p106
    %p108 = scmp.ne.s32.totalorder %s100, %s102
    %p109 = scmp.eq.s32.totalorder %s15, 1
    %p110 = por %p108, %p109
    %p111 = scmp.ne.s32.totalorder %s102, %s103
    %p112 = scmp.eq.s32.totalorder %s15, 0
    %p113 = por %p111, %p112
    %p114 = scmp.ne.s32.totalorder %s102, %s103
    %p115 = scmp.eq.s32.totalorder %s16, 1
    %p116 = por %p114, %p115
    %p118 = scmp.ne.s32.totalorder %s103, %s117
    %p119 = scmp.eq.s32.totalorder %s16, 0
    %p120 = por %p118, %p119
    %s121 = ssub.s32 %s17, %s29
    %s122 = ssub.s32 %s18, %s25
    %s123 = sor.u32 %s121, %s122
    %p124 = scmp.eq.s32.totalorder %s123, 0
    %s126 = sadd.s32 %s125, 1
    %s127 = scalar_select %p124, %s125, %s126
    %p130 = pneg %p124
    %p131 = scmp.eq.s32.totalorder %s10, 1
    %p132 = por %p130, %p131
    %p133 = scmp.ne.s32.totalorder %s125, %s128
    %p134 = scmp.eq.s32.totalorder %s10, 0
    %p135 = por %p133, %p134
    %p136 = scmp.ne.s32.totalorder %s125, %s128
    %p137 = scmp.eq.s32.totalorder %s15, 1
    %p138 = por %p136, %p137
    %p139 = scmp.ne.s32.totalorder %s128, %s129
    %p140 = scmp.eq.s32.totalorder %s15, 0
    %p141 = por %p139, %p140
    %p142 = scmp.ne.s32.totalorder %s128, %s129
    %p143 = scmp.eq.s32.totalorder %s16, 1
    %p144 = por %p142, %p143
    %p146 = scmp.ne.s32.totalorder %s129, %s145
    %p147 = scmp.eq.s32.totalorder %s16, 0
    %p148 = por %p146, %p147
    %p149 = scmp.le.s32.totalorder 1, %s10
    %p150 = scmp.lt.s32.totalorder %s10, 3
    %p151 = pnand %p149, %p150
    %p152 = pneg %p151
    // Predicated region
    $region9: #{mem_trans_forward.1} parent=5 // pred_check
      _
    $region10: #{mem_trans_forward.1} parent=5 // pred_check_branch
      %154 = sbr.rel (%p151) target = $region12
    $region11: #{mem_trans_forward.1} parent=5 // pred_region
      %s155 = ssub.s32 %s10, 1
      // Predicated region
      $region13: #{mem_trans_forward.1} parent=11 // pred_check
        %p156 = pneg %p71
      $region14: #{mem_trans_forward.1} parent=11 // pred_check_branch
        %158 = sbr.rel (%p156) target = $region16
      $region15: #{mem_trans_forward.1} parent=11 // pred_region
        _
      $region16: #{mem_trans_forward.1} parent=11 // pred_fallthru
        _
      // Predicated region
      $region17: #{mem_trans_forward.1} parent=11 // pred_check
        %p159 = pneg %p92
      $region18: #{mem_trans_forward.1} parent=11 // pred_check_branch
        %161 = sbr.rel (%p159) target = $region20
      $region19: #{mem_trans_forward.1} parent=11 // pred_region
        _
      $region20: #{mem_trans_forward.1} parent=11 // pred_fallthru
        _
      // Predicated region
      $region21: #{mem_trans_forward.1} parent=11 // pred_check
        %p162 = pneg %p113
      $region22: #{mem_trans_forward.1} parent=11 // pred_check_branch
        %164 = sbr.rel (%p162) target = $region24
      $region23: #{mem_trans_forward.1} parent=11 // pred_region
        _
      $region24: #{mem_trans_forward.1} parent=11 // pred_fallthru
        _
    $region12: #{mem_trans_forward.1} parent=5 // pred_fallthru
      _
    %p165 = scmp.lt.s32.totalorder %s10, 2
    // Predicated region
    $region25: #{mem_trans_forward.1} parent=5 // pred_check
      %p166 = pneg %p165
    $region26: #{mem_trans_forward.1} parent=5 // pred_check_branch
      %168 = sbr.rel (%p166) target = $region28
    $region27: #{mem_trans_forward.1} parent=5 // pred_region
      // Predicated region
      $region29: #{mem_trans_forward.1} parent=27 // pred_check
        %p169 = pneg %p44
      $region30: #{mem_trans_forward.1} parent=27 // pred_check_branch
        %171 = sbr.rel (%p169) target = $region32
      $region31: #{mem_trans_forward.1} parent=27 // pred_region
        %p172 = scmp.lt.s32.totalorder %s17, 1
        %s173 = scalar_select %p172, %s17, 1
        %p174 = scmp.lt.s32.totalorder %s18, 0
        %s175 = scalar_select %p174, %s18, 0
        %s176 = smul.addr %s173, 128
        %s177 = sadd.s32 %s175, %s176
        %s178 = smul.addr %s177, 8
        %s179 = scalar_lea.vmem %s0, %s178
      $region32: #{mem_trans_forward.1} parent=27 // pred_fallthru
        _
    $region28: #{mem_trans_forward.1} parent=5 // pred_fallthru
      _
    %p180 = scmp.le.s32.totalorder 1, %s10
    %p181 = scmp.lt.s32.totalorder %s10, 3
    %p182 = pnand %p180, %p181
    %p183 = pneg %p182
    // Predicated region
    $region33: #{mem_trans_forward.1} parent=5 // pred_check
      _
    $region34: #{mem_trans_forward.1} parent=5 // pred_check_branch
      %185 = sbr.rel (%p182) target = $region36
    $region35: #{mem_trans_forward.1} parent=5 // pred_region
      %s186 = ssub.s32 %s10, 1
      %p187 = scmp.lt.s32.totalorder %s19, 1
      %s188 = scalar_select %p187, %s19, 1
      %p189 = scmp.lt.s32.totalorder %s20, 0
      %s190 = scalar_select %p189, %s20, 0
      %s191 = smul.addr %s188, 128
      %s192 = sadd.s32 %s190, %s191
      %s193 = smul.addr %s192, 8
      %s194 = scalar_lea.vmem %s0, %s193
      %p195 = pneg %p50
      %p196 = pneg %p47
      %p197 = pneg %p71
      %p198 = pneg %p68
      %p199 = pneg %p92
      %p200 = pneg %p89
      %p201 = pneg %p113
      %p202 = pneg %p110
      %p203 = pneg %p141
      %p204 = pneg %p138
      %p205 = scmp.lt.s32.totalorder %s19, 1
      %s206 = scalar_select %p205, %s19, 1
      %p207 = scmp.lt.s32.totalorder %s20, 0
      %s208 = scalar_select %p207, %s20, 0
      %s209 = smul.addr %s206, 4
      %s210 = sadd.s32 %s208, %s209
      %s211 = smul.addr %s210, 8
      %s212 = scalar_lea.vmem %s4, %s211
      %p213 = scmp.lt.s32.totalorder %s19, 1
      %s214 = scalar_select %p213, %s19, 1
      %p215 = scmp.lt.s32.totalorder %s20, 0
      %s216 = scalar_select %p215, %s20, 0
      %s217 = smul.addr %s214, 128
      %s218 = sadd.s32 %s216, %s217
      %s219 = smul.addr %s218, 8
      %s220 = scalar_lea.vmem %s0, %s219
      %p221 = scmp.lt.s32.totalorder %s19, 1
      %s222 = scalar_select %p221, %s19, 1
      %p223 = scmp.lt.s32.totalorder %s20, 0
      %s224 = scalar_select %p223, %s20, 0
      %s225 = smul.addr %s222, 4
      %s226 = sadd.s32 %s224, %s225
      %s227 = smul.addr %s226, 8
      %s228 = scalar_lea.vmem %s4, %s227
      %v230 = vld [vmem:[%s220] sm:$0xff]
      %v231 = vld [vmem:[%s220 + $0x8] sm:$0xff]
      %v232 = vld [vmem:[%s220 + $0x10] sm:$0xff]
      %v233 = vld [vmem:[%s220 + $0x18] sm:$0xff]
      %v234 = vld [vmem:[%s220 + $0x20] sm:$0xff]
      %v235 = vld [vmem:[%s220 + $0x28] sm:$0xff]
      %v236 = vld [vmem:[%s220 + $0x30] sm:$0xff]
      %v237 = vld [vmem:[%s220 + $0x38] sm:$0xff]
      %v238 = vld [vmem:[%s220 + $0x40] sm:$0xff]
      %v239 = vld [vmem:[%s220 + $0x48] sm:$0xff]
      %v240 = vld [vmem:[%s220 + $0x50] sm:$0xff]
      %v241 = vld [vmem:[%s220 + $0x58] sm:$0xff]
      %v242 = vld [vmem:[%s220 + $0x60] sm:$0xff]
      %v243 = vld [vmem:[%s220 + $0x68] sm:$0xff]
      %v244 = vld [vmem:[%s220 + $0x70] sm:$0xff]
      %v245 = vld [vmem:[%s220 + $0x78] sm:$0xff]
      %v246 = vld [vmem:[%s220 + $0x80] sm:$0xff]
      %v247 = vld [vmem:[%s220 + $0x88] sm:$0xff]
      %v248 = vld [vmem:[%s220 + $0x90] sm:$0xff]
      %v249 = vld [vmem:[%s220 + $0x98] sm:$0xff]
      %v250 = vld [vmem:[%s220 + $0xa0] sm:$0xff]
      %v251 = vld [vmem:[%s220 + $0xa8] sm:$0xff]
      %v252 = vld [vmem:[%s220 + $0xb0] sm:$0xff]
      %v253 = vld [vmem:[%s220 + $0xb8] sm:$0xff]
      %v254 = vld [vmem:[%s220 + $0xc0] sm:$0xff]
      %v255 = vld [vmem:[%s220 + $0xc8] sm:$0xff]
      %v256 = vld [vmem:[%s220 + $0xd0] sm:$0xff]
      %v257 = vld [vmem:[%s220 + $0xd8] sm:$0xff]
      %v258 = vld [vmem:[%s220 + $0xe0] sm:$0xff]
      %v259 = vld [vmem:[%s220 + $0xe8] sm:$0xff]
      %v260 = vld [vmem:[%s220 + $0xf0] sm:$0xff]
      %v261 = vld [vmem:[%s220 + $0xf8] sm:$0xff]
      %v262 = vld [vmem:[%s220 + $0x100] sm:$0xff]
      %v263 = vld [vmem:[%s220 + $0x108] sm:$0xff]
      %v264 = vld [vmem:[%s220 + $0x110] sm:$0xff]
      %v265 = vld [vmem:[%s220 + $0x118] sm:$0xff]
      %v266 = vld [vmem:[%s220 + $0x120] sm:$0xff]
      %v267 = vld [vmem:[%s220 + $0x128] sm:$0xff]
      %v268 = vld [vmem:[%s220 + $0x130] sm:$0xff]
      %v269 = vld [vmem:[%s220 + $0x138] sm:$0xff]
      %v270 = vld [vmem:[%s220 + $0x140] sm:$0xff]
      %v271 = vld [vmem:[%s220 + $0x148] sm:$0xff]
      %v272 = vld [vmem:[%s220 + $0x150] sm:$0xff]
      %v273 = vld [vmem:[%s220 + $0x158] sm:$0xff]
      %v274 = vld [vmem:[%s220 + $0x160] sm:$0xff]
      %v275 = vld [vmem:[%s220 + $0x168] sm:$0xff]
      %v276 = vld [vmem:[%s220 + $0x170] sm:$0xff]
      %v277 = vld [vmem:[%s220 + $0x178] sm:$0xff]
      %v278 = vld [vmem:[%s220 + $0x180] sm:$0xff]
      %v279 = vld [vmem:[%s220 + $0x188] sm:$0xff]
      %v280 = vld [vmem:[%s220 + $0x190] sm:$0xff]
      %v281 = vld [vmem:[%s220 + $0x198] sm:$0xff]
      %v282 = vld [vmem:[%s220 + $0x1a0] sm:$0xff]
      %v283 = vld [vmem:[%s220 + $0x1a8] sm:$0xff]
      %v284 = vld [vmem:[%s220 + $0x1b0] sm:$0xff]
      %v285 = vld [vmem:[%s220 + $0x1b8] sm:$0xff]
      %v286 = vld [vmem:[%s220 + $0x1c0] sm:$0xff]
      %v287 = vld [vmem:[%s220 + $0x1c8] sm:$0xff]
      %v288 = vld [vmem:[%s220 + $0x1d0] sm:$0xff]
      %v289 = vld [vmem:[%s220 + $0x1d8] sm:$0xff]
      %v290 = vld [vmem:[%s220 + $0x1e0] sm:$0xff]
      %v291 = vld [vmem:[%s220 + $0x1e8] sm:$0xff]
      %v292 = vld [vmem:[%s220 + $0x1f0] sm:$0xff]
      %v293 = vld [vmem:[%s220 + $0x1f8] sm:$0xff]
      %v294 = vld [vmem:[%s220 + $0x200] sm:$0xff]
      %v295 = vld [vmem:[%s220 + $0x208] sm:$0xff]
      %v296 = vld [vmem:[%s220 + $0x210] sm:$0xff]
      %v297 = vld [vmem:[%s220 + $0x218] sm:$0xff]
      %v298 = vld [vmem:[%s220 + $0x220] sm:$0xff]
      %v299 = vld [vmem:[%s220 + $0x228] sm:$0xff]
      %v300 = vld [vmem:[%s220 + $0x230] sm:$0xff]
      %v301 = vld [vmem:[%s220 + $0x238] sm:$0xff]
      %v302 = vld [vmem:[%s220 + $0x240] sm:$0xff]
      %v303 = vld [vmem:[%s220 + $0x248] sm:$0xff]
      %v304 = vld [vmem:[%s220 + $0x250] sm:$0xff]
      %v305 = vld [vmem:[%s220 + $0x258] sm:$0xff]
      %v306 = vld [vmem:[%s220 + $0x260] sm:$0xff]
      %v307 = vld [vmem:[%s220 + $0x268] sm:$0xff]
      %v308 = vld [vmem:[%s220 + $0x270] sm:$0xff]
      %v309 = vld [vmem:[%s220 + $0x278] sm:$0xff]
      %v310 = vld [vmem:[%s220 + $0x280] sm:$0xff]
      %v311 = vld [vmem:[%s220 + $0x288] sm:$0xff]
      %v312 = vld [vmem:[%s220 + $0x290] sm:$0xff]
      %v313 = vld [vmem:[%s220 + $0x298] sm:$0xff]
      %v314 = vld [vmem:[%s220 + $0x2a0] sm:$0xff]
      %v315 = vld [vmem:[%s220 + $0x2a8] sm:$0xff]
      %v316 = vld [vmem:[%s220 + $0x2b0] sm:$0xff]
      %v317 = vld [vmem:[%s220 + $0x2b8] sm:$0xff]
      %v318 = vld [vmem:[%s220 + $0x2c0] sm:$0xff]
      %v319 = vld [vmem:[%s220 + $0x2c8] sm:$0xff]
      %v320 = vld [vmem:[%s220 + $0x2d0] sm:$0xff]
      %v321 = vld [vmem:[%s220 + $0x2d8] sm:$0xff]
      %v322 = vld [vmem:[%s220 + $0x2e0] sm:$0xff]
      %v323 = vld [vmem:[%s220 + $0x2e8] sm:$0xff]
      %v324 = vld [vmem:[%s220 + $0x2f0] sm:$0xff]
      %v325 = vld [vmem:[%s220 + $0x2f8] sm:$0xff]
      %v326 = vld [vmem:[%s220 + $0x300] sm:$0xff]
      %v327 = vld [vmem:[%s220 + $0x308] sm:$0xff]
      %v328 = vld [vmem:[%s220 + $0x310] sm:$0xff]
      %v329 = vld [vmem:[%s220 + $0x318] sm:$0xff]
      %v330 = vld [vmem:[%s220 + $0x320] sm:$0xff]
      %v331 = vld [vmem:[%s220 + $0x328] sm:$0xff]
      %v332 = vld [vmem:[%s220 + $0x330] sm:$0xff]
      %v333 = vld [vmem:[%s220 + $0x338] sm:$0xff]
      %v334 = vld [vmem:[%s220 + $0x340] sm:$0xff]
      %v335 = vld [vmem:[%s220 + $0x348] sm:$0xff]
      %v336 = vld [vmem:[%s220 + $0x350] sm:$0xff]
      %v337 = vld [vmem:[%s220 + $0x358] sm:$0xff]
      %v338 = vld [vmem:[%s220 + $0x360] sm:$0xff]
      %v339 = vld [vmem:[%s220 + $0x368] sm:$0xff]
      %v340 = vld [vmem:[%s220 + $0x370] sm:$0xff]
      %v341 = vld [vmem:[%s220 + $0x378] sm:$0xff]
      %v342 = vld [vmem:[%s220 + $0x380] sm:$0xff]
      %v343 = vld [vmem:[%s220 + $0x388] sm:$0xff]
      %v344 = vld [vmem:[%s220 + $0x390] sm:$0xff]
      %v345 = vld [vmem:[%s220 + $0x398] sm:$0xff]
      %v346 = vld [vmem:[%s220 + $0x3a0] sm:$0xff]
      %v347 = vld [vmem:[%s220 + $0x3a8] sm:$0xff]
      %v348 = vld [vmem:[%s220 + $0x3b0] sm:$0xff]
      %v349 = vld [vmem:[%s220 + $0x3b8] sm:$0xff]
      %v350 = vld [vmem:[%s220 + $0x3c0] sm:$0xff]
      %v351 = vld [vmem:[%s220 + $0x3c8] sm:$0xff]
      %v352 = vld [vmem:[%s220 + $0x3d0] sm:$0xff]
      %v353 = vld [vmem:[%s220 + $0x3d8] sm:$0xff]
      %v354 = vld [vmem:[%s220 + $0x3e0] sm:$0xff]
      %v355 = vld [vmem:[%s220 + $0x3e8] sm:$0xff]
      %v356 = vld [vmem:[%s220 + $0x3f0] sm:$0xff]
      %v357 = vld [vmem:[%s220 + $0x3f8] sm:$0xff]
      %v358 = vpack.c.bf16 %v231, %v230
      %v359 = vpack.c.bf16 %v233, %v232
      %v360 = vpack.c.bf16 %v235, %v234
      %v361 = vpack.c.bf16 %v237, %v236
      %v362 = vpack.c.bf16 %v239, %v238
      %v363 = vpack.c.bf16 %v241, %v240
      %v364 = vpack.c.bf16 %v243, %v242
      %v365 = vpack.c.bf16 %v245, %v244
      %v366 = vpack.c.bf16 %v247, %v246
      %v367 = vpack.c.bf16 %v249, %v248
      %v368 = vpack.c.bf16 %v251, %v250
      %v369 = vpack.c.bf16 %v253, %v252
      %v370 = vpack.c.bf16 %v255, %v254
      %v371 = vpack.c.bf16 %v257, %v256
      %v372 = vpack.c.bf16 %v259, %v258
      %v373 = vpack.c.bf16 %v261, %v260
      %v374 = vpack.c.bf16 %v263, %v262
      %v375 = vpack.c.bf16 %v265, %v264
      %v376 = vpack.c.bf16 %v267, %v266
      %v377 = vpack.c.bf16 %v269, %v268
      %v378 = vpack.c.bf16 %v271, %v270
      %v379 = vpack.c.bf16 %v273, %v272
      %v380 = vpack.c.bf16 %v275, %v274
      %v381 = vpack.c.bf16 %v277, %v276
      %v382 = vpack.c.bf16 %v279, %v278
      %v383 = vpack.c.bf16 %v281, %v280
      %v384 = vpack.c.bf16 %v283, %v282
      %v385 = vpack.c.bf16 %v285, %v284
      %v386 = vpack.c.bf16 %v287, %v286
      %v387 = vpack.c.bf16 %v289, %v288
      %v388 = vpack.c.bf16 %v291, %v290
      %v389 = vpack.c.bf16 %v293, %v292
      %v390 = vpack.c.bf16 %v295, %v294
      %v391 = vpack.c.bf16 %v297, %v296
      %v392 = vpack.c.bf16 %v299, %v298
      %v393 = vpack.c.bf16 %v301, %v300
      %v394 = vpack.c.bf16 %v303, %v302
      %v395 = vpack.c.bf16 %v305, %v304
      %v396 = vpack.c.bf16 %v307, %v306
      %v397 = vpack.c.bf16 %v309, %v308
      %v398 = vpack.c.bf16 %v311, %v310
      %v399 = vpack.c.bf16 %v313, %v312
      %v400 = vpack.c.bf16 %v315, %v314
      %v401 = vpack.c.bf16 %v317, %v316
      %v402 = vpack.c.bf16 %v319, %v318
      %v403 = vpack.c.bf16 %v321, %v320
      %v404 = vpack.c.bf16 %v323, %v322
      %v405 = vpack.c.bf16 %v325, %v324
      %v406 = vpack.c.bf16 %v327, %v326
      %v407 = vpack.c.bf16 %v329, %v328
      %v408 = vpack.c.bf16 %v331, %v330
      %v409 = vpack.c.bf16 %v333, %v332
      %v410 = vpack.c.bf16 %v335, %v334
      %v411 = vpack.c.bf16 %v337, %v336
      %v412 = vpack.c.bf16 %v339, %v338
      %v413 = vpack.c.bf16 %v341, %v340
      %v414 = vpack.c.bf16 %v343, %v342
      %v415 = vpack.c.bf16 %v345, %v344
      %v416 = vpack.c.bf16 %v347, %v346
      %v417 = vpack.c.bf16 %v349, %v348
      %v418 = vpack.c.bf16 %v351, %v350
      %v419 = vpack.c.bf16 %v353, %v352
      %v420 = vpack.c.bf16 %v355, %v354
      %v421 = vpack.c.bf16 %v357, %v356
      %v422 = vld [vmem:[%s1] sm:$0xff]
      %v423 = vld [vmem:[%s1 + $0x8] sm:$0xff]
      %v424 = vld [vmem:[%s1 + $0x10] sm:$0xff]
      %v425 = vld [vmem:[%s1 + $0x18] sm:$0xff]
      %v426 = vld [vmem:[%s1 + $0x20] sm:$0xff]
      %v427 = vld [vmem:[%s1 + $0x28] sm:$0xff]
      %v428 = vld [vmem:[%s1 + $0x30] sm:$0xff]
      %v429 = vld [vmem:[%s1 + $0x38] sm:$0xff]
      %v430 = vld [vmem:[%s1 + $0x40] sm:$0xff]
      %v431 = vld [vmem:[%s1 + $0x48] sm:$0xff]
      %v432 = vld [vmem:[%s1 + $0x50] sm:$0xff]
      %v433 = vld [vmem:[%s1 + $0x58] sm:$0xff]
      %v434 = vld [vmem:[%s1 + $0x60] sm:$0xff]
      %v435 = vld [vmem:[%s1 + $0x68] sm:$0xff]
      %v436 = vld [vmem:[%s1 + $0x70] sm:$0xff]
      %v437 = vld [vmem:[%s1 + $0x78] sm:$0xff]
      %v438 = vld [vmem:[%s1 + $0x80] sm:$0xff]
      %v439 = vld [vmem:[%s1 + $0x88] sm:$0xff]
      %v440 = vld [vmem:[%s1 + $0x90] sm:$0xff]
      %v441 = vld [vmem:[%s1 + $0x98] sm:$0xff]
      %v442 = vld [vmem:[%s1 + $0xa0] sm:$0xff]
      %v443 = vld [vmem:[%s1 + $0xa8] sm:$0xff]
      %v444 = vld [vmem:[%s1 + $0xb0] sm:$0xff]
      %v445 = vld [vmem:[%s1 + $0xb8] sm:$0xff]
      %v446 = vld [vmem:[%s1 + $0xc0] sm:$0xff]
      %v447 = vld [vmem:[%s1 + $0xc8] sm:$0xff]
      %v448 = vld [vmem:[%s1 + $0xd0] sm:$0xff]
      %v449 = vld [vmem:[%s1 + $0xd8] sm:$0xff]
      %v450 = vld [vmem:[%s1 + $0xe0] sm:$0xff]
      %v451 = vld [vmem:[%s1 + $0xe8] sm:$0xff]
      %v452 = vld [vmem:[%s1 + $0xf0] sm:$0xff]
      %v453 = vld [vmem:[%s1 + $0xf8] sm:$0xff]
      %v454 = vld [vmem:[%s1 + $0x100] sm:$0xff]
      %v455 = vld [vmem:[%s1 + $0x108] sm:$0xff]
      %v456 = vld [vmem:[%s1 + $0x110] sm:$0xff]
      %v457 = vld [vmem:[%s1 + $0x118] sm:$0xff]
      %v458 = vld [vmem:[%s1 + $0x120] sm:$0xff]
      %v459 = vld [vmem:[%s1 + $0x128] sm:$0xff]
      %v460 = vld [vmem:[%s1 + $0x130] sm:$0xff]
      %v461 = vld [vmem:[%s1 + $0x138] sm:$0xff]
      %v462 = vld [vmem:[%s1 + $0x140] sm:$0xff]
      %v463 = vld [vmem:[%s1 + $0x148] sm:$0xff]
      %v464 = vld [vmem:[%s1 + $0x150] sm:$0xff]
      %v465 = vld [vmem:[%s1 + $0x158] sm:$0xff]
      %v466 = vld [vmem:[%s1 + $0x160] sm:$0xff]
      %v467 = vld [vmem:[%s1 + $0x168] sm:$0xff]
      %v468 = vld [vmem:[%s1 + $0x170] sm:$0xff]
      %v469 = vld [vmem:[%s1 + $0x178] sm:$0xff]
      %v470 = vld [vmem:[%s1 + $0x180] sm:$0xff]
      %v471 = vld [vmem:[%s1 + $0x188] sm:$0xff]
      %v472 = vld [vmem:[%s1 + $0x190] sm:$0xff]
      %v473 = vld [vmem:[%s1 + $0x198] sm:$0xff]
      %v474 = vld [vmem:[%s1 + $0x1a0] sm:$0xff]
      %v475 = vld [vmem:[%s1 + $0x1a8] sm:$0xff]
      %v476 = vld [vmem:[%s1 + $0x1b0] sm:$0xff]
      %v477 = vld [vmem:[%s1 + $0x1b8] sm:$0xff]
      %v478 = vld [vmem:[%s1 + $0x1c0] sm:$0xff]
      %v479 = vld [vmem:[%s1 + $0x1c8] sm:$0xff]
      %v480 = vld [vmem:[%s1 + $0x1d0] sm:$0xff]
      %v481 = vld [vmem:[%s1 + $0x1d8] sm:$0xff]
      %v482 = vld [vmem:[%s1 + $0x1e0] sm:$0xff]
      %v483 = vld [vmem:[%s1 + $0x1e8] sm:$0xff]
      %v484 = vld [vmem:[%s1 + $0x1f0] sm:$0xff]
      %v485 = vld [vmem:[%s1 + $0x1f8] sm:$0xff]
      %v486 = vld [vmem:[%s1 + $0x200] sm:$0xff]
      %v487 = vld [vmem:[%s1 + $0x208] sm:$0xff]
      %v488 = vld [vmem:[%s1 + $0x210] sm:$0xff]
      %v489 = vld [vmem:[%s1 + $0x218] sm:$0xff]
      %v490 = vld [vmem:[%s1 + $0x220] sm:$0xff]
      %v491 = vld [vmem:[%s1 + $0x228] sm:$0xff]
      %v492 = vld [vmem:[%s1 + $0x230] sm:$0xff]
      %v493 = vld [vmem:[%s1 + $0x238] sm:$0xff]
      %v494 = vld [vmem:[%s1 + $0x240] sm:$0xff]
      %v495 = vld [vmem:[%s1 + $0x248] sm:$0xff]
      %v496 = vld [vmem:[%s1 + $0x250] sm:$0xff]
      %v497 = vld [vmem:[%s1 + $0x258] sm:$0xff]
      %v498 = vld [vmem:[%s1 + $0x260] sm:$0xff]
      %v499 = vld [vmem:[%s1 + $0x268] sm:$0xff]
      %v500 = vld [vmem:[%s1 + $0x270] sm:$0xff]
      %v501 = vld [vmem:[%s1 + $0x278] sm:$0xff]
      %v502 = vld [vmem:[%s1 + $0x280] sm:$0xff]
      %v503 = vld [vmem:[%s1 + $0x288] sm:$0xff]
      %v504 = vld [vmem:[%s1 + $0x290] sm:$0xff]
      %v505 = vld [vmem:[%s1 + $0x298] sm:$0xff]
      %v506 = vld [vmem:[%s1 + $0x2a0] sm:$0xff]
      %v507 = vld [vmem:[%s1 + $0x2a8] sm:$0xff]
      %v508 = vld [vmem:[%s1 + $0x2b0] sm:$0xff]
      %v509 = vld [vmem:[%s1 + $0x2b8] sm:$0xff]
      %v510 = vld [vmem:[%s1 + $0x2c0] sm:$0xff]
      %v511 = vld [vmem:[%s1 + $0x2c8] sm:$0xff]
      %v512 = vld [vmem:[%s1 + $0x2d0] sm:$0xff]
      %v513 = vld [vmem:[%s1 + $0x2d8] sm:$0xff]
      %v514 = vld [vmem:[%s1 + $0x2e0] sm:$0xff]
      %v515 = vld [vmem:[%s1 + $0x2e8] sm:$0xff]
      %v516 = vld [vmem:[%s1 + $0x2f0] sm:$0xff]
      %v517 = vld [vmem:[%s1 + $0x2f8] sm:$0xff]
      %v518 = vld [vmem:[%s1 + $0x300] sm:$0xff]
      %v519 = vld [vmem:[%s1 + $0x308] sm:$0xff]
      %v520 = vld [vmem:[%s1 + $0x310] sm:$0xff]
      %v521 = vld [vmem:[%s1 + $0x318] sm:$0xff]
      %v522 = vld [vmem:[%s1 + $0x320] sm:$0xff]
      %v523 = vld [vmem:[%s1 + $0x328] sm:$0xff]
      %v524 = vld [vmem:[%s1 + $0x330] sm:$0xff]
      %v525 = vld [vmem:[%s1 + $0x338] sm:$0xff]
      %v526 = vld [vmem:[%s1 + $0x340] sm:$0xff]
      %v527 = vld [vmem:[%s1 + $0x348] sm:$0xff]
      %v528 = vld [vmem:[%s1 + $0x350] sm:$0xff]
      %v529 = vld [vmem:[%s1 + $0x358] sm:$0xff]
      %v530 = vld [vmem:[%s1 + $0x360] sm:$0xff]
      %v531 = vld [vmem:[%s1 + $0x368] sm:$0xff]
      %v532 = vld [vmem:[%s1 + $0x370] sm:$0xff]
      %v533 = vld [vmem:[%s1 + $0x378] sm:$0xff]
      %v534 = vld [vmem:[%s1 + $0x380] sm:$0xff]
      %v535 = vld [vmem:[%s1 + $0x388] sm:$0xff]
      %v536 = vld [vmem:[%s1 + $0x390] sm:$0xff]
      %v537 = vld [vmem:[%s1 + $0x398] sm:$0xff]
      %v538 = vld [vmem:[%s1 + $0x3a0] sm:$0xff]
      %v539 = vld [vmem:[%s1 + $0x3a8] sm:$0xff]
      %v540 = vld [vmem:[%s1 + $0x3b0] sm:$0xff]
      %v541 = vld [vmem:[%s1 + $0x3b8] sm:$0xff]
      %v542 = vld [vmem:[%s1 + $0x3c0] sm:$0xff]
      %v543 = vld [vmem:[%s1 + $0x3c8] sm:$0xff]
      %v544 = vld [vmem:[%s1 + $0x3d0] sm:$0xff]
      %v545 = vld [vmem:[%s1 + $0x3d8] sm:$0xff]
      %v546 = vld [vmem:[%s1 + $0x3e0] sm:$0xff]
      %v547 = vld [vmem:[%s1 + $0x3e8] sm:$0xff]
      %v548 = vld [vmem:[%s1 + $0x3f0] sm:$0xff]
      %v549 = vld [vmem:[%s1 + $0x3f8] sm:$0xff]
      %v550 = vld [vmem:[%s1 + $0x400] sm:$0xff]
      %v551 = vld [vmem:[%s1 + $0x408] sm:$0xff]
      %v552 = vld [vmem:[%s1 + $0x410] sm:$0xff]
      %v553 = vld [vmem:[%s1 + $0x418] sm:$0xff]
      %v554 = vld [vmem:[%s1 + $0x420] sm:$0xff]
      %v555 = vld [vmem:[%s1 + $0x428] sm:$0xff]
      %v556 = vld [vmem:[%s1 + $0x430] sm:$0xff]
      %v557 = vld [vmem:[%s1 + $0x438] sm:$0xff]
      %v558 = vld [vmem:[%s1 + $0x440] sm:$0xff]
      %v559 = vld [vmem:[%s1 + $0x448] sm:$0xff]
      %v560 = vld [vmem:[%s1 + $0x450] sm:$0xff]
      %v561 = vld [vmem:[%s1 + $0x458] sm:$0xff]
      %v562 = vld [vmem:[%s1 + $0x460] sm:$0xff]
      %v563 = vld [vmem:[%s1 + $0x468] sm:$0xff]
      %v564 = vld [vmem:[%s1 + $0x470] sm:$0xff]
      %v565 = vld [vmem:[%s1 + $0x478] sm:$0xff]
      %v566 = vld [vmem:[%s1 + $0x480] sm:$0xff]
      %v567 = vld [vmem:[%s1 + $0x488] sm:$0xff]
      %v568 = vld [vmem:[%s1 + $0x490] sm:$0xff]
      %v569 = vld [vmem:[%s1 + $0x498] sm:$0xff]
      %v570 = vld [vmem:[%s1 + $0x4a0] sm:$0xff]
      %v571 = vld [vmem:[%s1 + $0x4a8] sm:$0xff]
      %v572 = vld [vmem:[%s1 + $0x4b0] sm:$0xff]
      %v573 = vld [vmem:[%s1 + $0x4b8] sm:$0xff]
      %v574 = vld [vmem:[%s1 + $0x4c0] sm:$0xff]
      %v575 = vld [vmem:[%s1 + $0x4c8] sm:$0xff]
      %v576 = vld [vmem:[%s1 + $0x4d0] sm:$0xff]
      %v577 = vld [vmem:[%s1 + $0x4d8] sm:$0xff]
      %v578 = vld [vmem:[%s1 + $0x4e0] sm:$0xff]
      %v579 = vld [vmem:[%s1 + $0x4e8] sm:$0xff]
      %v580 = vld [vmem:[%s1 + $0x4f0] sm:$0xff]
      %v581 = vld [vmem:[%s1 + $0x4f8] sm:$0xff]
      %v582 = vld [vmem:[%s1 + $0x500] sm:$0xff]
      %v583 = vld [vmem:[%s1 + $0x508] sm:$0xff]
      %v584 = vld [vmem:[%s1 + $0x510] sm:$0xff]
      %v585 = vld [vmem:[%s1 + $0x518] sm:$0xff]
      %v586 = vld [vmem:[%s1 + $0x520] sm:$0xff]
      %v587 = vld [vmem:[%s1 + $0x528] sm:$0xff]
      %v588 = vld [vmem:[%s1 + $0x530] sm:$0xff]
      %v589 = vld [vmem:[%s1 + $0x538] sm:$0xff]
      %v590 = vld [vmem:[%s1 + $0x540] sm:$0xff]
      %v591 = vld [vmem:[%s1 + $0x548] sm:$0xff]
      %v592 = vld [vmem:[%s1 + $0x550] sm:$0xff]
      %v593 = vld [vmem:[%s1 + $0x558] sm:$0xff]
      %v594 = vld [vmem:[%s1 + $0x560] sm:$0xff]
      %v595 = vld [vmem:[%s1 + $0x568] sm:$0xff]
      %v596 = vld [vmem:[%s1 + $0x570] sm:$0xff]
      %v597 = vld [vmem:[%s1 + $0x578] sm:$0xff]
      %v598 = vld [vmem:[%s1 + $0x580] sm:$0xff]
      %v599 = vld [vmem:[%s1 + $0x588] sm:$0xff]
      %v600 = vld [vmem:[%s1 + $0x590] sm:$0xff]
      %v601 = vld [vmem:[%s1 + $0x598] sm:$0xff]
      %v602 = vld [vmem:[%s1 + $0x5a0] sm:$0xff]
      %v603 = vld [vmem:[%s1 + $0x5a8] sm:$0xff]
      %v604 = vld [vmem:[%s1 + $0x5b0] sm:$0xff]
      %v605 = vld [vmem:[%s1 + $0x5b8] sm:$0xff]
      %v606 = vld [vmem:[%s1 + $0x5c0] sm:$0xff]
      %v607 = vld [vmem:[%s1 + $0x5c8] sm:$0xff]
      %v608 = vld [vmem:[%s1 + $0x5d0] sm:$0xff]
      %v609 = vld [vmem:[%s1 + $0x5d8] sm:$0xff]
      %v610 = vld [vmem:[%s1 + $0x5e0] sm:$0xff]
      %v611 = vld [vmem:[%s1 + $0x5e8] sm:$0xff]
      %v612 = vld [vmem:[%s1 + $0x5f0] sm:$0xff]
      %v613 = vld [vmem:[%s1 + $0x5f8] sm:$0xff]
      %v614 = vld [vmem:[%s1 + $0x600] sm:$0xff]
      %v615 = vld [vmem:[%s1 + $0x608] sm:$0xff]
      %v616 = vld [vmem:[%s1 + $0x610] sm:$0xff]
      %v617 = vld [vmem:[%s1 + $0x618] sm:$0xff]
      %v618 = vld [vmem:[%s1 + $0x620] sm:$0xff]
      %v619 = vld [vmem:[%s1 + $0x628] sm:$0xff]
      %v620 = vld [vmem:[%s1 + $0x630] sm:$0xff]
      %v621 = vld [vmem:[%s1 + $0x638] sm:$0xff]
      %v622 = vld [vmem:[%s1 + $0x640] sm:$0xff]
      %v623 = vld [vmem:[%s1 + $0x648] sm:$0xff]
      %v624 = vld [vmem:[%s1 + $0x650] sm:$0xff]
      %v625 = vld [vmem:[%s1 + $0x658] sm:$0xff]
      %v626 = vld [vmem:[%s1 + $0x660] sm:$0xff]
      %v627 = vld [vmem:[%s1 + $0x668] sm:$0xff]
      %v628 = vld [vmem:[%s1 + $0x670] sm:$0xff]
      %v629 = vld [vmem:[%s1 + $0x678] sm:$0xff]
      %v630 = vld [vmem:[%s1 + $0x680] sm:$0xff]
      %v631 = vld [vmem:[%s1 + $0x688] sm:$0xff]
      %v632 = vld [vmem:[%s1 + $0x690] sm:$0xff]
      %v633 = vld [vmem:[%s1 + $0x698] sm:$0xff]
      %v634 = vld [vmem:[%s1 + $0x6a0] sm:$0xff]
      %v635 = vld [vmem:[%s1 + $0x6a8] sm:$0xff]
      %v636 = vld [vmem:[%s1 + $0x6b0] sm:$0xff]
      %v637 = vld [vmem:[%s1 + $0x6b8] sm:$0xff]
      %v638 = vld [vmem:[%s1 + $0x6c0] sm:$0xff]
      %v639 = vld [vmem:[%s1 + $0x6c8] sm:$0xff]
      %v640 = vld [vmem:[%s1 + $0x6d0] sm:$0xff]
      %v641 = vld [vmem:[%s1 + $0x6d8] sm:$0xff]
      %v642 = vld [vmem:[%s1 + $0x6e0] sm:$0xff]
      %v643 = vld [vmem:[%s1 + $0x6e8] sm:$0xff]
      %v644 = vld [vmem:[%s1 + $0x6f0] sm:$0xff]
      %v645 = vld [vmem:[%s1 + $0x6f8] sm:$0xff]
      %v646 = vld [vmem:[%s1 + $0x700] sm:$0xff]
      %v647 = vld [vmem:[%s1 + $0x708] sm:$0xff]
      %v648 = vld [vmem:[%s1 + $0x710] sm:$0xff]
      %v649 = vld [vmem:[%s1 + $0x718] sm:$0xff]
      %v650 = vld [vmem:[%s1 + $0x720] sm:$0xff]
      %v651 = vld [vmem:[%s1 + $0x728] sm:$0xff]
      %v652 = vld [vmem:[%s1 + $0x730] sm:$0xff]
      %v653 = vld [vmem:[%s1 + $0x738] sm:$0xff]
      %v654 = vld [vmem:[%s1 + $0x740] sm:$0xff]
      %v655 = vld [vmem:[%s1 + $0x748] sm:$0xff]
      %v656 = vld [vmem:[%s1 + $0x750] sm:$0xff]
      %v657 = vld [vmem:[%s1 + $0x758] sm:$0xff]
      %v658 = vld [vmem:[%s1 + $0x760] sm:$0xff]
      %v659 = vld [vmem:[%s1 + $0x768] sm:$0xff]
      %v660 = vld [vmem:[%s1 + $0x770] sm:$0xff]
      %v661 = vld [vmem:[%s1 + $0x778] sm:$0xff]
      %v662 = vld [vmem:[%s1 + $0x780] sm:$0xff]
      %v663 = vld [vmem:[%s1 + $0x788] sm:$0xff]
      %v664 = vld [vmem:[%s1 + $0x790] sm:$0xff]
      %v665 = vld [vmem:[%s1 + $0x798] sm:$0xff]
      %v666 = vld [vmem:[%s1 + $0x7a0] sm:$0xff]
      %v667 = vld [vmem:[%s1 + $0x7a8] sm:$0xff]
      %v668 = vld [vmem:[%s1 + $0x7b0] sm:$0xff]
      %v669 = vld [vmem:[%s1 + $0x7b8] sm:$0xff]
      %v670 = vld [vmem:[%s1 + $0x7c0] sm:$0xff]
      %v671 = vld [vmem:[%s1 + $0x7c8] sm:$0xff]
      %v672 = vld [vmem:[%s1 + $0x7d0] sm:$0xff]
      %v673 = vld [vmem:[%s1 + $0x7d8] sm:$0xff]
      %v674 = vld [vmem:[%s1 + $0x7e0] sm:$0xff]
      %v675 = vld [vmem:[%s1 + $0x7e8] sm:$0xff]
      %v676 = vld [vmem:[%s1 + $0x7f0] sm:$0xff]
      %v677 = vld [vmem:[%s1 + $0x7f8] sm:$0xff]
      %v678 = vld [vmem:[%s2] sm:$0xff]
      %v679 = vld [vmem:[%s2 + $0x8] sm:$0xff]
      %v680 = vld [vmem:[%s2 + $0x10] sm:$0xff]
      %v681 = vld [vmem:[%s2 + $0x18] sm:$0xff]
      %v682 = vld [vmem:[%s2 + $0x20] sm:$0xff]
      %v683 = vld [vmem:[%s2 + $0x28] sm:$0xff]
      %v684 = vld [vmem:[%s2 + $0x30] sm:$0xff]
      %v685 = vld [vmem:[%s2 + $0x38] sm:$0xff]
      %v686 = vld [vmem:[%s2 + $0x40] sm:$0xff]
      %v687 = vld [vmem:[%s2 + $0x48] sm:$0xff]
      %v688 = vld [vmem:[%s2 + $0x50] sm:$0xff]
      %v689 = vld [vmem:[%s2 + $0x58] sm:$0xff]
      %v690 = vld [vmem:[%s2 + $0x60] sm:$0xff]
      %v691 = vld [vmem:[%s2 + $0x68] sm:$0xff]
      %v692 = vld [vmem:[%s2 + $0x70] sm:$0xff]
      %v693 = vld [vmem:[%s2 + $0x78] sm:$0xff]
      %v694 = vld [vmem:[%s2 + $0x80] sm:$0xff]
      %v695 = vld [vmem:[%s2 + $0x88] sm:$0xff]
      %v696 = vld [vmem:[%s2 + $0x90] sm:$0xff]
      %v697 = vld [vmem:[%s2 + $0x98] sm:$0xff]
      %v698 = vld [vmem:[%s2 + $0xa0] sm:$0xff]
      %v699 = vld [vmem:[%s2 + $0xa8] sm:$0xff]
      %v700 = vld [vmem:[%s2 + $0xb0] sm:$0xff]
      %v701 = vld [vmem:[%s2 + $0xb8] sm:$0xff]
      %v702 = vld [vmem:[%s2 + $0xc0] sm:$0xff]
      %v703 = vld [vmem:[%s2 + $0xc8] sm:$0xff]
      %v704 = vld [vmem:[%s2 + $0xd0] sm:$0xff]
      %v705 = vld [vmem:[%s2 + $0xd8] sm:$0xff]
      %v706 = vld [vmem:[%s2 + $0xe0] sm:$0xff]
      %v707 = vld [vmem:[%s2 + $0xe8] sm:$0xff]
      %v708 = vld [vmem:[%s2 + $0xf0] sm:$0xff]
      %v709 = vld [vmem:[%s2 + $0xf8] sm:$0xff]
      %v710 = vld [vmem:[%s2 + $0x100] sm:$0xff]
      %v711 = vld [vmem:[%s2 + $0x108] sm:$0xff]
      %v712 = vld [vmem:[%s2 + $0x110] sm:$0xff]
      %v713 = vld [vmem:[%s2 + $0x118] sm:$0xff]
      %v714 = vld [vmem:[%s2 + $0x120] sm:$0xff]
      %v715 = vld [vmem:[%s2 + $0x128] sm:$0xff]
      %v716 = vld [vmem:[%s2 + $0x130] sm:$0xff]
      %v717 = vld [vmem:[%s2 + $0x138] sm:$0xff]
      %v718 = vld [vmem:[%s2 + $0x140] sm:$0xff]
      %v719 = vld [vmem:[%s2 + $0x148] sm:$0xff]
      %v720 = vld [vmem:[%s2 + $0x150] sm:$0xff]
      %v721 = vld [vmem:[%s2 + $0x158] sm:$0xff]
      %v722 = vld [vmem:[%s2 + $0x160] sm:$0xff]
      %v723 = vld [vmem:[%s2 + $0x168] sm:$0xff]
      %v724 = vld [vmem:[%s2 + $0x170] sm:$0xff]
      %v725 = vld [vmem:[%s2 + $0x178] sm:$0xff]
      %v726 = vld [vmem:[%s2 + $0x180] sm:$0xff]
      %v727 = vld [vmem:[%s2 + $0x188] sm:$0xff]
      %v728 = vld [vmem:[%s2 + $0x190] sm:$0xff]
      %v729 = vld [vmem:[%s2 + $0x198] sm:$0xff]
      %v730 = vld [vmem:[%s2 + $0x1a0] sm:$0xff]
      %v731 = vld [vmem:[%s2 + $0x1a8] sm:$0xff]
      %v732 = vld [vmem:[%s2 + $0x1b0] sm:$0xff]
      %v733 = vld [vmem:[%s2 + $0x1b8] sm:$0xff]
      %v734 = vld [vmem:[%s2 + $0x1c0] sm:$0xff]
      %v735 = vld [vmem:[%s2 + $0x1c8] sm:$0xff]
      %v736 = vld [vmem:[%s2 + $0x1d0] sm:$0xff]
      %v737 = vld [vmem:[%s2 + $0x1d8] sm:$0xff]
      %v738 = vld [vmem:[%s2 + $0x1e0] sm:$0xff]
      %v739 = vld [vmem:[%s2 + $0x1e8] sm:$0xff]
      %v740 = vld [vmem:[%s2 + $0x1f0] sm:$0xff]
      %v741 = vld [vmem:[%s2 + $0x1f8] sm:$0xff]
      %743 = vset.pattern.permute.xlu0 0
      %744 = vperm.xlu0 %743, %v678
      %v745 = vpop.permute.xlu0 %744
      %748 = vset.pattern.permute.xlu0 0
      %749 = vperm.xlu0 %748, %v679
      %v750 = vpop.permute.xlu0 %749
      %753 = vset.pattern.permute.xlu0 0
      %754 = vperm.xlu0 %753, %v680
      %v755 = vpop.permute.xlu0 %754
      %758 = vset.pattern.permute.xlu0 0
      %759 = vperm.xlu0 %758, %v681
      %v760 = vpop.permute.xlu0 %759
      %763 = vset.pattern.permute.xlu0 0
      %764 = vperm.xlu0 %763, %v682
      %v765 = vpop.permute.xlu0 %764
      %768 = vset.pattern.permute.xlu0 0
      %769 = vperm.xlu0 %768, %v683
      %v770 = vpop.permute.xlu0 %769
      %773 = vset.pattern.permute.xlu0 0
      %774 = vperm.xlu0 %773, %v684
      %v775 = vpop.permute.xlu0 %774
      %778 = vset.pattern.permute.xlu0 0
      %779 = vperm.xlu0 %778, %v685
      %v780 = vpop.permute.xlu0 %779
      %783 = vset.pattern.permute.xlu0 0
      %784 = vperm.xlu0 %783, %v686
      %v785 = vpop.permute.xlu0 %784
      %788 = vset.pattern.permute.xlu0 0
      %789 = vperm.xlu0 %788, %v687
      %v790 = vpop.permute.xlu0 %789
      %793 = vset.pattern.permute.xlu0 0
      %794 = vperm.xlu0 %793, %v688
      %v795 = vpop.permute.xlu0 %794
      %798 = vset.pattern.permute.xlu0 0
      %799 = vperm.xlu0 %798, %v689
      %v800 = vpop.permute.xlu0 %799
      %803 = vset.pattern.permute.xlu0 0
      %804 = vperm.xlu0 %803, %v690
      %v805 = vpop.permute.xlu0 %804
      %808 = vset.pattern.permute.xlu0 0
      %809 = vperm.xlu0 %808, %v691
      %v810 = vpop.permute.xlu0 %809
      %813 = vset.pattern.permute.xlu0 0
      %814 = vperm.xlu0 %813, %v692
      %v815 = vpop.permute.xlu0 %814
      %818 = vset.pattern.permute.xlu0 0
      %819 = vperm.xlu0 %818, %v693
      %v820 = vpop.permute.xlu0 %819
      %823 = vset.pattern.permute.xlu0 0
      %824 = vperm.xlu0 %823, %v694
      %v825 = vpop.permute.xlu0 %824
      %828 = vset.pattern.permute.xlu0 0
      %829 = vperm.xlu0 %828, %v695
      %v830 = vpop.permute.xlu0 %829
      %833 = vset.pattern.permute.xlu0 0
      %834 = vperm.xlu0 %833, %v696
      %v835 = vpop.permute.xlu0 %834
      %838 = vset.pattern.permute.xlu0 0
      %839 = vperm.xlu0 %838, %v697
      %v840 = vpop.permute.xlu0 %839
      %843 = vset.pattern.permute.xlu0 0
      %844 = vperm.xlu0 %843, %v698
      %v845 = vpop.permute.xlu0 %844
      %848 = vset.pattern.permute.xlu0 0
      %849 = vperm.xlu0 %848, %v699
      %v850 = vpop.permute.xlu0 %849
      %853 = vset.pattern.permute.xlu0 0
      %854 = vperm.xlu0 %853, %v700
      %v855 = vpop.permute.xlu0 %854
      %858 = vset.pattern.permute.xlu0 0
      %859 = vperm.xlu0 %858, %v701
      %v860 = vpop.permute.xlu0 %859
      %863 = vset.pattern.permute.xlu0 0
      %864 = vperm.xlu0 %863, %v702
      %v865 = vpop.permute.xlu0 %864
      %868 = vset.pattern.permute.xlu0 0
      %869 = vperm.xlu0 %868, %v703
      %v870 = vpop.permute.xlu0 %869
      %873 = vset.pattern.permute.xlu0 0
      %874 = vperm.xlu0 %873, %v704
      %v875 = vpop.permute.xlu0 %874
      %878 = vset.pattern.permute.xlu0 0
      %879 = vperm.xlu0 %878, %v705
      %v880 = vpop.permute.xlu0 %879
      %883 = vset.pattern.permute.xlu0 0
      %884 = vperm.xlu0 %883, %v706
      %v885 = vpop.permute.xlu0 %884
      %888 = vset.pattern.permute.xlu0 0
      %889 = vperm.xlu0 %888, %v707
      %v890 = vpop.permute.xlu0 %889
      %893 = vset.pattern.permute.xlu0 0
      %894 = vperm.xlu0 %893, %v708
      %v895 = vpop.permute.xlu0 %894
      %898 = vset.pattern.permute.xlu0 0
      %899 = vperm.xlu0 %898, %v709
      %v900 = vpop.permute.xlu0 %899
      %903 = vset.pattern.permute.xlu0 0
      %904 = vperm.xlu0 %903, %v710
      %v905 = vpop.permute.xlu0 %904
      %908 = vset.pattern.permute.xlu0 0
      %909 = vperm.xlu0 %908, %v711
      %v910 = vpop.permute.xlu0 %909
      %913 = vset.pattern.permute.xlu0 0
      %914 = vperm.xlu0 %913, %v712
      %v915 = vpop.permute.xlu0 %914
      %918 = vset.pattern.permute.xlu0 0
      %919 = vperm.xlu0 %918, %v713
      %v920 = vpop.permute.xlu0 %919
      %923 = vset.pattern.permute.xlu0 0
      %924 = vperm.xlu0 %923, %v714
      %v925 = vpop.permute.xlu0 %924
      %928 = vset.pattern.permute.xlu0 0
      %929 = vperm.xlu0 %928, %v715
      %v930 = vpop.permute.xlu0 %929
      %933 = vset.pattern.permute.xlu0 0
      %934 = vperm.xlu0 %933, %v716
      %v935 = vpop.permute.xlu0 %934
      %938 = vset.pattern.permute.xlu0 0
      %939 = vperm.xlu0 %938, %v717
      %v940 = vpop.permute.xlu0 %939
      %943 = vset.pattern.permute.xlu0 0
      %944 = vperm.xlu0 %943, %v718
      %v945 = vpop.permute.xlu0 %944
      %948 = vset.pattern.permute.xlu0 0
      %949 = vperm.xlu0 %948, %v719
      %v950 = vpop.permute.xlu0 %949
      %953 = vset.pattern.permute.xlu0 0
      %954 = vperm.xlu0 %953, %v720
      %v955 = vpop.permute.xlu0 %954
      %958 = vset.pattern.permute.xlu0 0
      %959 = vperm.xlu0 %958, %v721
      %v960 = vpop.permute.xlu0 %959
      %963 = vset.pattern.permute.xlu0 0
      %964 = vperm.xlu0 %963, %v722
      %v965 = vpop.permute.xlu0 %964
      %968 = vset.pattern.permute.xlu0 0
      %969 = vperm.xlu0 %968, %v723
      %v970 = vpop.permute.xlu0 %969
      %973 = vset.pattern.permute.xlu0 0
      %974 = vperm.xlu0 %973, %v724
      %v975 = vpop.permute.xlu0 %974
      %978 = vset.pattern.permute.xlu0 0
      %979 = vperm.xlu0 %978, %v725
      %v980 = vpop.permute.xlu0 %979
      %983 = vset.pattern.permute.xlu0 0
      %984 = vperm.xlu0 %983, %v726
      %v985 = vpop.permute.xlu0 %984
      %988 = vset.pattern.permute.xlu0 0
      %989 = vperm.xlu0 %988, %v727
      %v990 = vpop.permute.xlu0 %989
      %993 = vset.pattern.permute.xlu0 0
      %994 = vperm.xlu0 %993, %v728
      %v995 = vpop.permute.xlu0 %994
      %998 = vset.pattern.permute.xlu0 0
      %999 = vperm.xlu0 %998, %v729
      %v1000 = vpop.permute.xlu0 %999
      %1003 = vset.pattern.permute.xlu0 0
      %1004 = vperm.xlu0 %1003, %v730
      %v1005 = vpop.permute.xlu0 %1004
      %1008 = vset.pattern.permute.xlu0 0
      %1009 = vperm.xlu0 %1008, %v731
      %v1010 = vpop.permute.xlu0 %1009
      %1013 = vset.pattern.permute.xlu0 0
      %1014 = vperm.xlu0 %1013, %v732
      %v1015 = vpop.permute.xlu0 %1014
      %1018 = vset.pattern.permute.xlu0 0
      %1019 = vperm.xlu0 %1018, %v733
      %v1020 = vpop.permute.xlu0 %1019
      %1023 = vset.pattern.permute.xlu0 0
      %1024 = vperm.xlu0 %1023, %v734
      %v1025 = vpop.permute.xlu0 %1024
      %1028 = vset.pattern.permute.xlu0 0
      %1029 = vperm.xlu0 %1028, %v735
      %v1030 = vpop.permute.xlu0 %1029
      %1033 = vset.pattern.permute.xlu0 0
      %1034 = vperm.xlu0 %1033, %v736
      %v1035 = vpop.permute.xlu0 %1034
      %1038 = vset.pattern.permute.xlu0 0
      %1039 = vperm.xlu0 %1038, %v737
      %v1040 = vpop.permute.xlu0 %1039
      %1043 = vset.pattern.permute.xlu0 0
      %1044 = vperm.xlu0 %1043, %v738
      %v1045 = vpop.permute.xlu0 %1044
      %1048 = vset.pattern.permute.xlu0 0
      %1049 = vperm.xlu0 %1048, %v739
      %v1050 = vpop.permute.xlu0 %1049
      %1053 = vset.pattern.permute.xlu0 0
      %1054 = vperm.xlu0 %1053, %v740
      %v1055 = vpop.permute.xlu0 %1054
      %1058 = vset.pattern.permute.xlu0 0
      %1059 = vperm.xlu0 %1058, %v741
      %v1060 = vpop.permute.xlu0 %1059
      %v1318 = vunpack.c.l.b16 %v422
      %v1319 = vunpack.c.h.b16 %v422
      %v1320 = vunpack.c.l.b16 %v423
      %v1321 = vunpack.c.h.b16 %v423
      %v1322 = vunpack.c.l.b16 %v424
      %v1323 = vunpack.c.h.b16 %v424
      %v1324 = vunpack.c.l.b16 %v425
      %v1325 = vunpack.c.h.b16 %v425
      %v1326 = vunpack.c.l.b16 %v426
      %v1327 = vunpack.c.h.b16 %v426
      %v1328 = vunpack.c.l.b16 %v427
      %v1329 = vunpack.c.h.b16 %v427
      %v1330 = vunpack.c.l.b16 %v428
      %v1331 = vunpack.c.h.b16 %v428
      %v1332 = vunpack.c.l.b16 %v429
      %v1333 = vunpack.c.h.b16 %v429
      %v1334 = vunpack.c.l.b16 %v430
      %v1335 = vunpack.c.h.b16 %v430
      %v1336 = vunpack.c.l.b16 %v431
      %v1337 = vunpack.c.h.b16 %v431
      %v1338 = vunpack.c.l.b16 %v432
      %v1339 = vunpack.c.h.b16 %v432
      %v1340 = vunpack.c.l.b16 %v433
      %v1341 = vunpack.c.h.b16 %v433
      %v1342 = vunpack.c.l.b16 %v434
      %v1343 = vunpack.c.h.b16 %v434
      %v1344 = vunpack.c.l.b16 %v435
      %v1345 = vunpack.c.h.b16 %v435
      %v1346 = vunpack.c.l.b16 %v436
      %v1347 = vunpack.c.h.b16 %v436
      %v1348 = vunpack.c.l.b16 %v437
      %v1349 = vunpack.c.h.b16 %v437
      %v1350 = vunpack.c.l.b16 %v438
      %v1351 = vunpack.c.h.b16 %v438
      %v1352 = vunpack.c.l.b16 %v439
      %v1353 = vunpack.c.h.b16 %v439
      %v1354 = vunpack.c.l.b16 %v440
      %v1355 = vunpack.c.h.b16 %v440
      %v1356 = vunpack.c.l.b16 %v441
      %v1357 = vunpack.c.h.b16 %v441
      %v1358 = vunpack.c.l.b16 %v442
      %v1359 = vunpack.c.h.b16 %v442
      %v1360 = vunpack.c.l.b16 %v443
      %v1361 = vunpack.c.h.b16 %v443
      %v1362 = vunpack.c.l.b16 %v444
      %v1363 = vunpack.c.h.b16 %v444
      %v1364 = vunpack.c.l.b16 %v445
      %v1365 = vunpack.c.h.b16 %v445
      %v1366 = vunpack.c.l.b16 %v446
      %v1367 = vunpack.c.h.b16 %v446
      %v1368 = vunpack.c.l.b16 %v447
      %v1369 = vunpack.c.h.b16 %v447
      %v1370 = vunpack.c.l.b16 %v448
      %v1371 = vunpack.c.h.b16 %v448
      %v1372 = vunpack.c.l.b16 %v449
      %v1373 = vunpack.c.h.b16 %v449
      %v1374 = vunpack.c.l.b16 %v450
      %v1375 = vunpack.c.h.b16 %v450
      %v1376 = vunpack.c.l.b16 %v451
      %v1377 = vunpack.c.h.b16 %v451
      %v1378 = vunpack.c.l.b16 %v452
      %v1379 = vunpack.c.h.b16 %v452
      %v1380 = vunpack.c.l.b16 %v453
      %v1381 = vunpack.c.h.b16 %v453
      %v1382 = vunpack.c.l.b16 %v454
      %v1383 = vunpack.c.h.b16 %v454
      %v1384 = vunpack.c.l.b16 %v455
      %v1385 = vunpack.c.h.b16 %v455
      %v1386 = vunpack.c.l.b16 %v456
      %v1387 = vunpack.c.h.b16 %v456
      %v1388 = vunpack.c.l.b16 %v457
      %v1389 = vunpack.c.h.b16 %v457
      %v1390 = vunpack.c.l.b16 %v458
      %v1391 = vunpack.c.h.b16 %v458
      %v1392 = vunpack.c.l.b16 %v459
      %v1393 = vunpack.c.h.b16 %v459
      %v1394 = vunpack.c.l.b16 %v460
      %v1395 = vunpack.c.h.b16 %v460
      %v1396 = vunpack.c.l.b16 %v461
      %v1397 = vunpack.c.h.b16 %v461
      %v1398 = vunpack.c.l.b16 %v462
      %v1399 = vunpack.c.h.b16 %v462
      %v1400 = vunpack.c.l.b16 %v463
      %v1401 = vunpack.c.h.b16 %v463
      %v1402 = vunpack.c.l.b16 %v464
      %v1403 = vunpack.c.h.b16 %v464
      %v1404 = vunpack.c.l.b16 %v465
      %v1405 = vunpack.c.h.b16 %v465
      %v1406 = vunpack.c.l.b16 %v466
      %v1407 = vunpack.c.h.b16 %v466
      %v1408 = vunpack.c.l.b16 %v467
      %v1409 = vunpack.c.h.b16 %v467
      %v1410 = vunpack.c.l.b16 %v468
      %v1411 = vunpack.c.h.b16 %v468
      %v1412 = vunpack.c.l.b16 %v469
      %v1413 = vunpack.c.h.b16 %v469
      %v1414 = vunpack.c.l.b16 %v470
      %v1415 = vunpack.c.h.b16 %v470
      %v1416 = vunpack.c.l.b16 %v471
      %v1417 = vunpack.c.h.b16 %v471
      %v1418 = vunpack.c.l.b16 %v472
      %v1419 = vunpack.c.h.b16 %v472
      %v1420 = vunpack.c.l.b16 %v473
      %v1421 = vunpack.c.h.b16 %v473
      %v1422 = vunpack.c.l.b16 %v474
      %v1423 = vunpack.c.h.b16 %v474
      %v1424 = vunpack.c.l.b16 %v475
      %v1425 = vunpack.c.h.b16 %v475
      %v1426 = vunpack.c.l.b16 %v476
      %v1427 = vunpack.c.h.b16 %v476
      %v1428 = vunpack.c.l.b16 %v477
      %v1429 = vunpack.c.h.b16 %v477
      %v1430 = vunpack.c.l.b16 %v478
      %v1431 = vunpack.c.h.b16 %v478
      %v1432 = vunpack.c.l.b16 %v479
      %v1433 = vunpack.c.h.b16 %v479
      %v1434 = vunpack.c.l.b16 %v480
      %v1435 = vunpack.c.h.b16 %v480
      %v1436 = vunpack.c.l.b16 %v481
      %v1437 = vunpack.c.h.b16 %v481
      %v1438 = vunpack.c.l.b16 %v482
      %v1439 = vunpack.c.h.b16 %v482
      %v1440 = vunpack.c.l.b16 %v483
      %v1441 = vunpack.c.h.b16 %v483
      %v1442 = vunpack.c.l.b16 %v484
      %v1443 = vunpack.c.h.b16 %v484
      %v1444 = vunpack.c.l.b16 %v485
      %v1445 = vunpack.c.h.b16 %v485
      %v1446 = vunpack.c.l.b16 %v486
      %v1447 = vunpack.c.h.b16 %v486
      %v1448 = vunpack.c.l.b16 %v487
      %v1449 = vunpack.c.h.b16 %v487
      %v1450 = vunpack.c.l.b16 %v488
      %v1451 = vunpack.c.h.b16 %v488
      %v1452 = vunpack.c.l.b16 %v489
      %v1453 = vunpack.c.h.b16 %v489
      %v1454 = vunpack.c.l.b16 %v490
      %v1455 = vunpack.c.h.b16 %v490
      %v1456 = vunpack.c.l.b16 %v491
      %v1457 = vunpack.c.h.b16 %v491
      %v1458 = vunpack.c.l.b16 %v492
      %v1459 = vunpack.c.h.b16 %v492
      %v1460 = vunpack.c.l.b16 %v493
      %v1461 = vunpack.c.h.b16 %v493
      %v1462 = vunpack.c.l.b16 %v494
      %v1463 = vunpack.c.h.b16 %v494
      %v1464 = vunpack.c.l.b16 %v495
      %v1465 = vunpack.c.h.b16 %v495
      %v1466 = vunpack.c.l.b16 %v496
      %v1467 = vunpack.c.h.b16 %v496
      %v1468 = vunpack.c.l.b16 %v497
      %v1469 = vunpack.c.h.b16 %v497
      %v1470 = vunpack.c.l.b16 %v498
      %v1471 = vunpack.c.h.b16 %v498
      %v1472 = vunpack.c.l.b16 %v499
      %v1473 = vunpack.c.h.b16 %v499
      %v1474 = vunpack.c.l.b16 %v500
      %v1475 = vunpack.c.h.b16 %v500
      %v1476 = vunpack.c.l.b16 %v501
      %v1477 = vunpack.c.h.b16 %v501
      %v1478 = vunpack.c.l.b16 %v502
      %v1479 = vunpack.c.h.b16 %v502
      %v1480 = vunpack.c.l.b16 %v503
      %v1481 = vunpack.c.h.b16 %v503
      %v1482 = vunpack.c.l.b16 %v504
      %v1483 = vunpack.c.h.b16 %v504
      %v1484 = vunpack.c.l.b16 %v505
      %v1485 = vunpack.c.h.b16 %v505
      %v1486 = vunpack.c.l.b16 %v506
      %v1487 = vunpack.c.h.b16 %v506
      %v1488 = vunpack.c.l.b16 %v507
      %v1489 = vunpack.c.h.b16 %v507
      %v1490 = vunpack.c.l.b16 %v508
      %v1491 = vunpack.c.h.b16 %v508
      %v1492 = vunpack.c.l.b16 %v509
      %v1493 = vunpack.c.h.b16 %v509
      %v1494 = vunpack.c.l.b16 %v510
      %v1495 = vunpack.c.h.b16 %v510
      %v1496 = vunpack.c.l.b16 %v511
      %v1497 = vunpack.c.h.b16 %v511
      %v1498 = vunpack.c.l.b16 %v512
      %v1499 = vunpack.c.h.b16 %v512
      %v1500 = vunpack.c.l.b16 %v513
      %v1501 = vunpack.c.h.b16 %v513
      %v1502 = vunpack.c.l.b16 %v514
      %v1503 = vunpack.c.h.b16 %v514
      %v1504 = vunpack.c.l.b16 %v515
      %v1505 = vunpack.c.h.b16 %v515
      %v1506 = vunpack.c.l.b16 %v516
      %v1507 = vunpack.c.h.b16 %v516
      %v1508 = vunpack.c.l.b16 %v517
      %v1509 = vunpack.c.h.b16 %v517
      %v1510 = vunpack.c.l.b16 %v518
      %v1511 = vunpack.c.h.b16 %v518
      %v1512 = vunpack.c.l.b16 %v519
      %v1513 = vunpack.c.h.b16 %v519
      %v1514 = vunpack.c.l.b16 %v520
      %v1515 = vunpack.c.h.b16 %v520
      %v1516 = vunpack.c.l.b16 %v521
      %v1517 = vunpack.c.h.b16 %v521
      %v1518 = vunpack.c.l.b16 %v522
      %v1519 = vunpack.c.h.b16 %v522
      %v1520 = vunpack.c.l.b16 %v523
      %v1521 = vunpack.c.h.b16 %v523
      %v1522 = vunpack.c.l.b16 %v524
      %v1523 = vunpack.c.h.b16 %v524
      %v1524 = vunpack.c.l.b16 %v525
      %v1525 = vunpack.c.h.b16 %v525
      %v1526 = vunpack.c.l.b16 %v526
      %v1527 = vunpack.c.h.b16 %v526
      %v1528 = vunpack.c.l.b16 %v527
      %v1529 = vunpack.c.h.b16 %v527
      %v1530 = vunpack.c.l.b16 %v528
      %v1531 = vunpack.c.h.b16 %v528
      %v1532 = vunpack.c.l.b16 %v529
      %v1533 = vunpack.c.h.b16 %v529
      %v1534 = vunpack.c.l.b16 %v530
      %v1535 = vunpack.c.h.b16 %v530
      %v1536 = vunpack.c.l.b16 %v531
      %v1537 = vunpack.c.h.b16 %v531
      %v1538 = vunpack.c.l.b16 %v532
      %v1539 = vunpack.c.h.b16 %v532
      %v1540 = vunpack.c.l.b16 %v533
      %v1541 = vunpack.c.h.b16 %v533
      %v1542 = vunpack.c.l.b16 %v534
      %v1543 = vunpack.c.h.b16 %v534
      %v1544 = vunpack.c.l.b16 %v535
      %v1545 = vunpack.c.h.b16 %v535
      %v1546 = vunpack.c.l.b16 %v536
      %v1547 = vunpack.c.h.b16 %v536
      %v1548 = vunpack.c.l.b16 %v537
      %v1549 = vunpack.c.h.b16 %v537
      %v1550 = vunpack.c.l.b16 %v538
      %v1551 = vunpack.c.h.b16 %v538
      %v1552 = vunpack.c.l.b16 %v539
      %v1553 = vunpack.c.h.b16 %v539
      %v1554 = vunpack.c.l.b16 %v540
      %v1555 = vunpack.c.h.b16 %v540
      %v1556 = vunpack.c.l.b16 %v541
      %v1557 = vunpack.c.h.b16 %v541
      %v1558 = vunpack.c.l.b16 %v542
      %v1559 = vunpack.c.h.b16 %v542
      %v1560 = vunpack.c.l.b16 %v543
      %v1561 = vunpack.c.h.b16 %v543
      %v1562 = vunpack.c.l.b16 %v544
      %v1563 = vunpack.c.h.b16 %v544
      %v1564 = vunpack.c.l.b16 %v545
      %v1565 = vunpack.c.h.b16 %v545
      %v1566 = vunpack.c.l.b16 %v546
      %v1567 = vunpack.c.h.b16 %v546
      %v1568 = vunpack.c.l.b16 %v547
      %v1569 = vunpack.c.h.b16 %v547
      %v1570 = vunpack.c.l.b16 %v548
      %v1571 = vunpack.c.h.b16 %v548
      %v1572 = vunpack.c.l.b16 %v549
      %v1573 = vunpack.c.h.b16 %v549
      %v1574 = vunpack.c.l.b16 %v550
      %v1575 = vunpack.c.h.b16 %v550
      %v1576 = vunpack.c.l.b16 %v551
      %v1577 = vunpack.c.h.b16 %v551
      %v1578 = vunpack.c.l.b16 %v552
      %v1579 = vunpack.c.h.b16 %v552
      %v1580 = vunpack.c.l.b16 %v553
      %v1581 = vunpack.c.h.b16 %v553
      %v1582 = vunpack.c.l.b16 %v554
      %v1583 = vunpack.c.h.b16 %v554
      %v1584 = vunpack.c.l.b16 %v555
      %v1585 = vunpack.c.h.b16 %v555
      %v1586 = vunpack.c.l.b16 %v556
      %v1587 = vunpack.c.h.b16 %v556
      %v1588 = vunpack.c.l.b16 %v557
      %v1589 = vunpack.c.h.b16 %v557
      %v1590 = vunpack.c.l.b16 %v558
      %v1591 = vunpack.c.h.b16 %v558
      %v1592 = vunpack.c.l.b16 %v559
      %v1593 = vunpack.c.h.b16 %v559
      %v1594 = vunpack.c.l.b16 %v560
      %v1595 = vunpack.c.h.b16 %v560
      %v1596 = vunpack.c.l.b16 %v561
      %v1597 = vunpack.c.h.b16 %v561
      %v1598 = vunpack.c.l.b16 %v562
      %v1599 = vunpack.c.h.b16 %v562
      %v1600 = vunpack.c.l.b16 %v563
      %v1601 = vunpack.c.h.b16 %v563
      %v1602 = vunpack.c.l.b16 %v564
      %v1603 = vunpack.c.h.b16 %v564
      %v1604 = vunpack.c.l.b16 %v565
      %v1605 = vunpack.c.h.b16 %v565
      %v1606 = vunpack.c.l.b16 %v566
      %v1607 = vunpack.c.h.b16 %v566
      %v1608 = vunpack.c.l.b16 %v567
      %v1609 = vunpack.c.h.b16 %v567
      %v1610 = vunpack.c.l.b16 %v568
      %v1611 = vunpack.c.h.b16 %v568
      %v1612 = vunpack.c.l.b16 %v569
      %v1613 = vunpack.c.h.b16 %v569
      %v1614 = vunpack.c.l.b16 %v570
      %v1615 = vunpack.c.h.b16 %v570
      %v1616 = vunpack.c.l.b16 %v571
      %v1617 = vunpack.c.h.b16 %v571
      %v1618 = vunpack.c.l.b16 %v572
      %v1619 = vunpack.c.h.b16 %v572
      %v1620 = vunpack.c.l.b16 %v573
      %v1621 = vunpack.c.h.b16 %v573
      %v1622 = vunpack.c.l.b16 %v574
      %v1623 = vunpack.c.h.b16 %v574
      %v1624 = vunpack.c.l.b16 %v575
      %v1625 = vunpack.c.h.b16 %v575
      %v1626 = vunpack.c.l.b16 %v576
      %v1627 = vunpack.c.h.b16 %v576
      %v1628 = vunpack.c.l.b16 %v577
      %v1629 = vunpack.c.h.b16 %v577
      %v1630 = vunpack.c.l.b16 %v578
      %v1631 = vunpack.c.h.b16 %v578
      %v1632 = vunpack.c.l.b16 %v579
      %v1633 = vunpack.c.h.b16 %v579
      %v1634 = vunpack.c.l.b16 %v580
      %v1635 = vunpack.c.h.b16 %v580
      %v1636 = vunpack.c.l.b16 %v581
      %v1637 = vunpack.c.h.b16 %v581
      %v1638 = vunpack.c.l.b16 %v582
      %v1639 = vunpack.c.h.b16 %v582
      %v1640 = vunpack.c.l.b16 %v583
      %v1641 = vunpack.c.h.b16 %v583
      %v1642 = vunpack.c.l.b16 %v584
      %v1643 = vunpack.c.h.b16 %v584
      %v1644 = vunpack.c.l.b16 %v585
      %v1645 = vunpack.c.h.b16 %v585
      %v1646 = vunpack.c.l.b16 %v586
      %v1647 = vunpack.c.h.b16 %v586
      %v1648 = vunpack.c.l.b16 %v587
      %v1649 = vunpack.c.h.b16 %v587
      %v1650 = vunpack.c.l.b16 %v588
      %v1651 = vunpack.c.h.b16 %v588
      %v1652 = vunpack.c.l.b16 %v589
      %v1653 = vunpack.c.h.b16 %v589
      %v1654 = vunpack.c.l.b16 %v590
      %v1655 = vunpack.c.h.b16 %v590
      %v1656 = vunpack.c.l.b16 %v591
      %v1657 = vunpack.c.h.b16 %v591
      %v1658 = vunpack.c.l.b16 %v592
      %v1659 = vunpack.c.h.b16 %v592
      %v1660 = vunpack.c.l.b16 %v593
      %v1661 = vunpack.c.h.b16 %v593
      %v1662 = vunpack.c.l.b16 %v594
      %v1663 = vunpack.c.h.b16 %v594
      %v1664 = vunpack.c.l.b16 %v595
      %v1665 = vunpack.c.h.b16 %v595
      %v1666 = vunpack.c.l.b16 %v596
      %v1667 = vunpack.c.h.b16 %v596
      %v1668 = vunpack.c.l.b16 %v597
      %v1669 = vunpack.c.h.b16 %v597
      %v1670 = vunpack.c.l.b16 %v598
      %v1671 = vunpack.c.h.b16 %v598
      %v1672 = vunpack.c.l.b16 %v599
      %v1673 = vunpack.c.h.b16 %v599
      %v1674 = vunpack.c.l.b16 %v600
      %v1675 = vunpack.c.h.b16 %v600
      %v1676 = vunpack.c.l.b16 %v601
      %v1677 = vunpack.c.h.b16 %v601
      %v1678 = vunpack.c.l.b16 %v602
      %v1679 = vunpack.c.h.b16 %v602
      %v1680 = vunpack.c.l.b16 %v603
      %v1681 = vunpack.c.h.b16 %v603
      %v1682 = vunpack.c.l.b16 %v604
      %v1683 = vunpack.c.h.b16 %v604
      %v1684 = vunpack.c.l.b16 %v605
      %v1685 = vunpack.c.h.b16 %v605
      %v1686 = vunpack.c.l.b16 %v606
      %v1687 = vunpack.c.h.b16 %v606
      %v1688 = vunpack.c.l.b16 %v607
      %v1689 = vunpack.c.h.b16 %v607
      %v1690 = vunpack.c.l.b16 %v608
      %v1691 = vunpack.c.h.b16 %v608
      %v1692 = vunpack.c.l.b16 %v609
      %v1693 = vunpack.c.h.b16 %v609
      %v1694 = vunpack.c.l.b16 %v610
      %v1695 = vunpack.c.h.b16 %v610
      %v1696 = vunpack.c.l.b16 %v611
      %v1697 = vunpack.c.h.b16 %v611
      %v1698 = vunpack.c.l.b16 %v612
      %v1699 = vunpack.c.h.b16 %v612
      %v1700 = vunpack.c.l.b16 %v613
      %v1701 = vunpack.c.h.b16 %v613
      %v1702 = vunpack.c.l.b16 %v614
      %v1703 = vunpack.c.h.b16 %v614
      %v1704 = vunpack.c.l.b16 %v615
      %v1705 = vunpack.c.h.b16 %v615
      %v1706 = vunpack.c.l.b16 %v616
      %v1707 = vunpack.c.h.b16 %v616
      %v1708 = vunpack.c.l.b16 %v617
      %v1709 = vunpack.c.h.b16 %v617
      %v1710 = vunpack.c.l.b16 %v618
      %v1711 = vunpack.c.h.b16 %v618
      %v1712 = vunpack.c.l.b16 %v619
      %v1713 = vunpack.c.h.b16 %v619
      %v1714 = vunpack.c.l.b16 %v620
      %v1715 = vunpack.c.h.b16 %v620
      %v1716 = vunpack.c.l.b16 %v621
      %v1717 = vunpack.c.h.b16 %v621
      %v1718 = vunpack.c.l.b16 %v622
      %v1719 = vunpack.c.h.b16 %v622
      %v1720 = vunpack.c.l.b16 %v623
      %v1721 = vunpack.c.h.b16 %v623
      %v1722 = vunpack.c.l.b16 %v624
      %v1723 = vunpack.c.h.b16 %v624
      %v1724 = vunpack.c.l.b16 %v625
      %v1725 = vunpack.c.h.b16 %v625
      %v1726 = vunpack.c.l.b16 %v626
      %v1727 = vunpack.c.h.b16 %v626
      %v1728 = vunpack.c.l.b16 %v627
      %v1729 = vunpack.c.h.b16 %v627
      %v1730 = vunpack.c.l.b16 %v628
      %v1731 = vunpack.c.h.b16 %v628
      %v1732 = vunpack.c.l.b16 %v629
      %v1733 = vunpack.c.h.b16 %v629
      %v1734 = vunpack.c.l.b16 %v630
      %v1735 = vunpack.c.h.b16 %v630
      %v1736 = vunpack.c.l.b16 %v631
      %v1737 = vunpack.c.h.b16 %v631
      %v1738 = vunpack.c.l.b16 %v632
      %v1739 = vunpack.c.h.b16 %v632
      %v1740 = vunpack.c.l.b16 %v633
      %v1741 = vunpack.c.h.b16 %v633
      %v1742 = vunpack.c.l.b16 %v634
      %v1743 = vunpack.c.h.b16 %v634
      %v1744 = vunpack.c.l.b16 %v635
      %v1745 = vunpack.c.h.b16 %v635
      %v1746 = vunpack.c.l.b16 %v636
      %v1747 = vunpack.c.h.b16 %v636
      %v1748 = vunpack.c.l.b16 %v637
      %v1749 = vunpack.c.h.b16 %v637
      %v1750 = vunpack.c.l.b16 %v638
      %v1751 = vunpack.c.h.b16 %v638
      %v1752 = vunpack.c.l.b16 %v639
      %v1753 = vunpack.c.h.b16 %v639
      %v1754 = vunpack.c.l.b16 %v640
      %v1755 = vunpack.c.h.b16 %v640
      %v1756 = vunpack.c.l.b16 %v641
      %v1757 = vunpack.c.h.b16 %v641
      %v1758 = vunpack.c.l.b16 %v642
      %v1759 = vunpack.c.h.b16 %v642
      %v1760 = vunpack.c.l.b16 %v643
      %v1761 = vunpack.c.h.b16 %v643
      %v1762 = vunpack.c.l.b16 %v644
      %v1763 = vunpack.c.h.b16 %v644
      %v1764 = vunpack.c.l.b16 %v645
      %v1765 = vunpack.c.h.b16 %v645
      %v1766 = vunpack.c.l.b16 %v646
      %v1767 = vunpack.c.h.b16 %v646
      %v1768 = vunpack.c.l.b16 %v647
      %v1769 = vunpack.c.h.b16 %v647
      %v1770 = vunpack.c.l.b16 %v648
      %v1771 = vunpack.c.h.b16 %v648
      %v1772 = vunpack.c.l.b16 %v649
      %v1773 = vunpack.c.h.b16 %v649
      %v1774 = vunpack.c.l.b16 %v650
      %v1775 = vunpack.c.h.b16 %v650
      %v1776 = vunpack.c.l.b16 %v651
      %v1777 = vunpack.c.h.b16 %v651
      %v1778 = vunpack.c.l.b16 %v652
      %v1779 = vunpack.c.h.b16 %v652
      %v1780 = vunpack.c.l.b16 %v653
      %v1781 = vunpack.c.h.b16 %v653
      %v1782 = vunpack.c.l.b16 %v654
      %v1783 = vunpack.c.h.b16 %v654
      %v1784 = vunpack.c.l.b16 %v655
      %v1785 = vunpack.c.h.b16 %v655
      %v1786 = vunpack.c.l.b16 %v656
      %v1787 = vunpack.c.h.b16 %v656
      %v1788 = vunpack.c.l.b16 %v657
      %v1789 = vunpack.c.h.b16 %v657
      %v1790 = vunpack.c.l.b16 %v658
      %v1791 = vunpack.c.h.b16 %v658
      %v1792 = vunpack.c.l.b16 %v659
      %v1793 = vunpack.c.h.b16 %v659
      %v1794 = vunpack.c.l.b16 %v660
      %v1795 = vunpack.c.h.b16 %v660
      %v1796 = vunpack.c.l.b16 %v661
      %v1797 = vunpack.c.h.b16 %v661
      %v1798 = vunpack.c.l.b16 %v662
      %v1799 = vunpack.c.h.b16 %v662
      %v1800 = vunpack.c.l.b16 %v663
      %v1801 = vunpack.c.h.b16 %v663
      %v1802 = vunpack.c.l.b16 %v664
      %v1803 = vunpack.c.h.b16 %v664
      %v1804 = vunpack.c.l.b16 %v665
      %v1805 = vunpack.c.h.b16 %v665
      %v1806 = vunpack.c.l.b16 %v666
      %v1807 = vunpack.c.h.b16 %v666
      %v1808 = vunpack.c.l.b16 %v667
      %v1809 = vunpack.c.h.b16 %v667
      %v1810 = vunpack.c.l.b16 %v668
      %v1811 = vunpack.c.h.b16 %v668
      %v1812 = vunpack.c.l.b16 %v669
      %v1813 = vunpack.c.h.b16 %v669
      %v1814 = vunpack.c.l.b16 %v670
      %v1815 = vunpack.c.h.b16 %v670
      %v1816 = vunpack.c.l.b16 %v671
      %v1817 = vunpack.c.h.b16 %v671
      %v1818 = vunpack.c.l.b16 %v672
      %v1819 = vunpack.c.h.b16 %v672
      %v1820 = vunpack.c.l.b16 %v673
      %v1821 = vunpack.c.h.b16 %v673
      %v1822 = vunpack.c.l.b16 %v674
      %v1823 = vunpack.c.h.b16 %v674
      %v1824 = vunpack.c.l.b16 %v675
      %v1825 = vunpack.c.h.b16 %v675
      %v1826 = vunpack.c.l.b16 %v676
      %v1827 = vunpack.c.h.b16 %v676
      %v1828 = vunpack.c.l.b16 %v677
      %v1829 = vunpack.c.h.b16 %v677
      %v1830 = vpack.c.b16 %v1326, %v1318
      %v1831 = vpack.c.b16 %v1327, %v1319
      %v1832 = vpack.c.b16 %v1328, %v1320
      %v1833 = vpack.c.b16 %v1329, %v1321
      %v1834 = vpack.c.b16 %v1330, %v1322
      %v1835 = vpack.c.b16 %v1331, %v1323
      %v1836 = vpack.c.b16 %v1332, %v1324
      %v1837 = vpack.c.b16 %v1333, %v1325
      %v1838 = vpack.c.b16 %v1342, %v1334
      %v1839 = vpack.c.b16 %v1343, %v1335
      %v1840 = vpack.c.b16 %v1344, %v1336
      %v1841 = vpack.c.b16 %v1345, %v1337
      %v1842 = vpack.c.b16 %v1346, %v1338
      %v1843 = vpack.c.b16 %v1347, %v1339
      %v1844 = vpack.c.b16 %v1348, %v1340
      %v1845 = vpack.c.b16 %v1349, %v1341
      %v1846 = vpack.c.b16 %v1358, %v1350
      %v1847 = vpack.c.b16 %v1359, %v1351
      %v1848 = vpack.c.b16 %v1360, %v1352
      %v1849 = vpack.c.b16 %v1361, %v1353
      %v1850 = vpack.c.b16 %v1362, %v1354
      %v1851 = vpack.c.b16 %v1363, %v1355
      %v1852 = vpack.c.b16 %v1364, %v1356
      %v1853 = vpack.c.b16 %v1365, %v1357
      %v1854 = vpack.c.b16 %v1374, %v1366
      %v1855 = vpack.c.b16 %v1375, %v1367
      %v1856 = vpack.c.b16 %v1376, %v1368
      %v1857 = vpack.c.b16 %v1377, %v1369
      %v1858 = vpack.c.b16 %v1378, %v1370
      %v1859 = vpack.c.b16 %v1379, %v1371
      %v1860 = vpack.c.b16 %v1380, %v1372
      %v1861 = vpack.c.b16 %v1381, %v1373
      %v1862 = vpack.c.b16 %v1390, %v1382
      %v1863 = vpack.c.b16 %v1391, %v1383
      %v1864 = vpack.c.b16 %v1392, %v1384
      %v1865 = vpack.c.b16 %v1393, %v1385
      %v1866 = vpack.c.b16 %v1394, %v1386
      %v1867 = vpack.c.b16 %v1395, %v1387
      %v1868 = vpack.c.b16 %v1396, %v1388
      %v1869 = vpack.c.b16 %v1397, %v1389
      %v1870 = vpack.c.b16 %v1406, %v1398
      %v1871 = vpack.c.b16 %v1407, %v1399
      %v1872 = vpack.c.b16 %v1408, %v1400
      %v1873 = vpack.c.b16 %v1409, %v1401
      %v1874 = vpack.c.b16 %v1410, %v1402
      %v1875 = vpack.c.b16 %v1411, %v1403
      %v1876 = vpack.c.b16 %v1412, %v1404
      %v1877 = vpack.c.b16 %v1413, %v1405
      %v1878 = vpack.c.b16 %v1422, %v1414
      %v1879 = vpack.c.b16 %v1423, %v1415
      %v1880 = vpack.c.b16 %v1424, %v1416
      %v1881 = vpack.c.b16 %v1425, %v1417
      %v1882 = vpack.c.b16 %v1426, %v1418
      %v1883 = vpack.c.b16 %v1427, %v1419
      %v1884 = vpack.c.b16 %v1428, %v1420
      %v1885 = vpack.c.b16 %v1429, %v1421
      %v1886 = vpack.c.b16 %v1438, %v1430
      %v1887 = vpack.c.b16 %v1439, %v1431
      %v1888 = vpack.c.b16 %v1440, %v1432
      %v1889 = vpack.c.b16 %v1441, %v1433
      %v1890 = vpack.c.b16 %v1442, %v1434
      %v1891 = vpack.c.b16 %v1443, %v1435
      %v1892 = vpack.c.b16 %v1444, %v1436
      %v1893 = vpack.c.b16 %v1445, %v1437
      %v1894 = vpack.c.b16 %v1454, %v1446
      %v1895 = vpack.c.b16 %v1455, %v1447
      %v1896 = vpack.c.b16 %v1456, %v1448
      %v1897 = vpack.c.b16 %v1457, %v1449
      %v1898 = vpack.c.b16 %v1458, %v1450
      %v1899 = vpack.c.b16 %v1459, %v1451
      %v1900 = vpack.c.b16 %v1460, %v1452
      %v1901 = vpack.c.b16 %v1461, %v1453
      %v1902 = vpack.c.b16 %v1470, %v1462
      %v1903 = vpack.c.b16 %v1471, %v1463
      %v1904 = vpack.c.b16 %v1472, %v1464
      %v1905 = vpack.c.b16 %v1473, %v1465
      %v1906 = vpack.c.b16 %v1474, %v1466
      %v1907 = vpack.c.b16 %v1475, %v1467
      %v1908 = vpack.c.b16 %v1476, %v1468
      %v1909 = vpack.c.b16 %v1477, %v1469
      %v1910 = vpack.c.b16 %v1486, %v1478
      %v1911 = vpack.c.b16 %v1487, %v1479
      %v1912 = vpack.c.b16 %v1488, %v1480
      %v1913 = vpack.c.b16 %v1489, %v1481
      %v1914 = vpack.c.b16 %v1490, %v1482
      %v1915 = vpack.c.b16 %v1491, %v1483
      %v1916 = vpack.c.b16 %v1492, %v1484
      %v1917 = vpack.c.b16 %v1493, %v1485
      %v1918 = vpack.c.b16 %v1502, %v1494
      %v1919 = vpack.c.b16 %v1503, %v1495
      %v1920 = vpack.c.b16 %v1504, %v1496
      %v1921 = vpack.c.b16 %v1505, %v1497
      %v1922 = vpack.c.b16 %v1506, %v1498
      %v1923 = vpack.c.b16 %v1507, %v1499
      %v1924 = vpack.c.b16 %v1508, %v1500
      %v1925 = vpack.c.b16 %v1509, %v1501
      %v1926 = vpack.c.b16 %v1518, %v1510
      %v1927 = vpack.c.b16 %v1519, %v1511
      %v1928 = vpack.c.b16 %v1520, %v1512
      %v1929 = vpack.c.b16 %v1521, %v1513
      %v1930 = vpack.c.b16 %v1522, %v1514
      %v1931 = vpack.c.b16 %v1523, %v1515
      %v1932 = vpack.c.b16 %v1524, %v1516
      %v1933 = vpack.c.b16 %v1525, %v1517
      %v1934 = vpack.c.b16 %v1534, %v1526
      %v1935 = vpack.c.b16 %v1535, %v1527
      %v1936 = vpack.c.b16 %v1536, %v1528
      %v1937 = vpack.c.b16 %v1537, %v1529
      %v1938 = vpack.c.b16 %v1538, %v1530
      %v1939 = vpack.c.b16 %v1539, %v1531
      %v1940 = vpack.c.b16 %v1540, %v1532
      %v1941 = vpack.c.b16 %v1541, %v1533
      %v1942 = vpack.c.b16 %v1550, %v1542
      %v1943 = vpack.c.b16 %v1551, %v1543
      %v1944 = vpack.c.b16 %v1552, %v1544
      %v1945 = vpack.c.b16 %v1553, %v1545
      %v1946 = vpack.c.b16 %v1554, %v1546
      %v1947 = vpack.c.b16 %v1555, %v1547
      %v1948 = vpack.c.b16 %v1556, %v1548
      %v1949 = vpack.c.b16 %v1557, %v1549
      %v1950 = vpack.c.b16 %v1566, %v1558
      %v1951 = vpack.c.b16 %v1567, %v1559
      %v1952 = vpack.c.b16 %v1568, %v1560
      %v1953 = vpack.c.b16 %v1569, %v1561
      %v1954 = vpack.c.b16 %v1570, %v1562
      %v1955 = vpack.c.b16 %v1571, %v1563
      %v1956 = vpack.c.b16 %v1572, %v1564
      %v1957 = vpack.c.b16 %v1573, %v1565
      %v1958 = vpack.c.b16 %v1582, %v1574
      %v1959 = vpack.c.b16 %v1583, %v1575
      %v1960 = vpack.c.b16 %v1584, %v1576
      %v1961 = vpack.c.b16 %v1585, %v1577
      %v1962 = vpack.c.b16 %v1586, %v1578
      %v1963 = vpack.c.b16 %v1587, %v1579
      %v1964 = vpack.c.b16 %v1588, %v1580
      %v1965 = vpack.c.b16 %v1589, %v1581
      %v1966 = vpack.c.b16 %v1598, %v1590
      %v1967 = vpack.c.b16 %v1599, %v1591
      %v1968 = vpack.c.b16 %v1600, %v1592
      %v1969 = vpack.c.b16 %v1601, %v1593
      %v1970 = vpack.c.b16 %v1602, %v1594
      %v1971 = vpack.c.b16 %v1603, %v1595
      %v1972 = vpack.c.b16 %v1604, %v1596
      %v1973 = vpack.c.b16 %v1605, %v1597
      %v1974 = vpack.c.b16 %v1614, %v1606
      %v1975 = vpack.c.b16 %v1615, %v1607
      %v1976 = vpack.c.b16 %v1616, %v1608
      %v1977 = vpack.c.b16 %v1617, %v1609
      %v1978 = vpack.c.b16 %v1618, %v1610
      %v1979 = vpack.c.b16 %v1619, %v1611
      %v1980 = vpack.c.b16 %v1620, %v1612
      %v1981 = vpack.c.b16 %v1621, %v1613
      %v1982 = vpack.c.b16 %v1630, %v1622
      %v1983 = vpack.c.b16 %v1631, %v1623
      %v1984 = vpack.c.b16 %v1632, %v1624
      %v1985 = vpack.c.b16 %v1633, %v1625
      %v1986 = vpack.c.b16 %v1634, %v1626
      %v1987 = vpack.c.b16 %v1635, %v1627
      %v1988 = vpack.c.b16 %v1636, %v1628
      %v1989 = vpack.c.b16 %v1637, %v1629
      %v1990 = vpack.c.b16 %v1646, %v1638
      %v1991 = vpack.c.b16 %v1647, %v1639
      %v1992 = vpack.c.b16 %v1648, %v1640
      %v1993 = vpack.c.b16 %v1649, %v1641
      %v1994 = vpack.c.b16 %v1650, %v1642
      %v1995 = vpack.c.b16 %v1651, %v1643
      %v1996 = vpack.c.b16 %v1652, %v1644
      %v1997 = vpack.c.b16 %v1653, %v1645
      %v1998 = vpack.c.b16 %v1662, %v1654
      %v1999 = vpack.c.b16 %v1663, %v1655
      %v2000 = vpack.c.b16 %v1664, %v1656
      %v2001 = vpack.c.b16 %v1665, %v1657
      %v2002 = vpack.c.b16 %v1666, %v1658
      %v2003 = vpack.c.b16 %v1667, %v1659
      %v2004 = vpack.c.b16 %v1668, %v1660
      %v2005 = vpack.c.b16 %v1669, %v1661
      %v2006 = vpack.c.b16 %v1678, %v1670
      %v2007 = vpack.c.b16 %v1679, %v1671
      %v2008 = vpack.c.b16 %v1680, %v1672
      %v2009 = vpack.c.b16 %v1681, %v1673
      %v2010 = vpack.c.b16 %v1682, %v1674
      %v2011 = vpack.c.b16 %v1683, %v1675
      %v2012 = vpack.c.b16 %v1684, %v1676
      %v2013 = vpack.c.b16 %v1685, %v1677
      %v2014 = vpack.c.b16 %v1694, %v1686
      %v2015 = vpack.c.b16 %v1695, %v1687
      %v2016 = vpack.c.b16 %v1696, %v1688
      %v2017 = vpack.c.b16 %v1697, %v1689
      %v2018 = vpack.c.b16 %v1698, %v1690
      %v2019 = vpack.c.b16 %v1699, %v1691
      %v2020 = vpack.c.b16 %v1700, %v1692
      %v2021 = vpack.c.b16 %v1701, %v1693
      %v2022 = vpack.c.b16 %v1710, %v1702
      %v2023 = vpack.c.b16 %v1711, %v1703
      %v2024 = vpack.c.b16 %v1712, %v1704
      %v2025 = vpack.c.b16 %v1713, %v1705
      %v2026 = vpack.c.b16 %v1714, %v1706
      %v2027 = vpack.c.b16 %v1715, %v1707
      %v2028 = vpack.c.b16 %v1716, %v1708
      %v2029 = vpack.c.b16 %v1717, %v1709
      %v2030 = vpack.c.b16 %v1726, %v1718
      %v2031 = vpack.c.b16 %v1727, %v1719
      %v2032 = vpack.c.b16 %v1728, %v1720
      %v2033 = vpack.c.b16 %v1729, %v1721
      %v2034 = vpack.c.b16 %v1730, %v1722
      %v2035 = vpack.c.b16 %v1731, %v1723
      %v2036 = vpack.c.b16 %v1732, %v1724
      %v2037 = vpack.c.b16 %v1733, %v1725
      %v2038 = vpack.c.b16 %v1742, %v1734
      %v2039 = vpack.c.b16 %v1743, %v1735
      %v2040 = vpack.c.b16 %v1744, %v1736
      %v2041 = vpack.c.b16 %v1745, %v1737
      %v2042 = vpack.c.b16 %v1746, %v1738
      %v2043 = vpack.c.b16 %v1747, %v1739
      %v2044 = vpack.c.b16 %v1748, %v1740
      %v2045 = vpack.c.b16 %v1749, %v1741
      %v2046 = vpack.c.b16 %v1758, %v1750
      %v2047 = vpack.c.b16 %v1759, %v1751
      %v2048 = vpack.c.b16 %v1760, %v1752
      %v2049 = vpack.c.b16 %v1761, %v1753
      %v2050 = vpack.c.b16 %v1762, %v1754
      %v2051 = vpack.c.b16 %v1763, %v1755
      %v2052 = vpack.c.b16 %v1764, %v1756
      %v2053 = vpack.c.b16 %v1765, %v1757
      %v2054 = vpack.c.b16 %v1774, %v1766
      %v2055 = vpack.c.b16 %v1775, %v1767
      %v2056 = vpack.c.b16 %v1776, %v1768
      %v2057 = vpack.c.b16 %v1777, %v1769
      %v2058 = vpack.c.b16 %v1778, %v1770
      %v2059 = vpack.c.b16 %v1779, %v1771
      %v2060 = vpack.c.b16 %v1780, %v1772
      %v2061 = vpack.c.b16 %v1781, %v1773
      %v2062 = vpack.c.b16 %v1790, %v1782
      %v2063 = vpack.c.b16 %v1791, %v1783
      %v2064 = vpack.c.b16 %v1792, %v1784
      %v2065 = vpack.c.b16 %v1793, %v1785
      %v2066 = vpack.c.b16 %v1794, %v1786
      %v2067 = vpack.c.b16 %v1795, %v1787
      %v2068 = vpack.c.b16 %v1796, %v1788
      %v2069 = vpack.c.b16 %v1797, %v1789
      %v2070 = vpack.c.b16 %v1806, %v1798
      %v2071 = vpack.c.b16 %v1807, %v1799
      %v2072 = vpack.c.b16 %v1808, %v1800
      %v2073 = vpack.c.b16 %v1809, %v1801
      %v2074 = vpack.c.b16 %v1810, %v1802
      %v2075 = vpack.c.b16 %v1811, %v1803
      %v2076 = vpack.c.b16 %v1812, %v1804
      %v2077 = vpack.c.b16 %v1813, %v1805
      %v2078 = vpack.c.b16 %v1822, %v1814
      %v2079 = vpack.c.b16 %v1823, %v1815
      %v2080 = vpack.c.b16 %v1824, %v1816
      %v2081 = vpack.c.b16 %v1825, %v1817
      %v2082 = vpack.c.b16 %v1826, %v1818
      %v2083 = vpack.c.b16 %v1827, %v1819
      %v2084 = vpack.c.b16 %v1828, %v1820
      %v2085 = vpack.c.b16 %v1829, %v1821
      %2342 = vmatprep.subr.bf16.mxu0 0
      %2343 = vmatpush1.bf16.msra.mxu0 %v358
      %2344 = vmatprep.subr.bf16.mxu0 0
      %2345 = vmatpush1.bf16.msra.mxu0 %v359
      %2346 = vmatprep.subr.bf16.mxu0 0
      %2347 = vmatpush1.bf16.msra.mxu0 %v360
      %2348 = vmatprep.subr.bf16.mxu0 0
      %2349 = vmatpush1.bf16.msra.mxu0 %v361
      %2350 = vmatprep.subr.bf16.mxu0 0
      %2351 = vmatpush1.bf16.msra.mxu0 %v362
      %2352 = vmatprep.subr.bf16.mxu0 0
      %2353 = vmatpush1.bf16.msra.mxu0 %v363
      %2354 = vmatprep.subr.bf16.mxu0 0
      %2355 = vmatpush1.bf16.msra.mxu0 %v364
      %2356 = vmatprep.subr.bf16.mxu0 0
      %2357 = vmatpush1.bf16.msra.mxu0 %v365
      %2358 = vmatprep.subr.bf16.mxu0 0
      %2359 = vmatpush1.bf16.msra.mxu0 %v366
      %2360 = vmatprep.subr.bf16.mxu0 0
      %2361 = vmatpush1.bf16.msra.mxu0 %v367
      %2362 = vmatprep.subr.bf16.mxu0 0
      %2363 = vmatpush1.bf16.msra.mxu0 %v368
      %2364 = vmatprep.subr.bf16.mxu0 0
      %2365 = vmatpush1.bf16.msra.mxu0 %v369
      %2366 = vmatprep.subr.bf16.mxu0 0
      %2367 = vmatpush1.bf16.msra.mxu0 %v370
      %2368 = vmatprep.subr.bf16.mxu0 0
      %2369 = vmatpush1.bf16.msra.mxu0 %v371
      %2370 = vmatprep.subr.bf16.mxu0 0
      %2371 = vmatpush1.bf16.msra.mxu0 %v372
      %2372 = vmatprep.subr.bf16.mxu0 0
      %2373 = vmatpush1.bf16.msra.mxu0 %v373
      %2374 = vmatprep.mubr.bf16.mxu0 %v1831
      %2375 = vmatmul.mubr.bf16.gmra.mrb[0].mxu0 %v1830
      %v2376 = vpop.f32.mrb[0].mxu0
      %v2377 = vadd.f32 %v745, %v2376
      %v2378 = vpop.f32.mrb[0].mxu0
      %v2379 = vpop.f32.mrb[0].mxu0
      %v2380 = vadd.f32 %v750, %v2379
      %v2381 = vpop.f32.mrb[0].mxu0
      %2382 = vmatprep.mubr.bf16.mxu0 %v1839
      %2383 = vmatmul.mubr.bf16.gmra.mrb[0].mxu0 %v1838
      %v2384 = vpop.f32.mrb[0].mxu0
      %v2385 = vadd.f32 %v755, %v2384
      %v2386 = vpop.f32.mrb[0].mxu0
      %v2387 = vpop.f32.mrb[0].mxu0
      %v2388 = vadd.f32 %v760, %v2387
      %v2389 = vpop.f32.mrb[0].mxu0
      %2390 = vmatprep.mubr.bf16.mxu0 %v1847
      %2391 = vmatmul.mubr.bf16.gmra.mrb[0].mxu0 %v1846
      %v2392 = vpop.f32.mrb[0].mxu0
      %v2393 = vadd.f32 %v765, %v2392
      %v2394 = vpop.f32.mrb[0].mxu0
      %v2395 = vpop.f32.mrb[0].mxu0
      %v2396 = vadd.f32 %v770, %v2395
      %v2397 = vpop.f32.mrb[0].mxu0
      %2398 = vmatprep.mubr.bf16.mxu0 %v1855
      %2399 = vmatmul.mubr.bf16.gmra.mrb[0].mxu0 %v1854
      %v2400 = vpop.f32.mrb[0].mxu0
      %v2401 = vadd.f32 %v775, %v2400
      %v2402 = vpop.f32.mrb[0].mxu0
      %v2403 = vpop.f32.mrb[0].mxu0
      %v2404 = vadd.f32 %v780, %v2403
      %v2405 = vpop.f32.mrb[0].mxu0
      %2406 = vmatprep.mubr.bf16.mxu0 %v1863
      %2407 = vmatmul.mubr.bf16.gmra.mrb[0].mxu0 %v1862
      %v2408 = vpop.f32.mrb[0].mxu0
      %v2409 = vadd.f32 %v785, %v2408
      %v2410 = vpop.f32.mrb[0].mxu0
      %v2411 = vpop.f32.mrb[0].mxu0
      %v2412 = vadd.f32 %v790, %v2411
      %v2413 = vpop.f32.mrb[0].mxu0
      %2414 = vmatprep.mubr.bf16.mxu0 %v1871
      %2415 = vmatmul.mubr.bf16.gmra.mrb[0].mxu0 %v1870
      %v2416 = vpop.f32.mrb[0].mxu0
      %v2417 = vadd.f32 %v795, %v2416
      %v2418 = vpop.f32.mrb[0].mxu0
      %v2419 = vpop.f32.mrb[0].mxu0
      %v2420 = vadd.f32 %v800, %v2419
      %v2421 = vpop.f32.mrb[0].mxu0
      %2422 = vmatprep.mubr.bf16.mxu0 %v1879
      %2423 = vmatmul.mubr.bf16.gmra.mrb[0].mxu0 %v1878
      %v2424 = vpop.f32.mrb[0].mxu0
      %v2425 = vadd.f32 %v805, %v2424
      %v2426 = vpop.f32.mrb[0].mxu0
      %v2427 = vpop.f32.mrb[0].mxu0
      %v2428 = vadd.f32 %v810, %v2427
      %v2429 = vpop.f32.mrb[0].mxu0
      %2430 = vmatprep.mubr.bf16.mxu0 %v1887
      %2431 = vmatmul.mubr.bf16.gmra.mrb[0].mxu0 %v1886
      %v2432 = vpop.f32.mrb[0].mxu0
      %v2433 = vadd.f32 %v815, %v2432
      %v2434 = vpop.f32.mrb[0].mxu0
      %v2435 = vpop.f32.mrb[0].mxu0
      %v2436 = vadd.f32 %v820, %v2435
      %v2437 = vpop.f32.mrb[0].mxu0
      %2438 = vmatprep.mubr.bf16.mxu0 %v1895
      %2439 = vmatmul.mubr.bf16.gmra.mrb[0].mxu0 %v1894
      %v2440 = vpop.f32.mrb[0].mxu0
      %v2441 = vadd.f32 %v825, %v2440
      %v2442 = vpop.f32.mrb[0].mxu0
      %v2443 = vpop.f32.mrb[0].mxu0
      %v2444 = vadd.f32 %v830, %v2443
      %v2445 = vpop.f32.mrb[0].mxu0
      %2446 = vmatprep.mubr.bf16.mxu0 %v1903
      %2447 = vmatmul.mubr.bf16.gmra.mrb[0].mxu0 %v1902
      %v2448 = vpop.f32.mrb[0].mxu0
      %v2449 = vadd.f32 %v835, %v2448
      %v2450 = vpop.f32.mrb[0].mxu0
      %v2451 = vpop.f32.mrb[0].mxu0
      %v2452 = vadd.f32 %v840, %v2451
      %v2453 = vpop.f32.mrb[0].mxu0
      %2454 = vmatprep.mubr.bf16.mxu0 %v1911
      %2455 = vmatmul.mubr.bf16.gmra.mrb[0].mxu0 %v1910
      %v2456 = vpop.f32.mrb[0].mxu0
      %v2457 = vadd.f32 %v845, %v2456
      %v2458 = vpop.f32.mrb[0].mxu0
      %v2459 = vpop.f32.mrb[0].mxu0
      %v2460 = vadd.f32 %v850, %v2459
      %v2461 = vpop.f32.mrb[0].mxu0
      %2462 = vmatprep.mubr.bf16.mxu0 %v1919
      %2463 = vmatmul.mubr.bf16.gmra.mrb[0].mxu0 %v1918
      %v2464 = vpop.f32.mrb[0].mxu0
      %v2465 = vadd.f32 %v855, %v2464
      %v2466 = vpop.f32.mrb[0].mxu0
      %v2467 = vpop.f32.mrb[0].mxu0
      %v2468 = vadd.f32 %v860, %v2467
      %v2469 = vpop.f32.mrb[0].mxu0
      %2470 = vmatprep.mubr.bf16.mxu0 %v1927
      %2471 = vmatmul.mubr.bf16.gmra.mrb[0].mxu0 %v1926
      %v2472 = vpop.f32.mrb[0].mxu0
      %v2473 = vadd.f32 %v865, %v2472
      %v2474 = vpop.f32.mrb[0].mxu0
      %v2475 = vpop.f32.mrb[0].mxu0
      %v2476 = vadd.f32 %v870, %v2475
      %v2477 = vpop.f32.mrb[0].mxu0
      %2478 = vmatprep.mubr.bf16.mxu0 %v1935
      %2479 = vmatmul.mubr.bf16.gmra.mrb[0].mxu0 %v1934
      %v2480 = vpop.f32.mrb[0].mxu0
      %v2481 = vadd.f32 %v875, %v2480
      %v2482 = vpop.f32.mrb[0].mxu0
      %v2483 = vpop.f32.mrb[0].mxu0
      %v2484 = vadd.f32 %v880, %v2483
      %v2485 = vpop.f32.mrb[0].mxu0
      %2486 = vmatprep.mubr.bf16.mxu0 %v1943
      %2487 = vmatmul.mubr.bf16.gmra.mrb[0].mxu0 %v1942
      %v2488 = vpop.f32.mrb[0].mxu0
      %v2489 = vadd.f32 %v885, %v2488
      %v2490 = vpop.f32.mrb[0].mxu0
      %v2491 = vpop.f32.mrb[0].mxu0
      %v2492 = vadd.f32 %v890, %v2491
      %v2493 = vpop.f32.mrb[0].mxu0
      %2494 = vmatprep.mubr.bf16.mxu0 %v1951
      %2495 = vmatmul.mubr.bf16.gmra.mrb[0].mxu0 %v1950
      %v2496 = vpop.f32.mrb[0].mxu0
      %v2497 = vadd.f32 %v895, %v2496
      %v2498 = vpop.f32.mrb[0].mxu0
      %v2499 = vpop.f32.mrb[0].mxu0
      %v2500 = vadd.f32 %v900, %v2499
      %v2501 = vpop.f32.mrb[0].mxu0
      %2502 = vmatprep.mubr.bf16.mxu0 %v1959
      %2503 = vmatmul.mubr.bf16.gmra.mrb[0].mxu0 %v1958
      %v2504 = vpop.f32.mrb[0].mxu0
      %v2505 = vadd.f32 %v905, %v2504
      %v2506 = vpop.f32.mrb[0].mxu0
      %v2507 = vpop.f32.mrb[0].mxu0
      %v2508 = vadd.f32 %v910, %v2507
      %v2509 = vpop.f32.mrb[0].mxu0
      %2510 = vmatprep.mubr.bf16.mxu0 %v1967
      %2511 = vmatmul.mubr.bf16.gmra.mrb[0].mxu0 %v1966
      %v2512 = vpop.f32.mrb[0].mxu0
      %v2513 = vadd.f32 %v915, %v2512
      %v2514 = vpop.f32.mrb[0].mxu0
      %v2515 = vpop.f32.mrb[0].mxu0
      %v2516 = vadd.f32 %v920, %v2515
      %v2517 = vpop.f32.mrb[0].mxu0
      %2518 = vmatprep.mubr.bf16.mxu0 %v1975
      %2519 = vmatmul.mubr.bf16.gmra.mrb[0].mxu0 %v1974
      %v2520 = vpop.f32.mrb[0].mxu0
      %v2521 = vadd.f32 %v925, %v2520
      %v2522 = vpop.f32.mrb[0].mxu0
      %v2523 = vpop.f32.mrb[0].mxu0
      %v2524 = vadd.f32 %v930, %v2523
      %v2525 = vpop.f32.mrb[0].mxu0
      %2526 = vmatprep.mubr.bf16.mxu0 %v1983
      %2527 = vmatmul.mubr.bf16.gmra.mrb[0].mxu0 %v1982
      %v2528 = vpop.f32.mrb[0].mxu0
      %v2529 = vadd.f32 %v935, %v2528
      %v2530 = vpop.f32.mrb[0].mxu0
      %v2531 = vpop.f32.mrb[0].mxu0
      %v2532 = vadd.f32 %v940, %v2531
      %v2533 = vpop.f32.mrb[0].mxu0
      %2534 = vmatprep.mubr.bf16.mxu0 %v1991
      %2535 = vmatmul.mubr.bf16.gmra.mrb[0].mxu0 %v1990
      %v2536 = vpop.f32.mrb[0].mxu0
      %v2537 = vadd.f32 %v945, %v2536
      %v2538 = vpop.f32.mrb[0].mxu0
      %v2539 = vpop.f32.mrb[0].mxu0
      %v2540 = vadd.f32 %v950, %v2539
      %v2541 = vpop.f32.mrb[0].mxu0
      %2542 = vmatprep.mubr.bf16.mxu0 %v1999
      %2543 = vmatmul.mubr.bf16.gmra.mrb[0].mxu0 %v1998
      %v2544 = vpop.f32.mrb[0].mxu0
      %v2545 = vadd.f32 %v955, %v2544
      %v2546 = vpop.f32.mrb[0].mxu0
      %v2547 = vpop.f32.mrb[0].mxu0
      %v2548 = vadd.f32 %v960, %v2547
      %v2549 = vpop.f32.mrb[0].mxu0
      %2550 = vmatprep.mubr.bf16.mxu0 %v2007
      %2551 = vmatmul.mubr.bf16.gmra.mrb[0].mxu0 %v2006
      %v2552 = vpop.f32.mrb[0].mxu0
      %v2553 = vadd.f32 %v965, %v2552
      %v2554 = vpop.f32.mrb[0].mxu0
      %v2555 = vpop.f32.mrb[0].mxu0
      %v2556 = vadd.f32 %v970, %v2555
      %v2557 = vpop.f32.mrb[0].mxu0
      %2558 = vmatprep.mubr.bf16.mxu0 %v2015
      %2559 = vmatmul.mubr.bf16.gmra.mrb[0].mxu0 %v2014
      %v2560 = vpop.f32.mrb[0].mxu0
      %v2561 = vadd.f32 %v975, %v2560
      %v2562 = vpop.f32.mrb[0].mxu0
      %v2563 = vpop.f32.mrb[0].mxu0
      %v2564 = vadd.f32 %v980, %v2563
      %v2565 = vpop.f32.mrb[0].mxu0
      %2566 = vmatprep.mubr.bf16.mxu0 %v2023
      %2567 = vmatmul.mubr.bf16.gmra.mrb[0].mxu0 %v2022
      %v2568 = vpop.f32.mrb[0].mxu0
      %v2569 = vadd.f32 %v985, %v2568
      %v2570 = vpop.f32.mrb[0].mxu0
      %v2571 = vpop.f32.mrb[0].mxu0
      %v2572 = vadd.f32 %v990, %v2571
      %v2573 = vpop.f32.mrb[0].mxu0
      %2574 = vmatprep.mubr.bf16.mxu0 %v2031
      %2575 = vmatmul.mubr.bf16.gmra.mrb[0].mxu0 %v2030
      %v2576 = vpop.f32.mrb[0].mxu0
      %v2577 = vadd.f32 %v995, %v2576
      %v2578 = vpop.f32.mrb[0].mxu0
      %v2579 = vpop.f32.mrb[0].mxu0
      %v2580 = vadd.f32 %v1000, %v2579
      %v2581 = vpop.f32.mrb[0].mxu0
      %2582 = vmatprep.mubr.bf16.mxu0 %v2039
      %2583 = vmatmul.mubr.bf16.gmra.mrb[0].mxu0 %v2038
      %v2584 = vpop.f32.mrb[0].mxu0
      %v2585 = vadd.f32 %v1005, %v2584
      %v2586 = vpop.f32.mrb[0].mxu0
      %v2587 = vpop.f32.mrb[0].mxu0
      %v2588 = vadd.f32 %v1010, %v2587
      %v2589 = vpop.f32.mrb[0].mxu0
      %2590 = vmatprep.mubr.bf16.mxu0 %v2047
      %2591 = vmatmul.mubr.bf16.gmra.mrb[0].mxu0 %v2046
      %v2592 = vpop.f32.mrb[0].mxu0
      %v2593 = vadd.f32 %v1015, %v2592
      %v2594 = vpop.f32.mrb[0].mxu0
      %v2595 = vpop.f32.mrb[0].mxu0
      %v2596 = vadd.f32 %v1020, %v2595
      %v2597 = vpop.f32.mrb[0].mxu0
      %2598 = vmatprep.mubr.bf16.mxu0 %v2055
      %2599 = vmatmul.mubr.bf16.gmra.mrb[0].mxu0 %v2054
      %v2600 = vpop.f32.mrb[0].mxu0
      %v2601 = vadd.f32 %v1025, %v2600
      %v2602 = vpop.f32.mrb[0].mxu0
      %v2603 = vpop.f32.mrb[0].mxu0
      %v2604 = vadd.f32 %v1030, %v2603
      %v2605 = vpop.f32.mrb[0].mxu0
      %2606 = vmatprep.mubr.bf16.mxu0 %v2063
      %2607 = vmatmul.mubr.bf16.gmra.mrb[0].mxu0 %v2062
      %v2608 = vpop.f32.mrb[0].mxu0
      %v2609 = vadd.f32 %v1035, %v2608
      %v2610 = vpop.f32.mrb[0].mxu0
      %v2611 = vpop.f32.mrb[0].mxu0
      %v2612 = vadd.f32 %v1040, %v2611
      %v2613 = vpop.f32.mrb[0].mxu0
      %2614 = vmatprep.mubr.bf16.mxu0 %v2071
      %2615 = vmatmul.mubr.bf16.gmra.mrb[0].mxu0 %v2070
      %v2616 = vpop.f32.mrb[0].mxu0
      %v2617 = vadd.f32 %v1045, %v2616
      %v2618 = vpop.f32.mrb[0].mxu0
      %v2619 = vpop.f32.mrb[0].mxu0
      %v2620 = vadd.f32 %v1050, %v2619
      %v2621 = vpop.f32.mrb[0].mxu0
      %2622 = vmatprep.mubr.bf16.mxu0 %v2079
      %2623 = vmatmul.mubr.bf16.gmra.mrb[0].mxu0 %v2078
      %v2624 = vpop.f32.mrb[0].mxu0
      %v2625 = vadd.f32 %v1055, %v2624
      %v2626 = vpop.f32.mrb[0].mxu0
      %v2627 = vpop.f32.mrb[0].mxu0
      %v2628 = vadd.f32 %v1060, %v2627
      %v2629 = vpop.f32.mrb[0].mxu0
      %2630 = vdwg.mxu0
      %2631 = vmatprep.subr.bf16.mxu0 0
      %2632 = vmatpush1.bf16.msra.mxu0 %v374
      %2633 = vmatprep.subr.bf16.mxu0 0
      %2634 = vmatpush1.bf16.msra.mxu0 %v375
      %2635 = vmatprep.subr.bf16.mxu0 0
      %2636 = vmatpush1.bf16.msra.mxu0 %v376
      %2637 = vmatprep.subr.bf16.mxu0 0
      %2638 = vmatpush1.bf16.msra.mxu0 %v377
      %2639 = vmatprep.subr.bf16.mxu0 0
      %2640 = vmatpush1.bf16.msra.mxu0 %v378
      %2641 = vmatprep.subr.bf16.mxu0 0
      %2642 = vmatpush1.bf16.msra.mxu0 %v379
      %2643 = vmatprep.subr.bf16.mxu0 0
      %2644 = vmatpush1.bf16.msra.mxu0 %v380
      %2645 = vmatprep.subr.bf16.mxu0 0
      %2646 = vmatpush1.bf16.msra.mxu0 %v381
      %2647 = vmatprep.subr.bf16.mxu0 0
      %2648 = vmatpush1.bf16.msra.mxu0 %v382
      %2649 = vmatprep.subr.bf16.mxu0 0
      %2650 = vmatpush1.bf16.msra.mxu0 %v383
      %2651 = vmatprep.subr.bf16.mxu0 0
      %2652 = vmatpush1.bf16.msra.mxu0 %v384
      %2653 = vmatprep.subr.bf16.mxu0 0
      %2654 = vmatpush1.bf16.msra.mxu0 %v385
      %2655 = vmatprep.subr.bf16.mxu0 0
      %2656 = vmatpush1.bf16.msra.mxu0 %v386
      %2657 = vmatprep.subr.bf16.mxu0 0
      %2658 = vmatpush1.bf16.msra.mxu0 %v387
      %2659 = vmatprep.subr.bf16.mxu0 0
      %2660 = vmatpush1.bf16.msra.mxu0 %v388
      %2661 = vmatprep.subr.bf16.mxu0 0
      %2662 = vmatpush1.bf16.msra.mxu0 %v389
      %2663 = vmatprep.mubr.bf16.mxu0 %v1833
      %2664 = vmatmul.mubr.bf16.gmra.mrb[0].mxu0 %v1832
      %v2665 = vpop.f32.mrb[0].mxu0
      %v2666 = vadd.f32 %v2377, %v2665
      %v2667 = vpop.f32.mrb[0].mxu0
      %v2668 = vpop.f32.mrb[0].mxu0
      %v2669 = vadd.f32 %v2380, %v2668
      %v2670 = vpop.f32.mrb[0].mxu0
      %2671 = vmatprep.mubr.bf16.mxu0 %v1841
      %2672 = vmatmul.mubr.bf16.gmra.mrb[0].mxu0 %v1840
      %v2673 = vpop.f32.mrb[0].mxu0
      %v2674 = vadd.f32 %v2385, %v2673
      %v2675 = vpop.f32.mrb[0].mxu0
      %v2676 = vpop.f32.mrb[0].mxu0
      %v2677 = vadd.f32 %v2388, %v2676
      %v2678 = vpop.f32.mrb[0].mxu0
      %2679 = vmatprep.mubr.bf16.mxu0 %v1849
      %2680 = vmatmul.mubr.bf16.gmra.mrb[0].mxu0 %v1848
      %v2681 = vpop.f32.mrb[0].mxu0
      %v2682 = vadd.f32 %v2393, %v2681
      %v2683 = vpop.f32.mrb[0].mxu0
      %v2684 = vpop.f32.mrb[0].mxu0
      %v2685 = vadd.f32 %v2396, %v2684
      %v2686 = vpop.f32.mrb[0].mxu0
      %2687 = vmatprep.mubr.bf16.mxu0 %v1857
      %2688 = vmatmul.mubr.bf16.gmra.mrb[0].mxu0 %v1856
      %v2689 = vpop.f32.mrb[0].mxu0
      %v2690 = vadd.f32 %v2401, %v2689
      %v2691 = vpop.f32.mrb[0].mxu0
      %v2692 = vpop.f32.mrb[0].mxu0
      %v2693 = vadd.f32 %v2404, %v2692
      %v2694 = vpop.f32.mrb[0].mxu0
      %2695 = vmatprep.mubr.bf16.mxu0 %v1865
      %2696 = vmatmul.mubr.bf16.gmra.mrb[0].mxu0 %v1864
      %v2697 = vpop.f32.mrb[0].mxu0
      %v2698 = vadd.f32 %v2409, %v2697
      %v2699 = vpop.f32.mrb[0].mxu0
      %v2700 = vpop.f32.mrb[0].mxu0
      %v2701 = vadd.f32 %v2412, %v2700
      %v2702 = vpop.f32.mrb[0].mxu0
      %2703 = vmatprep.mubr.bf16.mxu0 %v1873
      %2704 = vmatmul.mubr.bf16.gmra.mrb[0].mxu0 %v1872
      %v2705 = vpop.f32.mrb[0].mxu0
      %v2706 = vadd.f32 %v2417, %v2705
      %v2707 = vpop.f32.mrb[0].mxu0
      %v2708 = vpop.f32.mrb[0].mxu0
      %v2709 = vadd.f32 %v2420, %v2708
      %v2710 = vpop.f32.mrb[0].mxu0
      %2711 = vmatprep.mubr.bf16.mxu0 %v1881
      %2712 = vmatmul.mubr.bf16.gmra.mrb[0].mxu0 %v1880
      %v2713 = vpop.f32.mrb[0].mxu0
      %v2714 = vadd.f32 %v2425, %v2713
      %v2715 = vpop.f32.mrb[0].mxu0
      %v2716 = vpop.f32.mrb[0].mxu0
      %v2717 = vadd.f32 %v2428, %v2716
      %v2718 = vpop.f32.mrb[0].mxu0
      %2719 = vmatprep.mubr.bf16.mxu0 %v1889
      %2720 = vmatmul.mubr.bf16.gmra.mrb[0].mxu0 %v1888
      %v2721 = vpop.f32.mrb[0].mxu0
      %v2722 = vadd.f32 %v2433, %v2721
      %v2723 = vpop.f32.mrb[0].mxu0
      %v2724 = vpop.f32.mrb[0].mxu0
      %v2725 = vadd.f32 %v2436, %v2724
      %v2726 = vpop.f32.mrb[0].mxu0
      %2727 = vmatprep.mubr.bf16.mxu0 %v1897
      %2728 = vmatmul.mubr.bf16.gmra.mrb[0].mxu0 %v1896
      %v2729 = vpop.f32.mrb[0].mxu0
      %v2730 = vadd.f32 %v2441, %v2729
      %v2731 = vpop.f32.mrb[0].mxu0
      %v2732 = vpop.f32.mrb[0].mxu0
      %v2733 = vadd.f32 %v2444, %v2732
      %v2734 = vpop.f32.mrb[0].mxu0
      %2735 = vmatprep.mubr.bf16.mxu0 %v1905
      %2736 = vmatmul.mubr.bf16.gmra.mrb[0].mxu0 %v1904
      %v2737 = vpop.f32.mrb[0].mxu0
      %v2738 = vadd.f32 %v2449, %v2737
      %v2739 = vpop.f32.mrb[0].mxu0
      %v2740 = vpop.f32.mrb[0].mxu0
      %v2741 = vadd.f32 %v2452, %v2740
      %v2742 = vpop.f32.mrb[0].mxu0
      %2743 = vmatprep.mubr.bf16.mxu0 %v1913
      %2744 = vmatmul.mubr.bf16.gmra.mrb[0].mxu0 %v1912
      %v2745 = vpop.f32.mrb[0].mxu0
      %v2746 = vadd.f32 %v2457, %v2745
      %v2747 = vpop.f32.mrb[0].mxu0
      %v2748 = vpop.f32.mrb[0].mxu0
      %v2749 = vadd.f32 %v2460, %v2748
      %v2750 = vpop.f32.mrb[0].mxu0
      %2751 = vmatprep.mubr.bf16.mxu0 %v1921
      %2752 = vmatmul.mubr.bf16.gmra.mrb[0].mxu0 %v1920
      %v2753 = vpop.f32.mrb[0].mxu0
      %v2754 = vadd.f32 %v2465, %v2753
      %v2755 = vpop.f32.mrb[0].mxu0
      %v2756 = vpop.f32.mrb[0].mxu0
      %v2757 = vadd.f32 %v2468, %v2756
      %v2758 = vpop.f32.mrb[0].mxu0
      %2759 = vmatprep.mubr.bf16.mxu0 %v1929
      %2760 = vmatmul.mubr.bf16.gmra.mrb[0].mxu0 %v1928
      %v2761 = vpop.f32.mrb[0].mxu0
      %v2762 = vadd.f32 %v2473, %v2761
      %v2763 = vpop.f32.mrb[0].mxu0
      %v2764 = vpop.f32.mrb[0].mxu0
      %v2765 = vadd.f32 %v2476, %v2764
      %v2766 = vpop.f32.mrb[0].mxu0
      %2767 = vmatprep.mubr.bf16.mxu0 %v1937
      %2768 = vmatmul.mubr.bf16.gmra.mrb[0].mxu0 %v1936
      %v2769 = vpop.f32.mrb[0].mxu0
      %v2770 = vadd.f32 %v2481, %v2769
      %v2771 = vpop.f32.mrb[0].mxu0
      %v2772 = vpop.f32.mrb[0].mxu0
      %v2773 = vadd.f32 %v2484, %v2772
      %v2774 = vpop.f32.mrb[0].mxu0
      %2775 = vmatprep.mubr.bf16.mxu0 %v1945
      %2776 = vmatmul.mubr.bf16.gmra.mrb[0].mxu0 %v1944
      %v2777 = vpop.f32.mrb[0].mxu0
      %v2778 = vadd.f32 %v2489, %v2777
      %v2779 = vpop.f32.mrb[0].mxu0
      %v2780 = vpop.f32.mrb[0].mxu0
      %v2781 = vadd.f32 %v2492, %v2780
      %v2782 = vpop.f32.mrb[0].mxu0
      %2783 = vmatprep.mubr.bf16.mxu0 %v1953
      %2784 = vmatmul.mubr.bf16.gmra.mrb[0].mxu0 %v1952
      %v2785 = vpop.f32.mrb[0].mxu0
      %v2786 = vadd.f32 %v2497, %v2785
      %v2787 = vpop.f32.mrb[0].mxu0
      %v2788 = vpop.f32.mrb[0].mxu0
      %v2789 = vadd.f32 %v2500, %v2788
      %v2790 = vpop.f32.mrb[0].mxu0
      %2791 = vmatprep.mubr.bf16.mxu0 %v1961
      %2792 = vmatmul.mubr.bf16.gmra.mrb[0].mxu0 %v1960
      %v2793 = vpop.f32.mrb[0].mxu0
      %v2794 = vadd.f32 %v2505, %v2793
      %v2795 = vpop.f32.mrb[0].mxu0
      %v2796 = vpop.f32.mrb[0].mxu0
      %v2797 = vadd.f32 %v2508, %v2796
      %v2798 = vpop.f32.mrb[0].mxu0
      %2799 = vmatprep.mubr.bf16.mxu0 %v1969
      %2800 = vmatmul.mubr.bf16.gmra.mrb[0].mxu0 %v1968
      %v2801 = vpop.f32.mrb[0].mxu0
      %v2802 = vadd.f32 %v2513, %v2801
      %v2803 = vpop.f32.mrb[0].mxu0
      %v2804 = vpop.f32.mrb[0].mxu0
      %v2805 = vadd.f32 %v2516, %v2804
      %v2806 = vpop.f32.mrb[0].mxu0
      %2807 = vmatprep.mubr.bf16.mxu0 %v1977
      %2808 = vmatmul.mubr.bf16.gmra.mrb[0].mxu0 %v1976
      %v2809 = vpop.f32.mrb[0].mxu0
      %v2810 = vadd.f32 %v2521, %v2809
      %v2811 = vpop.f32.mrb[0].mxu0
      %v2812 = vpop.f32.mrb[0].mxu0
      %v2813 = vadd.f32 %v2524, %v2812
      %v2814 = vpop.f32.mrb[0].mxu0
      %2815 = vmatprep.mubr.bf16.mxu0 %v1985
      %2816 = vmatmul.mubr.bf16.gmra.mrb[0].mxu0 %v1984
      %v2817 = vpop.f32.mrb[0].mxu0
      %v2818 = vadd.f32 %v2529, %v2817
      %v2819 = vpop.f32.mrb[0].mxu0
      %v2820 = vpop.f32.mrb[0].mxu0
      %v2821 = vadd.f32 %v2532, %v2820
      %v2822 = vpop.f32.mrb[0].mxu0
      %2823 = vmatprep.mubr.bf16.mxu0 %v1993
      %2824 = vmatmul.mubr.bf16.gmra.mrb[0].mxu0 %v1992
      %v2825 = vpop.f32.mrb[0].mxu0
      %v2826 = vadd.f32 %v2537, %v2825
      %v2827 = vpop.f32.mrb[0].mxu0
      %v2828 = vpop.f32.mrb[0].mxu0
      %v2829 = vadd.f32 %v2540, %v2828
      %v2830 = vpop.f32.mrb[0].mxu0
      %2831 = vmatprep.mubr.bf16.mxu0 %v2001
      %2832 = vmatmul.mubr.bf16.gmra.mrb[0].mxu0 %v2000
      %v2833 = vpop.f32.mrb[0].mxu0
      %v2834 = vadd.f32 %v2545, %v2833
      %v2835 = vpop.f32.mrb[0].mxu0
      %v2836 = vpop.f32.mrb[0].mxu0
      %v2837 = vadd.f32 %v2548, %v2836
      %v2838 = vpop.f32.mrb[0].mxu0
      %2839 = vmatprep.mubr.bf16.mxu0 %v2009
      %2840 = vmatmul.mubr.bf16.gmra.mrb[0].mxu0 %v2008
      %v2841 = vpop.f32.mrb[0].mxu0
      %v2842 = vadd.f32 %v2553, %v2841
      %v2843 = vpop.f32.mrb[0].mxu0
      %v2844 = vpop.f32.mrb[0].mxu0
      %v2845 = vadd.f32 %v2556, %v2844
      %v2846 = vpop.f32.mrb[0].mxu0
      %2847 = vmatprep.mubr.bf16.mxu0 %v2017
      %2848 = vmatmul.mubr.bf16.gmra.mrb[0].mxu0 %v2016
      %v2849 = vpop.f32.mrb[0].mxu0
      %v2850 = vadd.f32 %v2561, %v2849
      %v2851 = vpop.f32.mrb[0].mxu0
      %v2852 = vpop.f32.mrb[0].mxu0
      %v2853 = vadd.f32 %v2564, %v2852
      %v2854 = vpop.f32.mrb[0].mxu0
      %2855 = vmatprep.mubr.bf16.mxu0 %v2025
      %2856 = vmatmul.mubr.bf16.gmra.mrb[0].mxu0 %v2024
      %v2857 = vpop.f32.mrb[0].mxu0
      %v2858 = vadd.f32 %v2569, %v2857
      %v2859 = vpop.f32.mrb[0].mxu0
      %v2860 = vpop.f32.mrb[0].mxu0
      %v2861 = vadd.f32 %v2572, %v2860
      %v2862 = vpop.f32.mrb[0].mxu0
      %2863 = vmatprep.mubr.bf16.mxu0 %v2033
      %2864 = vmatmul.mubr.bf16.gmra.mrb[0].mxu0 %v2032
      %v2865 = vpop.f32.mrb[0].mxu0
      %v2866 = vadd.f32 %v2577, %v2865
      %v2867 = vpop.f32.mrb[0].mxu0
      %v2868 = vpop.f32.mrb[0].mxu0
      %v2869 = vadd.f32 %v2580, %v2868
      %v2870 = vpop.f32.mrb[0].mxu0
      %2871 = vmatprep.mubr.bf16.mxu0 %v2041
      %2872 = vmatmul.mubr.bf16.gmra.mrb[0].mxu0 %v2040
      %v2873 = vpop.f32.mrb[0].mxu0
      %v2874 = vadd.f32 %v2585, %v2873
      %v2875 = vpop.f32.mrb[0].mxu0
      %v2876 = vpop.f32.mrb[0].mxu0
      %v2877 = vadd.f32 %v2588, %v2876
      %v2878 = vpop.f32.mrb[0].mxu0
      %2879 = vmatprep.mubr.bf16.mxu0 %v2049
      %2880 = vmatmul.mubr.bf16.gmra.mrb[0].mxu0 %v2048
      %v2881 = vpop.f32.mrb[0].mxu0
      %v2882 = vadd.f32 %v2593, %v2881
      %v2883 = vpop.f32.mrb[0].mxu0
      %v2884 = vpop.f32.mrb[0].mxu0
      %v2885 = vadd.f32 %v2596, %v2884
      %v2886 = vpop.f32.mrb[0].mxu0
      %2887 = vmatprep.mubr.bf16.mxu0 %v2057
      %2888 = vmatmul.mubr.bf16.gmra.mrb[0].mxu0 %v2056
      %v2889 = vpop.f32.mrb[0].mxu0
      %v2890 = vadd.f32 %v2601, %v2889
      %v2891 = vpop.f32.mrb[0].mxu0
      %v2892 = vpop.f32.mrb[0].mxu0
      %v2893 = vadd.f32 %v2604, %v2892
      %v2894 = vpop.f32.mrb[0].mxu0
      %2895 = vmatprep.mubr.bf16.mxu0 %v2065
      %2896 = vmatmul.mubr.bf16.gmra.mrb[0].mxu0 %v2064
      %v2897 = vpop.f32.mrb[0].mxu0
      %v2898 = vadd.f32 %v2609, %v2897
      %v2899 = vpop.f32.mrb[0].mxu0
      %v2900 = vpop.f32.mrb[0].mxu0
      %v2901 = vadd.f32 %v2612, %v2900
      %v2902 = vpop.f32.mrb[0].mxu0
      %2903 = vmatprep.mubr.bf16.mxu0 %v2073
      %2904 = vmatmul.mubr.bf16.gmra.mrb[0].mxu0 %v2072
      %v2905 = vpop.f32.mrb[0].mxu0
      %v2906 = vadd.f32 %v2617, %v2905
      %v2907 = vpop.f32.mrb[0].mxu0
      %v2908 = vpop.f32.mrb[0].mxu0
      %v2909 = vadd.f32 %v2620, %v2908
      %v2910 = vpop.f32.mrb[0].mxu0
      %2911 = vmatprep.mubr.bf16.mxu0 %v2081
      %2912 = vmatmul.mubr.bf16.gmra.mrb[0].mxu0 %v2080
      %v2913 = vpop.f32.mrb[0].mxu0
      %v2914 = vadd.f32 %v2625, %v2913
      %v2915 = vpop.f32.mrb[0].mxu0
      %v2916 = vpop.f32.mrb[0].mxu0
      %v2917 = vadd.f32 %v2628, %v2916
      %v2918 = vpop.f32.mrb[0].mxu0
      %2919 = vdwg.mxu0
      %2920 = vmatprep.subr.bf16.mxu0 0
      %2921 = vmatpush1.bf16.msra.mxu0 %v390
      %2922 = vmatprep.subr.bf16.mxu0 0
      %2923 = vmatpush1.bf16.msra.mxu0 %v391
      %2924 = vmatprep.subr.bf16.mxu0 0
      %2925 = vmatpush1.bf16.msra.mxu0 %v392
      %2926 = vmatprep.subr.bf16.mxu0 0
      %2927 = vmatpush1.bf16.msra.mxu0 %v393
      %2928 = vmatprep.subr.bf16.mxu0 0
      %2929 = vmatpush1.bf16.msra.mxu0 %v394
      %2930 = vmatprep.subr.bf16.mxu0 0
      %2931 = vmatpush1.bf16.msra.mxu0 %v395
      %2932 = vmatprep.subr.bf16.mxu0 0
      %2933 = vmatpush1.bf16.msra.mxu0 %v396
      %2934 = vmatprep.subr.bf16.mxu0 0
      %2935 = vmatpush1.bf16.msra.mxu0 %v397
      %2936 = vmatprep.subr.bf16.mxu0 0
      %2937 = vmatpush1.bf16.msra.mxu0 %v398
      %2938 = vmatprep.subr.bf16.mxu0 0
      %2939 = vmatpush1.bf16.msra.mxu0 %v399
      %2940 = vmatprep.subr.bf16.mxu0 0
      %2941 = vmatpush1.bf16.msra.mxu0 %v400
      %2942 = vmatprep.subr.bf16.mxu0 0
      %2943 = vmatpush1.bf16.msra.mxu0 %v401
      %2944 = vmatprep.subr.bf16.mxu0 0
      %2945 = vmatpush1.bf16.msra.mxu0 %v402
      %2946 = vmatprep.subr.bf16.mxu0 0
      %2947 = vmatpush1.bf16.msra.mxu0 %v403
      %2948 = vmatprep.subr.bf16.mxu0 0
      %2949 = vmatpush1.bf16.msra.mxu0 %v404
      %2950 = vmatprep.subr.bf16.mxu0 0
      %2951 = vmatpush1.bf16.msra.mxu0 %v405
      %2952 = vmatprep.mubr.bf16.mxu0 %v1835
      %2953 = vmatmul.mubr.bf16.gmra.mrb[0].mxu0 %v1834
      %v2954 = vpop.f32.mrb[0].mxu0
      %v2955 = vadd.f32 %v2666, %v2954
      %v2956 = vpop.f32.mrb[0].mxu0
      %v2957 = vpop.f32.mrb[0].mxu0
      %v2958 = vadd.f32 %v2669, %v2957
      %v2959 = vpop.f32.mrb[0].mxu0
      %2960 = vmatprep.mubr.bf16.mxu0 %v1843
      %2961 = vmatmul.mubr.bf16.gmra.mrb[0].mxu0 %v1842
      %v2962 = vpop.f32.mrb[0].mxu0
      %v2963 = vadd.f32 %v2674, %v2962
      %v2964 = vpop.f32.mrb[0].mxu0
      %v2965 = vpop.f32.mrb[0].mxu0
      %v2966 = vadd.f32 %v2677, %v2965
      %v2967 = vpop.f32.mrb[0].mxu0
      %2968 = vmatprep.mubr.bf16.mxu0 %v1851
      %2969 = vmatmul.mubr.bf16.gmra.mrb[0].mxu0 %v1850
      %v2970 = vpop.f32.mrb[0].mxu0
      %v2971 = vadd.f32 %v2682, %v2970
      %v2972 = vpop.f32.mrb[0].mxu0
      %v2973 = vpop.f32.mrb[0].mxu0
      %v2974 = vadd.f32 %v2685, %v2973
      %v2975 = vpop.f32.mrb[0].mxu0
      %2976 = vmatprep.mubr.bf16.mxu0 %v1859
      %2977 = vmatmul.mubr.bf16.gmra.mrb[0].mxu0 %v1858
      %v2978 = vpop.f32.mrb[0].mxu0
      %v2979 = vadd.f32 %v2690, %v2978
      %v2980 = vpop.f32.mrb[0].mxu0
      %v2981 = vpop.f32.mrb[0].mxu0
      %v2982 = vadd.f32 %v2693, %v2981
      %v2983 = vpop.f32.mrb[0].mxu0
      %2984 = vmatprep.mubr.bf16.mxu0 %v1867
      %2985 = vmatmul.mubr.bf16.gmra.mrb[0].mxu0 %v1866
      %v2986 = vpop.f32.mrb[0].mxu0
      %v2987 = vadd.f32 %v2698, %v2986
      %v2988 = vpop.f32.mrb[0].mxu0
      %v2989 = vpop.f32.mrb[0].mxu0
      %v2990 = vadd.f32 %v2701, %v2989
      %v2991 = vpop.f32.mrb[0].mxu0
      %2992 = vmatprep.mubr.bf16.mxu0 %v1875
      %2993 = vmatmul.mubr.bf16.gmra.mrb[0].mxu0 %v1874
      %v2994 = vpop.f32.mrb[0].mxu0
      %v2995 = vadd.f32 %v2706, %v2994
      %v2996 = vpop.f32.mrb[0].mxu0
      %v2997 = vpop.f32.mrb[0].mxu0
      %v2998 = vadd.f32 %v2709, %v2997
      %v2999 = vpop.f32.mrb[0].mxu0
      %3000 = vmatprep.mubr.bf16.mxu0 %v1883
      %3001 = vmatmul.mubr.bf16.gmra.mrb[0].mxu0 %v1882
      %v3002 = vpop.f32.mrb[0].mxu0
      %v3003 = vadd.f32 %v2714, %v3002
      %v3004 = vpop.f32.mrb[0].mxu0
      %v3005 = vpop.f32.mrb[0].mxu0
      %v3006 = vadd.f32 %v2717, %v3005
      %v3007 = vpop.f32.mrb[0].mxu0
      %3008 = vmatprep.mubr.bf16.mxu0 %v1891
      %3009 = vmatmul.mubr.bf16.gmra.mrb[0].mxu0 %v1890
      %v3010 = vpop.f32.mrb[0].mxu0
      %v3011 = vadd.f32 %v2722, %v3010
      %v3012 = vpop.f32.mrb[0].mxu0
      %v3013 = vpop.f32.mrb[0].mxu0
      %v3014 = vadd.f32 %v2725, %v3013
      %v3015 = vpop.f32.mrb[0].mxu0
      %3016 = vmatprep.mubr.bf16.mxu0 %v1899
      %3017 = vmatmul.mubr.bf16.gmra.mrb[0].mxu0 %v1898
      %v3018 = vpop.f32.mrb[0].mxu0
      %v3019 = vadd.f32 %v2730, %v3018
      %v3020 = vpop.f32.mrb[0].mxu0
      %v3021 = vpop.f32.mrb[0].mxu0
      %v3022 = vadd.f32 %v2733, %v3021
      %v3023 = vpop.f32.mrb[0].mxu0
      %3024 = vmatprep.mubr.bf16.mxu0 %v1907
      %3025 = vmatmul.mubr.bf16.gmra.mrb[0].mxu0 %v1906
      %v3026 = vpop.f32.mrb[0].mxu0
      %v3027 = vadd.f32 %v2738, %v3026
      %v3028 = vpop.f32.mrb[0].mxu0
      %v3029 = vpop.f32.mrb[0].mxu0
      %v3030 = vadd.f32 %v2741, %v3029
      %v3031 = vpop.f32.mrb[0].mxu0
      %3032 = vmatprep.mubr.bf16.mxu0 %v1915
      %3033 = vmatmul.mubr.bf16.gmra.mrb[0].mxu0 %v1914
      %v3034 = vpop.f32.mrb[0].mxu0
      %v3035 = vadd.f32 %v2746, %v3034
      %v3036 = vpop.f32.mrb[0].mxu0
      %v3037 = vpop.f32.mrb[0].mxu0
      %v3038 = vadd.f32 %v2749, %v3037
      %v3039 = vpop.f32.mrb[0].mxu0
      %3040 = vmatprep.mubr.bf16.mxu0 %v1923
      %3041 = vmatmul.mubr.bf16.gmra.mrb[0].mxu0 %v1922
      %v3042 = vpop.f32.mrb[0].mxu0
      %v3043 = vadd.f32 %v2754, %v3042
      %v3044 = vpop.f32.mrb[0].mxu0
      %v3045 = vpop.f32.mrb[0].mxu0
      %v3046 = vadd.f32 %v2757, %v3045
      %v3047 = vpop.f32.mrb[0].mxu0
      %3048 = vmatprep.mubr.bf16.mxu0 %v1931
      %3049 = vmatmul.mubr.bf16.gmra.mrb[0].mxu0 %v1930
      %v3050 = vpop.f32.mrb[0].mxu0
      %v3051 = vadd.f32 %v2762, %v3050
      %v3052 = vpop.f32.mrb[0].mxu0
      %v3053 = vpop.f32.mrb[0].mxu0
      %v3054 = vadd.f32 %v2765, %v3053
      %v3055 = vpop.f32.mrb[0].mxu0
      %3056 = vmatprep.mubr.bf16.mxu0 %v1939
      %3057 = vmatmul.mubr.bf16.gmra.mrb[0].mxu0 %v1938
      %v3058 = vpop.f32.mrb[0].mxu0
      %v3059 = vadd.f32 %v2770, %v3058
      %v3060 = vpop.f32.mrb[0].mxu0
      %v3061 = vpop.f32.mrb[0].mxu0
      %v3062 = vadd.f32 %v2773, %v3061
      %v3063 = vpop.f32.mrb[0].mxu0
      %3064 = vmatprep.mubr.bf16.mxu0 %v1947
      %3065 = vmatmul.mubr.bf16.gmra.mrb[0].mxu0 %v1946
      %v3066 = vpop.f32.mrb[0].mxu0
      %v3067 = vadd.f32 %v2778, %v3066
      %v3068 = vpop.f32.mrb[0].mxu0
      %v3069 = vpop.f32.mrb[0].mxu0
      %v3070 = vadd.f32 %v2781, %v3069
      %v3071 = vpop.f32.mrb[0].mxu0
      %3072 = vmatprep.mubr.bf16.mxu0 %v1955
      %3073 = vmatmul.mubr.bf16.gmra.mrb[0].mxu0 %v1954
      %v3074 = vpop.f32.mrb[0].mxu0
      %v3075 = vadd.f32 %v2786, %v3074
      %v3076 = vpop.f32.mrb[0].mxu0
      %v3077 = vpop.f32.mrb[0].mxu0
      %v3078 = vadd.f32 %v2789, %v3077
      %v3079 = vpop.f32.mrb[0].mxu0
      %3080 = vmatprep.mubr.bf16.mxu0 %v1963
      %3081 = vmatmul.mubr.bf16.gmra.mrb[0].mxu0 %v1962
      %v3082 = vpop.f32.mrb[0].mxu0
      %v3083 = vadd.f32 %v2794, %v3082
      %v3084 = vpop.f32.mrb[0].mxu0
      %v3085 = vpop.f32.mrb[0].mxu0
      %v3086 = vadd.f32 %v2797, %v3085
      %v3087 = vpop.f32.mrb[0].mxu0
      %3088 = vmatprep.mubr.bf16.mxu0 %v1971
      %3089 = vmatmul.mubr.bf16.gmra.mrb[0].mxu0 %v1970
      %v3090 = vpop.f32.mrb[0].mxu0
      %v3091 = vadd.f32 %v2802, %v3090
      %v3092 = vpop.f32.mrb[0].mxu0
      %v3093 = vpop.f32.mrb[0].mxu0
      %v3094 = vadd.f32 %v2805, %v3093
      %v3095 = vpop.f32.mrb[0].mxu0
      %3096 = vmatprep.mubr.bf16.mxu0 %v1979
      %3097 = vmatmul.mubr.bf16.gmra.mrb[0].mxu0 %v1978
      %v3098 = vpop.f32.mrb[0].mxu0
      %v3099 = vadd.f32 %v2810, %v3098
      %v3100 = vpop.f32.mrb[0].mxu0
      %v3101 = vpop.f32.mrb[0].mxu0
      %v3102 = vadd.f32 %v2813, %v3101
      %v3103 = vpop.f32.mrb[0].mxu0
      %3104 = vmatprep.mubr.bf16.mxu0 %v1987
      %3105 = vmatmul.mubr.bf16.gmra.mrb[0].mxu0 %v1986
      %v3106 = vpop.f32.mrb[0].mxu0
      %v3107 = vadd.f32 %v2818, %v3106
      %v3108 = vpop.f32.mrb[0].mxu0
      %v3109 = vpop.f32.mrb[0].mxu0
      %v3110 = vadd.f32 %v2821, %v3109
      %v3111 = vpop.f32.mrb[0].mxu0
      %3112 = vmatprep.mubr.bf16.mxu0 %v1995
      %3113 = vmatmul.mubr.bf16.gmra.mrb[0].mxu0 %v1994
      %v3114 = vpop.f32.mrb[0].mxu0
      %v3115 = vadd.f32 %v2826, %v3114
      %v3116 = vpop.f32.mrb[0].mxu0
      %v3117 = vpop.f32.mrb[0].mxu0
      %v3118 = vadd.f32 %v2829, %v3117
      %v3119 = vpop.f32.mrb[0].mxu0
      %3120 = vmatprep.mubr.bf16.mxu0 %v2003
      %3121 = vmatmul.mubr.bf16.gmra.mrb[0].mxu0 %v2002
      %v3122 = vpop.f32.mrb[0].mxu0
      %v3123 = vadd.f32 %v2834, %v3122
      %v3124 = vpop.f32.mrb[0].mxu0
      %v3125 = vpop.f32.mrb[0].mxu0
      %v3126 = vadd.f32 %v2837, %v3125
      %v3127 = vpop.f32.mrb[0].mxu0
      %3128 = vmatprep.mubr.bf16.mxu0 %v2011
      %3129 = vmatmul.mubr.bf16.gmra.mrb[0].mxu0 %v2010
      %v3130 = vpop.f32.mrb[0].mxu0
      %v3131 = vadd.f32 %v2842, %v3130
      %v3132 = vpop.f32.mrb[0].mxu0
      %v3133 = vpop.f32.mrb[0].mxu0
      %v3134 = vadd.f32 %v2845, %v3133
      %v3135 = vpop.f32.mrb[0].mxu0
      %3136 = vmatprep.mubr.bf16.mxu0 %v2019
      %3137 = vmatmul.mubr.bf16.gmra.mrb[0].mxu0 %v2018
      %v3138 = vpop.f32.mrb[0].mxu0
      %v3139 = vadd.f32 %v2850, %v3138
      %v3140 = vpop.f32.mrb[0].mxu0
      %v3141 = vpop.f32.mrb[0].mxu0
      %v3142 = vadd.f32 %v2853, %v3141
      %v3143 = vpop.f32.mrb[0].mxu0
      %3144 = vmatprep.mubr.bf16.mxu0 %v2027
      %3145 = vmatmul.mubr.bf16.gmra.mrb[0].mxu0 %v2026
      %v3146 = vpop.f32.mrb[0].mxu0
      %v3147 = vadd.f32 %v2858, %v3146
      %v3148 = vpop.f32.mrb[0].mxu0
      %v3149 = vpop.f32.mrb[0].mxu0
      %v3150 = vadd.f32 %v2861, %v3149
      %v3151 = vpop.f32.mrb[0].mxu0
      %3152 = vmatprep.mubr.bf16.mxu0 %v2035
      %3153 = vmatmul.mubr.bf16.gmra.mrb[0].mxu0 %v2034
      %v3154 = vpop.f32.mrb[0].mxu0
      %v3155 = vadd.f32 %v2866, %v3154
      %v3156 = vpop.f32.mrb[0].mxu0
      %v3157 = vpop.f32.mrb[0].mxu0
      %v3158 = vadd.f32 %v2869, %v3157
      %v3159 = vpop.f32.mrb[0].mxu0
      %3160 = vmatprep.mubr.bf16.mxu0 %v2043
      %3161 = vmatmul.mubr.bf16.gmra.mrb[0].mxu0 %v2042
      %v3162 = vpop.f32.mrb[0].mxu0
      %v3163 = vadd.f32 %v2874, %v3162
      %v3164 = vpop.f32.mrb[0].mxu0
      %v3165 = vpop.f32.mrb[0].mxu0
      %v3166 = vadd.f32 %v2877, %v3165
      %v3167 = vpop.f32.mrb[0].mxu0
      %3168 = vmatprep.mubr.bf16.mxu0 %v2051
      %3169 = vmatmul.mubr.bf16.gmra.mrb[0].mxu0 %v2050
      %v3170 = vpop.f32.mrb[0].mxu0
      %v3171 = vadd.f32 %v2882, %v3170
      %v3172 = vpop.f32.mrb[0].mxu0
      %v3173 = vpop.f32.mrb[0].mxu0
      %v3174 = vadd.f32 %v2885, %v3173
      %v3175 = vpop.f32.mrb[0].mxu0
      %3176 = vmatprep.mubr.bf16.mxu0 %v2059
      %3177 = vmatmul.mubr.bf16.gmra.mrb[0].mxu0 %v2058
      %v3178 = vpop.f32.mrb[0].mxu0
      %v3179 = vadd.f32 %v2890, %v3178
      %v3180 = vpop.f32.mrb[0].mxu0
      %v3181 = vpop.f32.mrb[0].mxu0
      %v3182 = vadd.f32 %v2893, %v3181
      %v3183 = vpop.f32.mrb[0].mxu0
      %3184 = vmatprep.mubr.bf16.mxu0 %v2067
      %3185 = vmatmul.mubr.bf16.gmra.mrb[0].mxu0 %v2066
      %v3186 = vpop.f32.mrb[0].mxu0
      %v3187 = vadd.f32 %v2898, %v3186
      %v3188 = vpop.f32.mrb[0].mxu0
      %v3189 = vpop.f32.mrb[0].mxu0
      %v3190 = vadd.f32 %v2901, %v3189
      %v3191 = vpop.f32.mrb[0].mxu0
      %3192 = vmatprep.mubr.bf16.mxu0 %v2075
      %3193 = vmatmul.mubr.bf16.gmra.mrb[0].mxu0 %v2074
      %v3194 = vpop.f32.mrb[0].mxu0
      %v3195 = vadd.f32 %v2906, %v3194
      %v3196 = vpop.f32.mrb[0].mxu0
      %v3197 = vpop.f32.mrb[0].mxu0
      %v3198 = vadd.f32 %v2909, %v3197
      %v3199 = vpop.f32.mrb[0].mxu0
      %3200 = vmatprep.mubr.bf16.mxu0 %v2083
      %3201 = vmatmul.mubr.bf16.gmra.mrb[0].mxu0 %v2082
      %v3202 = vpop.f32.mrb[0].mxu0
      %v3203 = vadd.f32 %v2914, %v3202
      %v3204 = vpop.f32.mrb[0].mxu0
      %v3205 = vpop.f32.mrb[0].mxu0
      %v3206 = vadd.f32 %v2917, %v3205
      %v3207 = vpop.f32.mrb[0].mxu0
      %3208 = vdwg.mxu0
      %3209 = vmatprep.subr.bf16.mxu0 0
      %3210 = vmatpush1.bf16.msra.mxu0 %v406
      %3211 = vmatprep.subr.bf16.mxu0 0
      %3212 = vmatpush1.bf16.msra.mxu0 %v407
      %3213 = vmatprep.subr.bf16.mxu0 0
      %3214 = vmatpush1.bf16.msra.mxu0 %v408
      %3215 = vmatprep.subr.bf16.mxu0 0
      %3216 = vmatpush1.bf16.msra.mxu0 %v409
      %3217 = vmatprep.subr.bf16.mxu0 0
      %3218 = vmatpush1.bf16.msra.mxu0 %v410
      %3219 = vmatprep.subr.bf16.mxu0 0
      %3220 = vmatpush1.bf16.msra.mxu0 %v411
      %3221 = vmatprep.subr.bf16.mxu0 0
      %3222 = vmatpush1.bf16.msra.mxu0 %v412
      %3223 = vmatprep.subr.bf16.mxu0 0
      %3224 = vmatpush1.bf16.msra.mxu0 %v413
      %3225 = vmatprep.subr.bf16.mxu0 0
      %3226 = vmatpush1.bf16.msra.mxu0 %v414
      %3227 = vmatprep.subr.bf16.mxu0 0
      %3228 = vmatpush1.bf16.msra.mxu0 %v415
      %3229 = vmatprep.subr.bf16.mxu0 0
      %3230 = vmatpush1.bf16.msra.mxu0 %v416
      %3231 = vmatprep.subr.bf16.mxu0 0
      %3232 = vmatpush1.bf16.msra.mxu0 %v417
      %3233 = vmatprep.subr.bf16.mxu0 0
      %3234 = vmatpush1.bf16.msra.mxu0 %v418
      %3235 = vmatprep.subr.bf16.mxu0 0
      %3236 = vmatpush1.bf16.msra.mxu0 %v419
      %3237 = vmatprep.subr.bf16.mxu0 0
      %3238 = vmatpush1.bf16.msra.mxu0 %v420
      %3239 = vmatprep.subr.bf16.mxu0 0
      %3240 = vmatpush1.bf16.msra.mxu0 %v421
      %3241 = vmatprep.mubr.bf16.mxu0 %v1837
      %3242 = vmatmul.mubr.bf16.gmra.mrb[0].mxu0 %v1836
      %v3243 = vpop.f32.mrb[0].mxu0
      %v3244 = vadd.f32 %v2955, %v3243
      %v3245 = vpop.f32.mrb[0].mxu0
      %v3246 = vpop.f32.mrb[0].mxu0
      %v3247 = vadd.f32 %v2958, %v3246
      %v3248 = vpop.f32.mrb[0].mxu0
      %3249 = vmatprep.mubr.bf16.mxu0 %v1845
      %3250 = vmatmul.mubr.bf16.gmra.mrb[0].mxu0 %v1844
      %v3251 = vpop.f32.mrb[0].mxu0
      %v3252 = vadd.f32 %v2963, %v3251
      %v3253 = vpop.f32.mrb[0].mxu0
      %v3254 = vpop.f32.mrb[0].mxu0
      %v3255 = vadd.f32 %v2966, %v3254
      %v3256 = vpop.f32.mrb[0].mxu0
      %3257 = vmatprep.mubr.bf16.mxu0 %v1853
      %3258 = vmatmul.mubr.bf16.gmra.mrb[0].mxu0 %v1852
      %v3259 = vpop.f32.mrb[0].mxu0
      %v3260 = vadd.f32 %v2971, %v3259
      %v3261 = vpop.f32.mrb[0].mxu0
      %v3262 = vpop.f32.mrb[0].mxu0
      %v3263 = vadd.f32 %v2974, %v3262
      %v3264 = vpop.f32.mrb[0].mxu0
      %3265 = vmatprep.mubr.bf16.mxu0 %v1861
      %3266 = vmatmul.mubr.bf16.gmra.mrb[0].mxu0 %v1860
      %v3267 = vpop.f32.mrb[0].mxu0
      %v3268 = vadd.f32 %v2979, %v3267
      %v3269 = vpop.f32.mrb[0].mxu0
      %v3270 = vpop.f32.mrb[0].mxu0
      %v3271 = vadd.f32 %v2982, %v3270
      %v3272 = vpop.f32.mrb[0].mxu0
      %3273 = vmatprep.mubr.bf16.mxu0 %v1869
      %3274 = vmatmul.mubr.bf16.gmra.mrb[0].mxu0 %v1868
      %v3275 = vpop.f32.mrb[0].mxu0
      %v3276 = vadd.f32 %v2987, %v3275
      %v3277 = vpop.f32.mrb[0].mxu0
      %v3278 = vpop.f32.mrb[0].mxu0
      %v3279 = vadd.f32 %v2990, %v3278
      %v3280 = vpop.f32.mrb[0].mxu0
      %3281 = vmatprep.mubr.bf16.mxu0 %v1877
      %3282 = vmatmul.mubr.bf16.gmra.mrb[0].mxu0 %v1876
      %v3283 = vpop.f32.mrb[0].mxu0
      %v3284 = vadd.f32 %v2995, %v3283
      %v3285 = vpop.f32.mrb[0].mxu0
      %v3286 = vpop.f32.mrb[0].mxu0
      %v3287 = vadd.f32 %v2998, %v3286
      %v3288 = vpop.f32.mrb[0].mxu0
      %3289 = vmatprep.mubr.bf16.mxu0 %v1885
      %3290 = vmatmul.mubr.bf16.gmra.mrb[0].mxu0 %v1884
      %v3291 = vpop.f32.mrb[0].mxu0
      %v3292 = vadd.f32 %v3003, %v3291
      %v3293 = vpop.f32.mrb[0].mxu0
      %v3294 = vpop.f32.mrb[0].mxu0
      %v3295 = vadd.f32 %v3006, %v3294
      %v3296 = vpop.f32.mrb[0].mxu0
      %3297 = vmatprep.mubr.bf16.mxu0 %v1893
      %3298 = vmatmul.mubr.bf16.gmra.mrb[0].mxu0 %v1892
      %v3299 = vpop.f32.mrb[0].mxu0
      %v3300 = vadd.f32 %v3011, %v3299
      %v3301 = vpop.f32.mrb[0].mxu0
      %v3302 = vpop.f32.mrb[0].mxu0
      %v3303 = vadd.f32 %v3014, %v3302
      %v3304 = vpop.f32.mrb[0].mxu0
      %3305 = vmatprep.mubr.bf16.mxu0 %v1901
      %3306 = vmatmul.mubr.bf16.gmra.mrb[0].mxu0 %v1900
      %v3307 = vpop.f32.mrb[0].mxu0
      %v3308 = vadd.f32 %v3019, %v3307
      %v3309 = vpop.f32.mrb[0].mxu0
      %v3310 = vpop.f32.mrb[0].mxu0
      %v3311 = vadd.f32 %v3022, %v3310
      %v3312 = vpop.f32.mrb[0].mxu0
      %3313 = vmatprep.mubr.bf16.mxu0 %v1909
      %3314 = vmatmul.mubr.bf16.gmra.mrb[0].mxu0 %v1908
      %v3315 = vpop.f32.mrb[0].mxu0
      %v3316 = vadd.f32 %v3027, %v3315
      %v3317 = vpop.f32.mrb[0].mxu0
      %v3318 = vpop.f32.mrb[0].mxu0
      %v3319 = vadd.f32 %v3030, %v3318
      %v3320 = vpop.f32.mrb[0].mxu0
      %3321 = vmatprep.mubr.bf16.mxu0 %v1917
      %3322 = vmatmul.mubr.bf16.gmra.mrb[0].mxu0 %v1916
      %v3323 = vpop.f32.mrb[0].mxu0
      %v3324 = vadd.f32 %v3035, %v3323
      %v3325 = vpop.f32.mrb[0].mxu0
      %v3326 = vpop.f32.mrb[0].mxu0
      %v3327 = vadd.f32 %v3038, %v3326
      %v3328 = vpop.f32.mrb[0].mxu0
      %3329 = vmatprep.mubr.bf16.mxu0 %v1925
      %3330 = vmatmul.mubr.bf16.gmra.mrb[0].mxu0 %v1924
      %v3331 = vpop.f32.mrb[0].mxu0
      %v3332 = vadd.f32 %v3043, %v3331
      %v3333 = vpop.f32.mrb[0].mxu0
      %v3334 = vpop.f32.mrb[0].mxu0
      %v3335 = vadd.f32 %v3046, %v3334
      %v3336 = vpop.f32.mrb[0].mxu0
      %3337 = vmatprep.mubr.bf16.mxu0 %v1933
      %3338 = vmatmul.mubr.bf16.gmra.mrb[0].mxu0 %v1932
      %v3339 = vpop.f32.mrb[0].mxu0
      %v3340 = vadd.f32 %v3051, %v3339
      %v3341 = vpop.f32.mrb[0].mxu0
      %v3342 = vpop.f32.mrb[0].mxu0
      %v3343 = vadd.f32 %v3054, %v3342
      %v3344 = vpop.f32.mrb[0].mxu0
      %3345 = vmatprep.mubr.bf16.mxu0 %v1941
      %3346 = vmatmul.mubr.bf16.gmra.mrb[0].mxu0 %v1940
      %v3347 = vpop.f32.mrb[0].mxu0
      %v3348 = vadd.f32 %v3059, %v3347
      %v3349 = vpop.f32.mrb[0].mxu0
      %v3350 = vpop.f32.mrb[0].mxu0
      %v3351 = vadd.f32 %v3062, %v3350
      %v3352 = vpop.f32.mrb[0].mxu0
      %3353 = vmatprep.mubr.bf16.mxu0 %v1949
      %3354 = vmatmul.mubr.bf16.gmra.mrb[0].mxu0 %v1948
      %v3355 = vpop.f32.mrb[0].mxu0
      %v3356 = vadd.f32 %v3067, %v3355
      %v3357 = vpop.f32.mrb[0].mxu0
      %v3358 = vpop.f32.mrb[0].mxu0
      %v3359 = vadd.f32 %v3070, %v3358
      %v3360 = vpop.f32.mrb[0].mxu0
      %3361 = vmatprep.mubr.bf16.mxu0 %v1957
      %3362 = vmatmul.mubr.bf16.gmra.mrb[0].mxu0 %v1956
      %v3363 = vpop.f32.mrb[0].mxu0
      %v3364 = vadd.f32 %v3075, %v3363
      %v3365 = vpop.f32.mrb[0].mxu0
      %v3366 = vpop.f32.mrb[0].mxu0
      %v3367 = vadd.f32 %v3078, %v3366
      %v3368 = vpop.f32.mrb[0].mxu0
      %3369 = vmatprep.mubr.bf16.mxu0 %v1965
      %3370 = vmatmul.mubr.bf16.gmra.mrb[0].mxu0 %v1964
      %v3371 = vpop.f32.mrb[0].mxu0
      %v3372 = vadd.f32 %v3083, %v3371
      %v3373 = vpop.f32.mrb[0].mxu0
      %v3374 = vpop.f32.mrb[0].mxu0
      %v3375 = vadd.f32 %v3086, %v3374
      %v3376 = vpop.f32.mrb[0].mxu0
      %3377 = vmatprep.mubr.bf16.mxu0 %v1973
      %3378 = vmatmul.mubr.bf16.gmra.mrb[0].mxu0 %v1972
      %v3379 = vpop.f32.mrb[0].mxu0
      %v3380 = vadd.f32 %v3091, %v3379
      %v3381 = vpop.f32.mrb[0].mxu0
      %v3382 = vpop.f32.mrb[0].mxu0
      %v3383 = vadd.f32 %v3094, %v3382
      %v3384 = vpop.f32.mrb[0].mxu0
      %3385 = vmatprep.mubr.bf16.mxu0 %v1981
      %3386 = vmatmul.mubr.bf16.gmra.mrb[0].mxu0 %v1980
      %v3387 = vpop.f32.mrb[0].mxu0
      %v3388 = vadd.f32 %v3099, %v3387
      %v3389 = vpop.f32.mrb[0].mxu0
      %v3390 = vpop.f32.mrb[0].mxu0
      %v3391 = vadd.f32 %v3102, %v3390
      %v3392 = vpop.f32.mrb[0].mxu0
      %3393 = vmatprep.mubr.bf16.mxu0 %v1989
      %3394 = vmatmul.mubr.bf16.gmra.mrb[0].mxu0 %v1988
      %v3395 = vpop.f32.mrb[0].mxu0
      %v3396 = vadd.f32 %v3107, %v3395
      %v3397 = vpop.f32.mrb[0].mxu0
      %v3398 = vpop.f32.mrb[0].mxu0
      %v3399 = vadd.f32 %v3110, %v3398
      %v3400 = vpop.f32.mrb[0].mxu0
      %3401 = vmatprep.mubr.bf16.mxu0 %v1997
      %3402 = vmatmul.mubr.bf16.gmra.mrb[0].mxu0 %v1996
      %v3403 = vpop.f32.mrb[0].mxu0
      %v3404 = vadd.f32 %v3115, %v3403
      %v3405 = vpop.f32.mrb[0].mxu0
      %v3406 = vpop.f32.mrb[0].mxu0
      %v3407 = vadd.f32 %v3118, %v3406
      %v3408 = vpop.f32.mrb[0].mxu0
      %3409 = vmatprep.mubr.bf16.mxu0 %v2005
      %3410 = vmatmul.mubr.bf16.gmra.mrb[0].mxu0 %v2004
      %v3411 = vpop.f32.mrb[0].mxu0
      %v3412 = vadd.f32 %v3123, %v3411
      %v3413 = vpop.f32.mrb[0].mxu0
      %v3414 = vpop.f32.mrb[0].mxu0
      %v3415 = vadd.f32 %v3126, %v3414
      %v3416 = vpop.f32.mrb[0].mxu0
      %3417 = vmatprep.mubr.bf16.mxu0 %v2013
      %3418 = vmatmul.mubr.bf16.gmra.mrb[0].mxu0 %v2012
      %v3419 = vpop.f32.mrb[0].mxu0
      %v3420 = vadd.f32 %v3131, %v3419
      %v3421 = vpop.f32.mrb[0].mxu0
      %v3422 = vpop.f32.mrb[0].mxu0
      %v3423 = vadd.f32 %v3134, %v3422
      %v3424 = vpop.f32.mrb[0].mxu0
      %3425 = vmatprep.mubr.bf16.mxu0 %v2021
      %3426 = vmatmul.mubr.bf16.gmra.mrb[0].mxu0 %v2020
      %v3427 = vpop.f32.mrb[0].mxu0
      %v3428 = vadd.f32 %v3139, %v3427
      %v3429 = vpop.f32.mrb[0].mxu0
      %v3430 = vpop.f32.mrb[0].mxu0
      %v3431 = vadd.f32 %v3142, %v3430
      %v3432 = vpop.f32.mrb[0].mxu0
      %3433 = vmatprep.mubr.bf16.mxu0 %v2029
      %3434 = vmatmul.mubr.bf16.gmra.mrb[0].mxu0 %v2028
      %v3435 = vpop.f32.mrb[0].mxu0
      %v3436 = vadd.f32 %v3147, %v3435
      %v3437 = vpop.f32.mrb[0].mxu0
      %v3438 = vpop.f32.mrb[0].mxu0
      %v3439 = vadd.f32 %v3150, %v3438
      %v3440 = vpop.f32.mrb[0].mxu0
      %3441 = vmatprep.mubr.bf16.mxu0 %v2037
      %3442 = vmatmul.mubr.bf16.gmra.mrb[0].mxu0 %v2036
      %v3443 = vpop.f32.mrb[0].mxu0
      %v3444 = vadd.f32 %v3155, %v3443
      %v3445 = vpop.f32.mrb[0].mxu0
      %v3446 = vpop.f32.mrb[0].mxu0
      %v3447 = vadd.f32 %v3158, %v3446
      %v3448 = vpop.f32.mrb[0].mxu0
      %3449 = vmatprep.mubr.bf16.mxu0 %v2045
      %3450 = vmatmul.mubr.bf16.gmra.mrb[0].mxu0 %v2044
      %v3451 = vpop.f32.mrb[0].mxu0
      %v3452 = vadd.f32 %v3163, %v3451
      %v3453 = vpop.f32.mrb[0].mxu0
      %v3454 = vpop.f32.mrb[0].mxu0
      %v3455 = vadd.f32 %v3166, %v3454
      %v3456 = vpop.f32.mrb[0].mxu0
      %3457 = vmatprep.mubr.bf16.mxu0 %v2053
      %3458 = vmatmul.mubr.bf16.gmra.mrb[0].mxu0 %v2052
      %v3459 = vpop.f32.mrb[0].mxu0
      %v3460 = vadd.f32 %v3171, %v3459
      %v3461 = vpop.f32.mrb[0].mxu0
      %v3462 = vpop.f32.mrb[0].mxu0
      %v3463 = vadd.f32 %v3174, %v3462
      %v3464 = vpop.f32.mrb[0].mxu0
      %3465 = vmatprep.mubr.bf16.mxu0 %v2061
      %3466 = vmatmul.mubr.bf16.gmra.mrb[0].mxu0 %v2060
      %v3467 = vpop.f32.mrb[0].mxu0
      %v3468 = vadd.f32 %v3179, %v3467
      %v3469 = vpop.f32.mrb[0].mxu0
      %v3470 = vpop.f32.mrb[0].mxu0
      %v3471 = vadd.f32 %v3182, %v3470
      %v3472 = vpop.f32.mrb[0].mxu0
      %3473 = vmatprep.mubr.bf16.mxu0 %v2069
      %3474 = vmatmul.mubr.bf16.gmra.mrb[0].mxu0 %v2068
      %v3475 = vpop.f32.mrb[0].mxu0
      %v3476 = vadd.f32 %v3187, %v3475
      %v3477 = vpop.f32.mrb[0].mxu0
      %v3478 = vpop.f32.mrb[0].mxu0
      %v3479 = vadd.f32 %v3190, %v3478
      %v3480 = vpop.f32.mrb[0].mxu0
      %3481 = vmatprep.mubr.bf16.mxu0 %v2077
      %3482 = vmatmul.mubr.bf16.gmra.mrb[0].mxu0 %v2076
      %v3483 = vpop.f32.mrb[0].mxu0
      %v3484 = vadd.f32 %v3195, %v3483
      %v3485 = vpop.f32.mrb[0].mxu0
      %v3486 = vpop.f32.mrb[0].mxu0
      %v3487 = vadd.f32 %v3198, %v3486
      %v3488 = vpop.f32.mrb[0].mxu0
      %3489 = vmatprep.mubr.bf16.mxu0 %v2085
      %3490 = vmatmul.mubr.bf16.gmra.mrb[0].mxu0 %v2084
      %v3491 = vpop.f32.mrb[0].mxu0
      %v3492 = vadd.f32 %v3203, %v3491
      %v3493 = vpop.f32.mrb[0].mxu0
      %v3494 = vpop.f32.mrb[0].mxu0
      %v3495 = vadd.f32 %v3206, %v3494
      %v3496 = vpop.f32.mrb[0].mxu0
      %3497 = vdwg.mxu0
      %v3498 = vmul.f32 %v3244, 0.01
      %v3499 = vmul.f32 %v3247, 0.01
      %v3500 = vmul.f32 %v3252, 0.01
      %v3501 = vmul.f32 %v3255, 0.01
      %v3502 = vmul.f32 %v3260, 0.01
      %v3503 = vmul.f32 %v3263, 0.01
      %v3504 = vmul.f32 %v3268, 0.01
      %v3505 = vmul.f32 %v3271, 0.01
      %v3506 = vmul.f32 %v3276, 0.01
      %v3507 = vmul.f32 %v3279, 0.01
      %v3508 = vmul.f32 %v3284, 0.01
      %v3509 = vmul.f32 %v3287, 0.01
      %v3510 = vmul.f32 %v3292, 0.01
      %v3511 = vmul.f32 %v3295, 0.01
      %v3512 = vmul.f32 %v3300, 0.01
      %v3513 = vmul.f32 %v3303, 0.01
      %v3514 = vmul.f32 %v3308, 0.01
      %v3515 = vmul.f32 %v3311, 0.01
      %v3516 = vmul.f32 %v3316, 0.01
      %v3517 = vmul.f32 %v3319, 0.01
      %v3518 = vmul.f32 %v3324, 0.01
      %v3519 = vmul.f32 %v3327, 0.01
      %v3520 = vmul.f32 %v3332, 0.01
      %v3521 = vmul.f32 %v3335, 0.01
      %v3522 = vmul.f32 %v3340, 0.01
      %v3523 = vmul.f32 %v3343, 0.01
      %v3524 = vmul.f32 %v3348, 0.01
      %v3525 = vmul.f32 %v3351, 0.01
      %v3526 = vmul.f32 %v3356, 0.01
      %v3527 = vmul.f32 %v3359, 0.01
      %v3528 = vmul.f32 %v3364, 0.01
      %v3529 = vmul.f32 %v3367, 0.01
      %v3530 = vmul.f32 %v3372, 0.01
      %v3531 = vmul.f32 %v3375, 0.01
      %v3532 = vmul.f32 %v3380, 0.01
      %v3533 = vmul.f32 %v3383, 0.01
      %v3534 = vmul.f32 %v3388, 0.01
      %v3535 = vmul.f32 %v3391, 0.01
      %v3536 = vmul.f32 %v3396, 0.01
      %v3537 = vmul.f32 %v3399, 0.01
      %v3538 = vmul.f32 %v3404, 0.01
      %v3539 = vmul.f32 %v3407, 0.01
      %v3540 = vmul.f32 %v3412, 0.01
      %v3541 = vmul.f32 %v3415, 0.01
      %v3542 = vmul.f32 %v3420, 0.01
      %v3543 = vmul.f32 %v3423, 0.01
      %v3544 = vmul.f32 %v3428, 0.01
      %v3545 = vmul.f32 %v3431, 0.01
      %v3546 = vmul.f32 %v3436, 0.01
      %v3547 = vmul.f32 %v3439, 0.01
      %v3548 = vmul.f32 %v3444, 0.01
      %v3549 = vmul.f32 %v3447, 0.01
      %v3550 = vmul.f32 %v3452, 0.01
      %v3551 = vmul.f32 %v3455, 0.01
      %v3552 = vmul.f32 %v3460, 0.01
      %v3553 = vmul.f32 %v3463, 0.01
      %v3554 = vmul.f32 %v3468, 0.01
      %v3555 = vmul.f32 %v3471, 0.01
      %v3556 = vmul.f32 %v3476, 0.01
      %v3557 = vmul.f32 %v3479, 0.01
      %v3558 = vmul.f32 %v3484, 0.01
      %v3559 = vmul.f32 %v3487, 0.01
      %v3560 = vmul.f32 %v3492, 0.01
      %v3561 = vmul.f32 %v3495, 0.01
      %v3562 = vmax.f32 %v3244, %v3498
      %v3563 = vmax.f32 %v3247, %v3499
      %v3564 = vmax.f32 %v3252, %v3500
      %v3565 = vmax.f32 %v3255, %v3501
      %v3566 = vmax.f32 %v3260, %v3502
      %v3567 = vmax.f32 %v3263, %v3503
      %v3568 = vmax.f32 %v3268, %v3504
      %v3569 = vmax.f32 %v3271, %v3505
      %v3570 = vmax.f32 %v3276, %v3506
      %v3571 = vmax.f32 %v3279, %v3507
      %v3572 = vmax.f32 %v3284, %v3508
      %v3573 = vmax.f32 %v3287, %v3509
      %v3574 = vmax.f32 %v3292, %v3510
      %v3575 = vmax.f32 %v3295, %v3511
      %v3576 = vmax.f32 %v3300, %v3512
      %v3577 = vmax.f32 %v3303, %v3513
      %v3578 = vmax.f32 %v3308, %v3514
      %v3579 = vmax.f32 %v3311, %v3515
      %v3580 = vmax.f32 %v3316, %v3516
      %v3581 = vmax.f32 %v3319, %v3517
      %v3582 = vmax.f32 %v3324, %v3518
      %v3583 = vmax.f32 %v3327, %v3519
      %v3584 = vmax.f32 %v3332, %v3520
      %v3585 = vmax.f32 %v3335, %v3521
      %v3586 = vmax.f32 %v3340, %v3522
      %v3587 = vmax.f32 %v3343, %v3523
      %v3588 = vmax.f32 %v3348, %v3524
      %v3589 = vmax.f32 %v3351, %v3525
      %v3590 = vmax.f32 %v3356, %v3526
      %v3591 = vmax.f32 %v3359, %v3527
      %v3592 = vmax.f32 %v3364, %v3528
      %v3593 = vmax.f32 %v3367, %v3529
      %v3594 = vmax.f32 %v3372, %v3530
      %v3595 = vmax.f32 %v3375, %v3531
      %v3596 = vmax.f32 %v3380, %v3532
      %v3597 = vmax.f32 %v3383, %v3533
      %v3598 = vmax.f32 %v3388, %v3534
      %v3599 = vmax.f32 %v3391, %v3535
      %v3600 = vmax.f32 %v3396, %v3536
      %v3601 = vmax.f32 %v3399, %v3537
      %v3602 = vmax.f32 %v3404, %v3538
      %v3603 = vmax.f32 %v3407, %v3539
      %v3604 = vmax.f32 %v3412, %v3540
      %v3605 = vmax.f32 %v3415, %v3541
      %v3606 = vmax.f32 %v3420, %v3542
      %v3607 = vmax.f32 %v3423, %v3543
      %v3608 = vmax.f32 %v3428, %v3544
      %v3609 = vmax.f32 %v3431, %v3545
      %v3610 = vmax.f32 %v3436, %v3546
      %v3611 = vmax.f32 %v3439, %v3547
      %v3612 = vmax.f32 %v3444, %v3548
      %v3613 = vmax.f32 %v3447, %v3549
      %v3614 = vmax.f32 %v3452, %v3550
      %v3615 = vmax.f32 %v3455, %v3551
      %v3616 = vmax.f32 %v3460, %v3552
      %v3617 = vmax.f32 %v3463, %v3553
      %v3618 = vmax.f32 %v3468, %v3554
      %v3619 = vmax.f32 %v3471, %v3555
      %v3620 = vmax.f32 %v3476, %v3556
      %v3621 = vmax.f32 %v3479, %v3557
      %v3622 = vmax.f32 %v3484, %v3558
      %v3623 = vmax.f32 %v3487, %v3559
      %v3624 = vmax.f32 %v3492, %v3560
      %v3625 = vmax.f32 %v3495, %v3561
      %v3626 = vld [vmem:[%s3] sm:$0xff]
      %v3627 = vld [vmem:[%s3 + $0x8] sm:$0xff]
      %v3628 = vld [vmem:[%s3 + $0x10] sm:$0xff]
      %v3629 = vld [vmem:[%s3 + $0x18] sm:$0xff]
      %v3630 = vld [vmem:[%s3 + $0x20] sm:$0xff]
      %v3631 = vld [vmem:[%s3 + $0x28] sm:$0xff]
      %v3632 = vld [vmem:[%s3 + $0x30] sm:$0xff]
      %v3633 = vld [vmem:[%s3 + $0x38] sm:$0xff]
      %v3634 = vpack.c.bf16 %v3563, %v3562
      %v3635 = vpack.c.bf16 %v3565, %v3564
      %v3636 = vpack.c.bf16 %v3567, %v3566
      %v3637 = vpack.c.bf16 %v3569, %v3568
      %v3638 = vpack.c.bf16 %v3571, %v3570
      %v3639 = vpack.c.bf16 %v3573, %v3572
      %v3640 = vpack.c.bf16 %v3575, %v3574
      %v3641 = vpack.c.bf16 %v3577, %v3576
      %v3642 = vpack.c.bf16 %v3579, %v3578
      %v3643 = vpack.c.bf16 %v3581, %v3580
      %v3644 = vpack.c.bf16 %v3583, %v3582
      %v3645 = vpack.c.bf16 %v3585, %v3584
      %v3646 = vpack.c.bf16 %v3587, %v3586
      %v3647 = vpack.c.bf16 %v3589, %v3588
      %v3648 = vpack.c.bf16 %v3591, %v3590
      %v3649 = vpack.c.bf16 %v3593, %v3592
      %v3650 = vpack.c.bf16 %v3595, %v3594
      %v3651 = vpack.c.bf16 %v3597, %v3596
      %v3652 = vpack.c.bf16 %v3599, %v3598
      %v3653 = vpack.c.bf16 %v3601, %v3600
      %v3654 = vpack.c.bf16 %v3603, %v3602
      %v3655 = vpack.c.bf16 %v3605, %v3604
      %v3656 = vpack.c.bf16 %v3607, %v3606
      %v3657 = vpack.c.bf16 %v3609, %v3608
      %v3658 = vpack.c.bf16 %v3611, %v3610
      %v3659 = vpack.c.bf16 %v3613, %v3612
      %v3660 = vpack.c.bf16 %v3615, %v3614
      %v3661 = vpack.c.bf16 %v3617, %v3616
      %v3662 = vpack.c.bf16 %v3619, %v3618
      %v3663 = vpack.c.bf16 %v3621, %v3620
      %v3664 = vpack.c.bf16 %v3623, %v3622
      %v3665 = vpack.c.bf16 %v3625, %v3624
      %v3674 = vunpack.c.l.b16 %v3626
      %v3675 = vunpack.c.h.b16 %v3626
      %v3676 = vunpack.c.l.b16 %v3627
      %v3677 = vunpack.c.h.b16 %v3627
      %v3678 = vunpack.c.l.b16 %v3628
      %v3679 = vunpack.c.h.b16 %v3628
      %v3680 = vunpack.c.l.b16 %v3629
      %v3681 = vunpack.c.h.b16 %v3629
      %v3682 = vunpack.c.l.b16 %v3630
      %v3683 = vunpack.c.h.b16 %v3630
      %v3684 = vunpack.c.l.b16 %v3631
      %v3685 = vunpack.c.h.b16 %v3631
      %v3686 = vunpack.c.l.b16 %v3632
      %v3687 = vunpack.c.h.b16 %v3632
      %v3688 = vunpack.c.l.b16 %v3633
      %v3689 = vunpack.c.h.b16 %v3633
      %v3690 = vpack.c.b16 %v3678, %v3674
      %v3691 = vpack.c.b16 %v3679, %v3675
      %v3692 = vpack.c.b16 %v3680, %v3676
      %v3693 = vpack.c.b16 %v3681, %v3677
      %v3694 = vpack.c.b16 %v3686, %v3682
      %v3695 = vpack.c.b16 %v3687, %v3683
      %v3696 = vpack.c.b16 %v3688, %v3684
      %v3697 = vpack.c.b16 %v3689, %v3685
      %3706 = vmatprep.subr.bf16.mxu0 0
      %3707 = vmatpush1.bf16.msra.mxu0 %v3634
      %3708 = vmatprep.subr.bf16.mxu0 0
      %3709 = vmatpush1.bf16.msra.mxu0 %v3635
      %3710 = vmatprep.subr.bf16.mxu0 0
      %3711 = vmatpush1.bf16.msra.mxu0 %v3636
      %3712 = vmatprep.subr.bf16.mxu0 0
      %3713 = vmatpush1.bf16.msra.mxu0 %v3637
      %3714 = vmatprep.subr.bf16.mxu0 0
      %3715 = vmatpush1.bf16.msra.mxu0 %v3638
      %3716 = vmatprep.subr.bf16.mxu0 0
      %3717 = vmatpush1.bf16.msra.mxu0 %v3639
      %3718 = vmatprep.subr.bf16.mxu0 0
      %3719 = vmatpush1.bf16.msra.mxu0 %v3640
      %3720 = vmatprep.subr.bf16.mxu0 0
      %3721 = vmatpush1.bf16.msra.mxu0 %v3641
      %3722 = vmatprep.subr.bf16.mxu0 0
      %3723 = vmatpush1.bf16.msra.mxu0 %v3642
      %3724 = vmatprep.subr.bf16.mxu0 0
      %3725 = vmatpush1.bf16.msra.mxu0 %v3643
      %3726 = vmatprep.subr.bf16.mxu0 0
      %3727 = vmatpush1.bf16.msra.mxu0 %v3644
      %3728 = vmatprep.subr.bf16.mxu0 0
      %3729 = vmatpush1.bf16.msra.mxu0 %v3645
      %3730 = vmatprep.subr.bf16.mxu0 0
      %3731 = vmatpush1.bf16.msra.mxu0 %v3646
      %3732 = vmatprep.subr.bf16.mxu0 0
      %3733 = vmatpush1.bf16.msra.mxu0 %v3647
      %3734 = vmatprep.subr.bf16.mxu0 0
      %3735 = vmatpush1.bf16.msra.mxu0 %v3648
      %3736 = vmatprep.subr.bf16.mxu0 0
      %3737 = vmatpush1.bf16.msra.mxu0 %v3649
      %3738 = vmatprep.mubr.bf16.mxu0 %v3691
      %3739 = vmatmul.mubr.bf16.gmra.mrb[0].mxu0 %v3690
      %v3740 = vpop.f32.mrb[0].mxu0
      %v3741 = vadd.f32 0.0, %v3740
      %v3742 = vpop.f32.mrb[0].mxu0
      %v3743 = vpop.f32.mrb[0].mxu0
      %v3744 = vadd.f32 0.0, %v3743
      %v3745 = vpop.f32.mrb[0].mxu0
      %3746 = vmatprep.mubr.bf16.mxu0 %v3695
      %3747 = vmatmul.mubr.bf16.gmra.mrb[0].mxu0 %v3694
      %v3748 = vpop.f32.mrb[0].mxu0
      %v3749 = vadd.f32 0.0, %v3748
      %v3750 = vpop.f32.mrb[0].mxu0
      %v3751 = vpop.f32.mrb[0].mxu0
      %v3752 = vadd.f32 0.0, %v3751
      %v3753 = vpop.f32.mrb[0].mxu0
      %3754 = vdwg.mxu0
      %3755 = vmatprep.subr.bf16.mxu0 0
      %3756 = vmatpush1.bf16.msra.mxu0 %v3650
      %3757 = vmatprep.subr.bf16.mxu0 0
      %3758 = vmatpush1.bf16.msra.mxu0 %v3651
      %3759 = vmatprep.subr.bf16.mxu0 0
      %3760 = vmatpush1.bf16.msra.mxu0 %v3652
      %3761 = vmatprep.subr.bf16.mxu0 0
      %3762 = vmatpush1.bf16.msra.mxu0 %v3653
      %3763 = vmatprep.subr.bf16.mxu0 0
      %3764 = vmatpush1.bf16.msra.mxu0 %v3654
      %3765 = vmatprep.subr.bf16.mxu0 0
      %3766 = vmatpush1.bf16.msra.mxu0 %v3655
      %3767 = vmatprep.subr.bf16.mxu0 0
      %3768 = vmatpush1.bf16.msra.mxu0 %v3656
      %3769 = vmatprep.subr.bf16.mxu0 0
      %3770 = vmatpush1.bf16.msra.mxu0 %v3657
      %3771 = vmatprep.subr.bf16.mxu0 0
      %3772 = vmatpush1.bf16.msra.mxu0 %v3658
      %3773 = vmatprep.subr.bf16.mxu0 0
      %3774 = vmatpush1.bf16.msra.mxu0 %v3659
      %3775 = vmatprep.subr.bf16.mxu0 0
      %3776 = vmatpush1.bf16.msra.mxu0 %v3660
      %3777 = vmatprep.subr.bf16.mxu0 0
      %3778 = vmatpush1.bf16.msra.mxu0 %v3661
      %3779 = vmatprep.subr.bf16.mxu0 0
      %3780 = vmatpush1.bf16.msra.mxu0 %v3662
      %3781 = vmatprep.subr.bf16.mxu0 0
      %3782 = vmatpush1.bf16.msra.mxu0 %v3663
      %3783 = vmatprep.subr.bf16.mxu0 0
      %3784 = vmatpush1.bf16.msra.mxu0 %v3664
      %3785 = vmatprep.subr.bf16.mxu0 0
      %3786 = vmatpush1.bf16.msra.mxu0 %v3665
      %3787 = vmatprep.mubr.bf16.mxu0 %v3693
      %3788 = vmatmul.mubr.bf16.gmra.mrb[0].mxu0 %v3692
      %v3789 = vpop.f32.mrb[0].mxu0
      %v3790 = vadd.f32 %v3741, %v3789
      %v3791 = vpop.f32.mrb[0].mxu0
      %v3792 = vpop.f32.mrb[0].mxu0
      %v3793 = vadd.f32 %v3744, %v3792
      %v3794 = vpop.f32.mrb[0].mxu0
      %3795 = vmatprep.mubr.bf16.mxu0 %v3697
      %3796 = vmatmul.mubr.bf16.gmra.mrb[0].mxu0 %v3696
      %v3797 = vpop.f32.mrb[0].mxu0
      %v3798 = vadd.f32 %v3749, %v3797
      %v3799 = vpop.f32.mrb[0].mxu0
      %v3800 = vpop.f32.mrb[0].mxu0
      %v3801 = vadd.f32 %v3752, %v3800
      %v3802 = vpop.f32.mrb[0].mxu0
      %3803 = vdwg.mxu0
      %vm3804 = vcmask 130048
      %3805 = vst.msk [vmem:[%s228] sm:$0xff] %vm3804, %v3790
      %3806 = vst.msk [vmem:[%s228 + $0x8] sm:$0xff] %vm3804, %v3793
      %3807 = vst.msk [vmem:[%s228 + $0x10] sm:$0xff] %vm3804, %v3798
      %3808 = vst.msk [vmem:[%s228 + $0x18] sm:$0xff] %vm3804, %v3801
      %p3809 = scmp.lt.s32.totalorder %s19, 1
      %s3810 = scalar_select %p3809, %s19, 1
      %p3811 = scmp.lt.s32.totalorder %s20, 0
      %s3812 = scalar_select %p3811, %s20, 0
      %s3813 = smul.addr %s3810, 4
      %s3814 = sadd.s32 %s3812, %s3813
      %s3815 = smul.addr %s3814, 8
      %s3816 = scalar_lea.vmem %s4, %s3815
      // Predicated region
      $region37: #{mem_trans_forward.1} parent=35 // pred_check
        %p3817 = pneg %p138
      $region38: #{mem_trans_forward.1} parent=35 // pred_check_branch
        %3819 = sbr.rel (%p3817) target = $region40
      $region39: #{mem_trans_forward.1} parent=35 // pred_region
        _
      $region40: #{mem_trans_forward.1} parent=35 // pred_fallthru
        _
    $region36: #{mem_trans_forward.1} parent=5 // pred_fallthru
      _
    %p3820 = scmp.le.s32.totalorder 2, %s10
    // Predicated region
    $region41: #{mem_trans_forward.1} parent=5 // pred_check
      %p3821 = pneg %p3820
    $region42: #{mem_trans_forward.1} parent=5 // pred_check_branch
      %3823 = sbr.rel (%p3821) target = $region44
    $region43: #{mem_trans_forward.1} parent=5 // pred_region
      %s3824 = ssub.s32 %s10, 2
      // Predicated region
      $region45: #{mem_trans_forward.1} parent=43 // pred_check
        %p3825 = pneg %p144
      $region46: #{mem_trans_forward.1} parent=43 // pred_check_branch
        %3827 = sbr.rel (%p3825) target = $region48
      $region47: #{mem_trans_forward.1} parent=43 // pred_region
        %p3828 = scmp.lt.s32.totalorder %s21, 1
        %s3829 = scalar_select %p3828, %s21, 1
        %p3830 = scmp.lt.s32.totalorder %s22, 0
        %s3831 = scalar_select %p3830, %s22, 0
        %s3832 = smul.addr %s3829, 4
        %s3833 = sadd.s32 %s3831, %s3832
        %s3834 = smul.addr %s3833, 8
        %s3835 = scalar_lea.vmem %s4, %s3834
      $region48: #{mem_trans_forward.1} parent=43 // pred_fallthru
        _
    $region44: #{mem_trans_forward.1} parent=5 // pred_fallthru
      _
  $region6: #{mem_trans_forward.1} parent=0 // loop_footer
    %s14 = sadd.s32 1, %s10
  $region7: #{mem_trans_forward.1} parent=0 // loop_footer_branch
    %9 = sbr.rel target = $region3
  $region8: #{mem_trans_forward.1} parent=0 // loop_exit
    _

</llo_original>
